<compile_context>
chip_gen: v7x
topology: tpu7x:2x2x1
jax: 0.10.0
libtpu: 0.0.40
codegen_flags: <defaults>
</compile_context>

<pallas_src>
import functools

import jax
import jax.numpy as jnp
from jax.experimental import pallas as pl
from jax.experimental.pallas import tpu as pltpu

_EPS = 1e-5
_LANE = 128


def _round_up(x, m):
    return (x + m - 1) // m * m


# ----------------------------------------------------------------------------
# Kernel helpers
# ----------------------------------------------------------------------------
def _zero_border(pad_ref, bt, hp, wp, c, dtype):
    """Zero only the 1-pixel halo frame; interior is rewritten every step."""
    row = jnp.zeros((bt, 1, wp + 2, c), dtype)
    pad_ref[:, 0:1, :, :] = row
    pad_ref[:, hp + 1:hp + 2, :, :] = row
    col = jnp.zeros((bt, hp, 1, c), dtype)
    pad_ref[:, 1:hp + 1, 0:1, :] = col
    pad_ref[:, 1:hp + 1, wp + 1:wp + 2, :] = col


def _conv3x3_acc(pad_ref, w_ref, bt, hp, wp, c_pad):
    """3x3 'SAME' conv as 9 shifted matmuls accumulated in f32.

    pad_ref : (bt, hp+2, wp+2, c_pad) zero-bordered activation (compute dtype)
    w_ref   : (9*c_pad, cout_pad)     weights, row = (ky*3+kx)*c_pad + c
    returns : (bt*hp*wp, cout_pad) f32 accumulator
    """
    m = bt * hp * wp
    acc = jnp.zeros((m, w_ref.shape[1]), jnp.float32)
    for ky in range(3):
        for kx in range(3):
            tap = pad_ref[:, ky:ky + hp, kx:kx + wp, :].reshape(m, c_pad)
            wk = w_ref[(ky * 3 + kx) * c_pad:(ky * 3 + kx + 1) * c_pad, :]
            acc += jnp.dot(tap, wk, preferred_element_type=jnp.float32)
    return acc


# ----------------------------------------------------------------------------
# Fused kernel: maxpool(2) -> conv3x3+BN+ReLU -> conv3x3+BN+ReLU
# ----------------------------------------------------------------------------
def _down_fused_kernel(x_ref, w1_ref, s1_ref, b1_ref, w2_ref, s2_ref, b2_ref,
                       o_ref, pad1_ref, pad2_ref):
    # x_ref   : (bt, hp, 2, wp, 2*cin) pool-friendly view of bt images (NHWC)
    # w1_ref  : (9*cin_pad,  cout_pad) lane-dense, zero-padded weights
    # w2_ref  : (9*cout_pad, cout_pad)
    # s*/b*   : (1, cout_pad) folded BatchNorm scale / shift (f32, zero-padded)
    # o_ref   : (bt, hp*wp, cout_pad)
    # pad*_ref: (bt, hp+2, wp+2, c_pad) VMEM scratch, compute dtype
    bt = x_ref.shape[0]
    hp = x_ref.shape[1]
    wp = x_ref.shape[3]
    cin = x_ref.shape[4] // 2
    cin_pad = pad1_ref.shape[3]
    cmid_pad = pad2_ref.shape[3]
    cdtype = pad1_ref.dtype

    # --- 2x2 max pool, stride 2 (no strided sublane loads) -------------------
    x = x_ref[...]                                            # (bt,hp,2,wp,2cin)
    rmax = jnp.maximum(x[:, :, 0], x[:, :, 1])                # pool over row pair
    pooled = jnp.maximum(rmax[..., :cin], rmax[..., cin:])    # pool over col pair
    if cin_pad != cin:                                        # lane-pad with zeros
        pooled = jnp.concatenate(
            [pooled,
             jnp.zeros(pooled.shape[:-1] + (cin_pad - cin,), pooled.dtype)],
            axis=-1)

    # --- conv1 (3x3, pad=1, no bias) + folded BN + ReLU ----------------------
    _zero_border(pad1_ref, bt, hp, wp, cin_pad, cdtype)
    pad1_ref[:, 1:hp + 1, 1:wp + 1, :] = pooled.astype(cdtype)  # full-lane store
    y1 = _conv3x3_acc(pad1_ref, w1_ref, bt, hp, wp, cin_pad)
    y1 = jnp.maximum(y1 * s1_ref[...] + b1_ref[...], 0.0)       # f32 epilogue

    # --- conv2 (3x3, pad=1, no bias) + folded BN + ReLU ----------------------
    # Padded channels of y1 are exactly zero (zero-padded w1 cols / s1 / b1),
    # so writing the full lane width keeps the pad2 padded channels zero.
    _zero_border(pad2_ref, bt, hp, wp, cmid_pad, cdtype)
    pad2_ref[:, 1:hp + 1, 1:wp + 1, :] = (
        y1.reshape(bt, hp, wp, cmid_pad).astype(cdtype))
    y2 = _conv3x3_acc(pad2_ref, w2_ref, bt, hp, wp, cmid_pad)
    y2 = jnp.maximum(y2 * s2_ref[...] + b2_ref[...], 0.0)

    o_ref[...] = y2.reshape(bt, hp * wp, cmid_pad).astype(o_ref.dtype)


# ----------------------------------------------------------------------------
# Wrappers
# ----------------------------------------------------------------------------
def _pick_batch_tile(n, hp, wp, cin, cin_pad, cout_pad, comp_bytes, in_bytes):
    """Largest divisor of n whose per-step VMEM estimate fits the default limit."""
    budget = 24 * 1024 * 1024   # stay under the 32 MiB default scoped VMEM limit
    fixed = 2 * 9 * (cin_pad + cout_pad) * cout_pad * comp_bytes  # resident weights
    best = 1
    for bt in range(1, n + 1):
        if n % bt:
            continue
        per = bt * (
            2 * (hp * 2) * (wp * 2) * cin * in_bytes            # input block x2 bufs
            + 2 * hp * wp * cout_pad * 4                        # output block x2 bufs
            + (hp + 2) * (wp + 2) * (cin_pad + cout_pad) * comp_bytes  # pad scratch
            + 4 * hp * wp * (cin_pad + cout_pad) * 4            # tap/acc temporaries
        )
        if per + fixed <= budget:
            best = bt
    return best


@functools.partial(jax.jit, static_argnames=("compute_dtype", "batch_tile"))
def down_forward_nhwc(x_nhwc, params, *, compute_dtype=jnp.float32,
                      batch_tile=None):
    """NHWC-in / NHWC-out fused down block (preferred entry point)."""
    n, h, w, cin = x_nhwc.shape
    assert h % 2 == 0 and w % 2 == 0, "MaxPool2d(2) requires even spatial dims"
    hp, wp = h // 2, w // 2
    cout = params["w1"].shape[-1]
    cin_pad = _round_up(cin, _LANE)
    cout_pad = _round_up(cout, _LANE)

    comp_bytes = jnp.dtype(compute_dtype).itemsize
    if batch_tile is None:
        batch_tile = _pick_batch_tile(n, hp, wp, cin, cin_pad, cout_pad,
                                      comp_bytes, jnp.dtype(x_nhwc.dtype).itemsize)
    assert n % batch_tile == 0

    # Pool-friendly view: free layout plumbing, lets the kernel pool without
    # strided sublane loads.
    xr = x_nhwc.reshape(n, hp, 2, wp, 2 * cin)

    # Lane-dense, zero-padded im2col weights: row index = (ky*3+kx)*c_pad + c.
    w1 = jnp.zeros((3, 3, cin_pad, cout_pad), compute_dtype)
    w1 = w1.at[:, :, :cin, :cout].set(params["w1"].astype(compute_dtype))
    w1 = w1.reshape(9 * cin_pad, cout_pad)
    w2 = jnp.zeros((3, 3, cout_pad, cout_pad), compute_dtype)
    w2 = w2.at[:, :, :cout, :cout].set(params["w2"].astype(compute_dtype))
    w2 = w2.reshape(9 * cout_pad, cout_pad)

    def pad_vec(v):
        return jnp.zeros((1, cout_pad), jnp.float32).at[0, :cout].set(
            v.astype(jnp.float32))

    s1, b1 = pad_vec(params["s1"]), pad_vec(params["b1"])
    s2, b2 = pad_vec(params["s2"]), pad_vec(params["b2"])

    out = pl.pallas_call(
        _down_fused_kernel,
        out_shape=jax.ShapeDtypeStruct((n, hp * wp, cout_pad), x_nhwc.dtype),
        grid_spec=pltpu.PrefetchScalarGridSpec(
            num_scalar_prefetch=0,
            grid=(n // batch_tile,),
            in_specs=[
                pl.BlockSpec((batch_tile, hp, 2, wp, 2 * cin),
                             lambda b: (b, 0, 0, 0, 0)),
                pl.BlockSpec((9 * cin_pad, cout_pad), lambda b: (0, 0)),
                pl.BlockSpec((1, cout_pad), lambda b: (0, 0)),
                pl.BlockSpec((1, cout_pad), lambda b: (0, 0)),
                pl.BlockSpec((9 * cout_pad, cout_pad), lambda b: (0, 0)),
                pl.BlockSpec((1, cout_pad), lambda b: (0, 0)),
                pl.BlockSpec((1, cout_pad), lambda b: (0, 0)),
            ],
            out_specs=pl.BlockSpec((batch_tile, hp * wp, cout_pad),
                                   lambda b: (b, 0, 0)),
            scratch_shapes=[
                pltpu.VMEM((batch_tile, hp + 2, wp + 2, cin_pad), compute_dtype),
                pltpu.VMEM((batch_tile, hp + 2, wp + 2, cout_pad), compute_dtype),
            ],
        ),
        compiler_params=pltpu.CompilerParams(
            dimension_semantics=("parallel",)),
    )(xr, w1, s1, b1, w2, s2, b2)

    return out[:, :, :cout].reshape(n, hp, wp, cout)


@functools.partial(jax.jit, static_argnames=("compute_dtype", "batch_tile"))
def down_forward(x_nchw, params, *, compute_dtype=jnp.float32, batch_tile=None):
    """NCHW adaptor matching the PyTorch `down` module (eval mode).

    Prefer `down_forward_nhwc` inside an NHWC pipeline: the two transposes here
    are separate HBM-bound XLA ops kept only for PyTorch-layout compatibility.
    """
    x = jnp.transpose(x_nchw, (0, 2, 3, 1))
    y = down_forward_nhwc(x, params, compute_dtype=compute_dtype,
                          batch_tile=batch_tile)
    return jnp.transpose(y, (0, 3, 1, 2))


# ----------------------------------------------------------------------------
# Deterministic parameter construction (BN folded to inference scale/shift).
# ----------------------------------------------------------------------------
def make_down_params(key, in_ch, out_ch):
    ks = jax.random.split(key, 10)

    def bn_fold(kg, kb, km, kv, ch):
        gamma = jax.random.uniform(kg, (ch,), jnp.float32, 0.5, 1.5)
        beta = jax.random.normal(kb, (ch,), jnp.float32) * 0.1
        mean = jax.random.normal(km, (ch,), jnp.float32) * 0.1
        var = jax.random.uniform(kv, (ch,), jnp.float32, 0.5, 1.5)
        scale = gamma / jnp.sqrt(var + _EPS)
        shift = beta - mean * scale
        return scale, shift

    # Conv weights generated directly in HWIO layout (== transpose of
    # PyTorch's OIHW weight of shape (out_ch, in_ch, 3, 3)).
    w1 = jax.random.normal(ks[0], (3, 3, in_ch, out_ch), jnp.float32) * 0.1
    w2 = jax.random.normal(ks[1], (3, 3, out_ch, out_ch), jnp.float32) * 0.1
    s1, b1 = bn_fold(ks[2], ks[3], ks[4], ks[5], out_ch)
    s2, b2 = bn_fold(ks[6], ks[7], ks[8], ks[9], out_ch)
    return dict(w1=w1, s1=s1, b1=b1, w2=w2, s2=s2, b2=b2)


def down_reference(x_nchw, params):
    """Plain-JAX reference (same math) for the correctness check."""
    x = jnp.transpose(x_nchw, (0, 2, 3, 1))
    n, h, w, c = x.shape
    x = x.reshape(n, h // 2, 2, w // 2, 2, c).max(axis=(2, 4))

    def cbr(x, wgt, s, b):
        y = jax.lax.conv_general_dilated(
            x, wgt, window_strides=(1, 1), padding="SAME",
            dimension_numbers=("NHWC", "HWIO", "NHWC"))
        return jnp.maximum(y * s + b, 0.0)

    x = cbr(x, params["w1"], params["s1"], params["b1"])
    x = cbr(x, params["w2"], params["s2"], params["b2"])
    return jnp.transpose(x, (0, 3, 1, 2))


if __name__ == "__main__":
    key = jax.random.PRNGKey(0)
    k_x, k_p = jax.random.split(key)

    batch, in_ch, out_ch, spatial = 2, 4, 8, 16
    x = jax.random.normal(k_x, (batch, in_ch, spatial, spatial), jnp.float32)
    params = make_down_params(k_p, in_ch, out_ch)

    ref = down_reference(x, params)

    # f32 path (tight check).
    out = jax.block_until_ready(down_forward(x, params))
    assert out.shape == (batch, out_ch, spatial // 2, spatial // 2), out.shape
    assert jnp.allclose(out, ref, atol=1e-4, rtol=1e-4), (
        float(jnp.max(jnp.abs(out - ref))))

    # bf16 MXU-operand + bf16 pad-scratch path (v6e/v7x optimization;
    # f32 accumulation and f32 BN/ReLU epilogue).
    out_bf16 = jax.block_until_ready(
        down_forward(x, params, compute_dtype=jnp.bfloat16))
    assert jnp.allclose(out_bf16, ref, atol=1e-1, rtol=1e-1), (
        float(jnp.max(jnp.abs(out_bf16 - ref))))

    print("KERNEL_OK")
</pallas_src>

<mosaic_0001>
module attributes {stable_mosaic.version = 11 : i64} {
  func.func @_down_fused_kernel(%arg0: i32, %arg1: memref<2x8x2x8x8xf32, #tpu.memory_space<vmem>>, %arg2: memref<1152x128xf32, #tpu.memory_space<vmem>>, %arg3: memref<1x128xf32, #tpu.memory_space<vmem>>, %arg4: memref<1x128xf32, #tpu.memory_space<vmem>>, %arg5: memref<1152x128xf32, #tpu.memory_space<vmem>>, %arg6: memref<1x128xf32, #tpu.memory_space<vmem>>, %arg7: memref<1x128xf32, #tpu.memory_space<vmem>>, %arg8: memref<2x64x128xf32, #tpu.memory_space<vmem>>, %arg9: memref<2x10x10x128xf32, #tpu.memory_space<vmem>>, %arg10: memref<2x10x10x128xf32, #tpu.memory_space<vmem>>) attributes {dimension_semantics = [#tpu.dimension_semantics<parallel>], iteration_bounds = array<i64: 1>, scalar_prefetch = 0 : i64, scratch_operands = 2 : i64, tpu.core_type = #tpu.core_type<tc>, window_params = [{transform_indices = @transform_0, window_bounds = array<i64: 2, 8, 2, 8, 8>}, {pipeline_mode = #tpu.pipeline_mode<synchronous>, transform_indices = @transform_1, window_bounds = array<i64: 1152, 128>}, {pipeline_mode = #tpu.pipeline_mode<synchronous>, transform_indices = @transform_2, window_bounds = array<i64: 1, 128>}, {pipeline_mode = #tpu.pipeline_mode<synchronous>, transform_indices = @transform_3, window_bounds = array<i64: 1, 128>}, {pipeline_mode = #tpu.pipeline_mode<synchronous>, transform_indices = @transform_4, window_bounds = array<i64: 1152, 128>}, {pipeline_mode = #tpu.pipeline_mode<synchronous>, transform_indices = @transform_5, window_bounds = array<i64: 1, 128>}, {pipeline_mode = #tpu.pipeline_mode<synchronous>, transform_indices = @transform_6, window_bounds = array<i64: 1, 128>}, {transform_indices = @transform_7, window_bounds = array<i64: 2, 64, 128>}]} {
    %c0 = arith.constant 0 : index
    %c0_0 = arith.constant 0 : index
    %c0_1 = arith.constant 0 : index
    %c0_2 = arith.constant 0 : index
    %c0_3 = arith.constant 0 : index
    %0 = vector.load %arg1[%c0, %c0_0, %c0_1, %c0_2, %c0_3] : memref<2x8x2x8x8xf32, #tpu.memory_space<vmem>>, vector<2x8x2x8x8xf32>
    %1 = vector.extract_strided_slice %0 {offsets = [0, 0, 0, 0, 0], sizes = [2, 8, 1, 8, 8], strides = [1, 1, 1, 1, 1]} : vector<2x8x2x8x8xf32> to vector<2x8x1x8x8xf32>
    %2 = vector.shape_cast %1 : vector<2x8x1x8x8xf32> to vector<2x8x8x8xf32>
    %3 = vector.extract_strided_slice %0 {offsets = [0, 0, 1, 0, 0], sizes = [2, 8, 1, 8, 8], strides = [1, 1, 1, 1, 1]} : vector<2x8x2x8x8xf32> to vector<2x8x1x8x8xf32>
    %4 = vector.shape_cast %3 : vector<2x8x1x8x8xf32> to vector<2x8x8x8xf32>
    %5 = arith.maximumf %2, %4 : vector<2x8x8x8xf32>
    %6 = vector.extract_strided_slice %5 {offsets = [0, 0, 0, 0], sizes = [2, 8, 8, 4], strides = [1, 1, 1, 1]} : vector<2x8x8x8xf32> to vector<2x8x8x4xf32>
    %7 = vector.extract_strided_slice %5 {offsets = [0, 0, 0, 4], sizes = [2, 8, 8, 4], strides = [1, 1, 1, 1]} : vector<2x8x8x8xf32> to vector<2x8x8x4xf32>
    %8 = arith.maximumf %6, %7 : vector<2x8x8x4xf32>
    %cst = arith.constant 0.000000e+00 : f32
    %9 = vector.broadcast %cst : f32 to vector<2x8x8x124xf32>
    %10 = tpu.concatenate %8, %9 in 3 : vector<2x8x8x4xf32>, vector<2x8x8x124xf32> -> vector<2x8x8x128xf32>
    %cst_4 = arith.constant 0.000000e+00 : f32
    %11 = vector.broadcast %cst_4 : f32 to vector<2x1x10x128xf32>
    %c0_5 = arith.constant 0 : index
    %c0_6 = arith.constant 0 : index
    %c0_7 = arith.constant 0 : index
    %c0_8 = arith.constant 0 : index
    %12 = vector.load %arg9[%c0_5, %c0_6, %c0_7, %c0_8] : memref<2x10x10x128xf32, #tpu.memory_space<vmem>>, vector<2x1x10x128xf32>
    tpu.vector_store %arg9[%c0_5, %c0_6, %c0_7, %c0_8], %11 {strides = array<i32>} : memref<2x10x10x128xf32, #tpu.memory_space<vmem>>, vector<2x1x10x128xf32>,
    %c0_9 = arith.constant 0 : index
    %c9 = arith.constant 9 : index
    %c0_10 = arith.constant 0 : index
    %c0_11 = arith.constant 0 : index
    %13 = vector.load %arg9[%c0_9, %c9, %c0_10, %c0_11] : memref<2x10x10x128xf32, #tpu.memory_space<vmem>>, vector<2x1x10x128xf32>
    tpu.vector_store %arg9[%c0_9, %c9, %c0_10, %c0_11], %11 {strides = array<i32>} : memref<2x10x10x128xf32, #tpu.memory_space<vmem>>, vector<2x1x10x128xf32>,
    %cst_12 = arith.constant 0.000000e+00 : f32
    %14 = vector.broadcast %cst_12 : f32 to vector<2x8x1x128xf32>
    %c0_13 = arith.constant 0 : index
    %c1 = arith.constant 1 : index
    %c0_14 = arith.constant 0 : index
    %c0_15 = arith.constant 0 : index
    %15 = vector.load %arg9[%c0_13, %c1, %c0_14, %c0_15] : memref<2x10x10x128xf32, #tpu.memory_space<vmem>>, vector<2x8x1x128xf32>
    tpu.vector_store %arg9[%c0_13, %c1, %c0_14, %c0_15], %14 {strides = array<i32>} : memref<2x10x10x128xf32, #tpu.memory_space<vmem>>, vector<2x8x1x128xf32>,
    %c0_16 = arith.constant 0 : index
    %c1_17 = arith.constant 1 : index
    %c9_18 = arith.constant 9 : index
    %c0_19 = arith.constant 0 : index
    %16 = vector.load %arg9[%c0_16, %c1_17, %c9_18, %c0_19] : memref<2x10x10x128xf32, #tpu.memory_space<vmem>>, vector<2x8x1x128xf32>
    tpu.vector_store %arg9[%c0_16, %c1_17, %c9_18, %c0_19], %14 {strides = array<i32>} : memref<2x10x10x128xf32, #tpu.memory_space<vmem>>, vector<2x8x1x128xf32>,
    %c0_20 = arith.constant 0 : index
    %c1_21 = arith.constant 1 : index
    %c1_22 = arith.constant 1 : index
    %c0_23 = arith.constant 0 : index
    %17 = vector.load %arg9[%c0_20, %c1_21, %c1_22, %c0_23] : memref<2x10x10x128xf32, #tpu.memory_space<vmem>>, vector<2x8x8x128xf32>
    tpu.vector_store %arg9[%c0_20, %c1_21, %c1_22, %c0_23], %10 {strides = array<i32>} : memref<2x10x10x128xf32, #tpu.memory_space<vmem>>, vector<2x8x8x128xf32>,
    %cst_24 = arith.constant 0.000000e+00 : f32
    %18 = vector.broadcast %cst_24 : f32 to vector<128x128xf32>
    %c0_25 = arith.constant 0 : index
    %c0_26 = arith.constant 0 : index
    %c0_27 = arith.constant 0 : index
    %c0_28 = arith.constant 0 : index
    %19 = vector.load %arg9[%c0_25, %c0_26, %c0_27, %c0_28] : memref<2x10x10x128xf32, #tpu.memory_space<vmem>>, vector<2x8x8x128xf32>
    %20 = vector.shape_cast %19 : vector<2x8x8x128xf32> to vector<128x128xf32>
    %c0_29 = arith.constant 0 : index
    %c0_30 = arith.constant 0 : index
    %21 = vector.load %arg2[%c0_29, %c0_30] : memref<1152x128xf32, #tpu.memory_space<vmem>>, vector<128x128xf32>
    %cst_31 = arith.constant dense<0.000000e+00> : vector<128x128xf32>
    %22 = tpu.matmul %20, %21, %cst_31 {dimension_numbers = #tpu.dot_dimension_numbers<[1], [0], [0], [1], [0, 0, 1, 1], [], []>} : vector<128x128xf32>, vector<128x128xf32>, vector<128x128xf32> -> vector<128x128xf32>
    %23 = arith.addf %18, %22 : vector<128x128xf32>
    %c0_32 = arith.constant 0 : index
    %c0_33 = arith.constant 0 : index
    %c1_34 = arith.constant 1 : index
    %c0_35 = arith.constant 0 : index
    %24 = vector.load %arg9[%c0_32, %c0_33, %c1_34, %c0_35] : memref<2x10x10x128xf32, #tpu.memory_space<vmem>>, vector<2x8x8x128xf32>
    %25 = vector.shape_cast %24 : vector<2x8x8x128xf32> to vector<128x128xf32>
    %c128 = arith.constant 128 : index
    %c0_36 = arith.constant 0 : index
    %26 = vector.load %arg2[%c128, %c0_36] : memref<1152x128xf32, #tpu.memory_space<vmem>>, vector<128x128xf32>
    %cst_37 = arith.constant dense<0.000000e+00> : vector<128x128xf32>
    %27 = tpu.matmul %25, %26, %cst_37 {dimension_numbers = #tpu.dot_dimension_numbers<[1], [0], [0], [1], [0, 0, 1, 1], [], []>} : vector<128x128xf32>, vector<128x128xf32>, vector<128x128xf32> -> vector<128x128xf32>
    %28 = arith.addf %23, %27 : vector<128x128xf32>
    %c0_38 = arith.constant 0 : index
    %c0_39 = arith.constant 0 : index
    %c2 = arith.constant 2 : index
    %c0_40 = arith.constant 0 : index
    %29 = vector.load %arg9[%c0_38, %c0_39, %c2, %c0_40] : memref<2x10x10x128xf32, #tpu.memory_space<vmem>>, vector<2x8x8x128xf32>
    %30 = vector.shape_cast %29 : vector<2x8x8x128xf32> to vector<128x128xf32>
    %c256 = arith.constant 256 : index
    %c0_41 = arith.constant 0 : index
    %31 = vector.load %arg2[%c256, %c0_41] : memref<1152x128xf32, #tpu.memory_space<vmem>>, vector<128x128xf32>
    %cst_42 = arith.constant dense<0.000000e+00> : vector<128x128xf32>
    %32 = tpu.matmul %30, %31, %cst_42 {dimension_numbers = #tpu.dot_dimension_numbers<[1], [0], [0], [1], [0, 0, 1, 1], [], []>} : vector<128x128xf32>, vector<128x128xf32>, vector<128x128xf32> -> vector<128x128xf32>
    %33 = arith.addf %28, %32 : vector<128x128xf32>
    %c0_43 = arith.constant 0 : index
    %c1_44 = arith.constant 1 : index
    %c0_45 = arith.constant 0 : index
    %c0_46 = arith.constant 0 : index
    %34 = vector.load %arg9[%c0_43, %c1_44, %c0_45, %c0_46] : memref<2x10x10x128xf32, #tpu.memory_space<vmem>>, vector<2x8x8x128xf32>
    %35 = vector.shape_cast %34 : vector<2x8x8x128xf32> to vector<128x128xf32>
    %c384 = arith.constant 384 : index
    %c0_47 = arith.constant 0 : index
    %36 = vector.load %arg2[%c384, %c0_47] : memref<1152x128xf32, #tpu.memory_space<vmem>>, vector<128x128xf32>
    %cst_48 = arith.constant dense<0.000000e+00> : vector<128x128xf32>
    %37 = tpu.matmul %35, %36, %cst_48 {dimension_numbers = #tpu.dot_dimension_numbers<[1], [0], [0], [1], [0, 0, 1, 1], [], []>} : vector<128x128xf32>, vector<128x128xf32>, vector<128x128xf32> -> vector<128x128xf32>
    %38 = arith.addf %33, %37 : vector<128x128xf32>
    %c0_49 = arith.constant 0 : index
    %c1_50 = arith.constant 1 : index
    %c1_51 = arith.constant 1 : index
    %c0_52 = arith.constant 0 : index
    %39 = vector.load %arg9[%c0_49, %c1_50, %c1_51, %c0_52] : memref<2x10x10x128xf32, #tpu.memory_space<vmem>>, vector<2x8x8x128xf32>
    %40 = vector.shape_cast %39 : vector<2x8x8x128xf32> to vector<128x128xf32>
    %c512 = arith.constant 512 : index
    %c0_53 = arith.constant 0 : index
    %41 = vector.load %arg2[%c512, %c0_53] : memref<1152x128xf32, #tpu.memory_space<vmem>>, vector<128x128xf32>
    %cst_54 = arith.constant dense<0.000000e+00> : vector<128x128xf32>
    %42 = tpu.matmul %40, %41, %cst_54 {dimension_numbers = #tpu.dot_dimension_numbers<[1], [0], [0], [1], [0, 0, 1, 1], [], []>} : vector<128x128xf32>, vector<128x128xf32>, vector<128x128xf32> -> vector<128x128xf32>
    %43 = arith.addf %38, %42 : vector<128x128xf32>
    %c0_55 = arith.constant 0 : index
    %c1_56 = arith.constant 1 : index
    %c2_57 = arith.constant 2 : index
    %c0_58 = arith.constant 0 : index
    %44 = vector.load %arg9[%c0_55, %c1_56, %c2_57, %c0_58] : memref<2x10x10x128xf32, #tpu.memory_space<vmem>>, vector<2x8x8x128xf32>
    %45 = vector.shape_cast %44 : vector<2x8x8x128xf32> to vector<128x128xf32>
    %c640 = arith.constant 640 : index
    %c0_59 = arith.constant 0 : index
    %46 = vector.load %arg2[%c640, %c0_59] : memref<1152x128xf32, #tpu.memory_space<vmem>>, vector<128x128xf32>
    %cst_60 = arith.constant dense<0.000000e+00> : vector<128x128xf32>
    %47 = tpu.matmul %45, %46, %cst_60 {dimension_numbers = #tpu.dot_dimension_numbers<[1], [0], [0], [1], [0, 0, 1, 1], [], []>} : vector<128x128xf32>, vector<128x128xf32>, vector<128x128xf32> -> vector<128x128xf32>
    %48 = arith.addf %43, %47 : vector<128x128xf32>
    %c0_61 = arith.constant 0 : index
    %c2_62 = arith.constant 2 : index
    %c0_63 = arith.constant 0 : index
    %c0_64 = arith.constant 0 : index
    %49 = vector.load %arg9[%c0_61, %c2_62, %c0_63, %c0_64] : memref<2x10x10x128xf32, #tpu.memory_space<vmem>>, vector<2x8x8x128xf32>
    %50 = vector.shape_cast %49 : vector<2x8x8x128xf32> to vector<128x128xf32>
    %c768 = arith.constant 768 : index
    %c0_65 = arith.constant 0 : index
    %51 = vector.load %arg2[%c768, %c0_65] : memref<1152x128xf32, #tpu.memory_space<vmem>>, vector<128x128xf32>
    %cst_66 = arith.constant dense<0.000000e+00> : vector<128x128xf32>
    %52 = tpu.matmul %50, %51, %cst_66 {dimension_numbers = #tpu.dot_dimension_numbers<[1], [0], [0], [1], [0, 0, 1, 1], [], []>} : vector<128x128xf32>, vector<128x128xf32>, vector<128x128xf32> -> vector<128x128xf32>
    %53 = arith.addf %48, %52 : vector<128x128xf32>
    %c0_67 = arith.constant 0 : index
    %c2_68 = arith.constant 2 : index
    %c1_69 = arith.constant 1 : index
    %c0_70 = arith.constant 0 : index
    %54 = vector.load %arg9[%c0_67, %c2_68, %c1_69, %c0_70] : memref<2x10x10x128xf32, #tpu.memory_space<vmem>>, vector<2x8x8x128xf32>
    %55 = vector.shape_cast %54 : vector<2x8x8x128xf32> to vector<128x128xf32>
    %c896 = arith.constant 896 : index
    %c0_71 = arith.constant 0 : index
    %56 = vector.load %arg2[%c896, %c0_71] : memref<1152x128xf32, #tpu.memory_space<vmem>>, vector<128x128xf32>
    %cst_72 = arith.constant dense<0.000000e+00> : vector<128x128xf32>
    %57 = tpu.matmul %55, %56, %cst_72 {dimension_numbers = #tpu.dot_dimension_numbers<[1], [0], [0], [1], [0, 0, 1, 1], [], []>} : vector<128x128xf32>, vector<128x128xf32>, vector<128x128xf32> -> vector<128x128xf32>
    %58 = arith.addf %53, %57 : vector<128x128xf32>
    %c0_73 = arith.constant 0 : index
    %c2_74 = arith.constant 2 : index
    %c2_75 = arith.constant 2 : index
    %c0_76 = arith.constant 0 : index
    %59 = vector.load %arg9[%c0_73, %c2_74, %c2_75, %c0_76] : memref<2x10x10x128xf32, #tpu.memory_space<vmem>>, vector<2x8x8x128xf32>
    %60 = vector.shape_cast %59 : vector<2x8x8x128xf32> to vector<128x128xf32>
    %c1024 = arith.constant 1024 : index
    %c0_77 = arith.constant 0 : index
    %61 = vector.load %arg2[%c1024, %c0_77] : memref<1152x128xf32, #tpu.memory_space<vmem>>, vector<128x128xf32>
    %cst_78 = arith.constant dense<0.000000e+00> : vector<128x128xf32>
    %62 = tpu.matmul %60, %61, %cst_78 {dimension_numbers = #tpu.dot_dimension_numbers<[1], [0], [0], [1], [0, 0, 1, 1], [], []>} : vector<128x128xf32>, vector<128x128xf32>, vector<128x128xf32> -> vector<128x128xf32>
    %63 = arith.addf %58, %62 : vector<128x128xf32>
    %c0_79 = arith.constant 0 : index
    %c0_80 = arith.constant 0 : index
    %64 = vector.load %arg3[%c0_79, %c0_80] : memref<1x128xf32, #tpu.memory_space<vmem>>, vector<1x128xf32>
    %65 = vector.broadcast %64 : vector<1x128xf32> to vector<128x128xf32>
    %66 = arith.mulf %63, %65 : vector<128x128xf32>
    %c0_81 = arith.constant 0 : index
    %c0_82 = arith.constant 0 : index
    %67 = vector.load %arg4[%c0_81, %c0_82] : memref<1x128xf32, #tpu.memory_space<vmem>>, vector<1x128xf32>
    %68 = vector.broadcast %67 : vector<1x128xf32> to vector<128x128xf32>
    %69 = arith.addf %66, %68 : vector<128x128xf32>
    %cst_83 = arith.constant 0.000000e+00 : f32
    %70 = vector.broadcast %cst_83 : f32 to vector<128x128xf32>
    %71 = arith.maximumf %69, %70 : vector<128x128xf32>
    %cst_84 = arith.constant 0.000000e+00 : f32
    %72 = vector.broadcast %cst_84 : f32 to vector<2x1x10x128xf32>
    %c0_85 = arith.constant 0 : index
    %c0_86 = arith.constant 0 : index
    %c0_87 = arith.constant 0 : index
    %c0_88 = arith.constant 0 : index
    %73 = vector.load %arg10[%c0_85, %c0_86, %c0_87, %c0_88] : memref<2x10x10x128xf32, #tpu.memory_space<vmem>>, vector<2x1x10x128xf32>
    tpu.vector_store %arg10[%c0_85, %c0_86, %c0_87, %c0_88], %72 {strides = array<i32>} : memref<2x10x10x128xf32, #tpu.memory_space<vmem>>, vector<2x1x10x128xf32>,
    %c0_89 = arith.constant 0 : index
    %c9_90 = arith.constant 9 : index
    %c0_91 = arith.constant 0 : index
    %c0_92 = arith.constant 0 : index
    %74 = vector.load %arg10[%c0_89, %c9_90, %c0_91, %c0_92] : memref<2x10x10x128xf32, #tpu.memory_space<vmem>>, vector<2x1x10x128xf32>
    tpu.vector_store %arg10[%c0_89, %c9_90, %c0_91, %c0_92], %72 {strides = array<i32>} : memref<2x10x10x128xf32, #tpu.memory_space<vmem>>, vector<2x1x10x128xf32>,
    %cst_93 = arith.constant 0.000000e+00 : f32
    %75 = vector.broadcast %cst_93 : f32 to vector<2x8x1x128xf32>
    %c0_94 = arith.constant 0 : index
    %c1_95 = arith.constant 1 : index
    %c0_96 = arith.constant 0 : index
    %c0_97 = arith.constant 0 : index
    %76 = vector.load %arg10[%c0_94, %c1_95, %c0_96, %c0_97] : memref<2x10x10x128xf32, #tpu.memory_space<vmem>>, vector<2x8x1x128xf32>
    tpu.vector_store %arg10[%c0_94, %c1_95, %c0_96, %c0_97], %75 {strides = array<i32>} : memref<2x10x10x128xf32, #tpu.memory_space<vmem>>, vector<2x8x1x128xf32>,
    %c0_98 = arith.constant 0 : index
    %c1_99 = arith.constant 1 : index
    %c9_100 = arith.constant 9 : index
    %c0_101 = arith.constant 0 : index
    %77 = vector.load %arg10[%c0_98, %c1_99, %c9_100, %c0_101] : memref<2x10x10x128xf32, #tpu.memory_space<vmem>>, vector<2x8x1x128xf32>
    tpu.vector_store %arg10[%c0_98, %c1_99, %c9_100, %c0_101], %75 {strides = array<i32>} : memref<2x10x10x128xf32, #tpu.memory_space<vmem>>, vector<2x8x1x128xf32>,
    %78 = vector.shape_cast %71 : vector<128x128xf32> to vector<2x8x8x128xf32>
    %c0_102 = arith.constant 0 : index
    %c1_103 = arith.constant 1 : index
    %c1_104 = arith.constant 1 : index
    %c0_105 = arith.constant 0 : index
    %79 = vector.load %arg10[%c0_102, %c1_103, %c1_104, %c0_105] : memref<2x10x10x128xf32, #tpu.memory_space<vmem>>, vector<2x8x8x128xf32>
    tpu.vector_store %arg10[%c0_102, %c1_103, %c1_104, %c0_105], %78 {strides = array<i32>} : memref<2x10x10x128xf32, #tpu.memory_space<vmem>>, vector<2x8x8x128xf32>,
    %cst_106 = arith.constant 0.000000e+00 : f32
    %80 = vector.broadcast %cst_106 : f32 to vector<128x128xf32>
    %c0_107 = arith.constant 0 : index
    %c0_108 = arith.constant 0 : index
    %c0_109 = arith.constant 0 : index
    %c0_110 = arith.constant 0 : index
    %81 = vector.load %arg10[%c0_107, %c0_108, %c0_109, %c0_110] : memref<2x10x10x128xf32, #tpu.memory_space<vmem>>, vector<2x8x8x128xf32>
    %82 = vector.shape_cast %81 : vector<2x8x8x128xf32> to vector<128x128xf32>
    %c0_111 = arith.constant 0 : index
    %c0_112 = arith.constant 0 : index
    %83 = vector.load %arg5[%c0_111, %c0_112] : memref<1152x128xf32, #tpu.memory_space<vmem>>, vector<128x128xf32>
    %cst_113 = arith.constant dense<0.000000e+00> : vector<128x128xf32>
    %84 = tpu.matmul %82, %83, %cst_113 {dimension_numbers = #tpu.dot_dimension_numbers<[1], [0], [0], [1], [0, 0, 1, 1], [], []>} : vector<128x128xf32>, vector<128x128xf32>, vector<128x128xf32> -> vector<128x128xf32>
    %85 = arith.addf %80, %84 : vector<128x128xf32>
    %c0_114 = arith.constant 0 : index
    %c0_115 = arith.constant 0 : index
    %c1_116 = arith.constant 1 : index
    %c0_117 = arith.constant 0 : index
    %86 = vector.load %arg10[%c0_114, %c0_115, %c1_116, %c0_117] : memref<2x10x10x128xf32, #tpu.memory_space<vmem>>, vector<2x8x8x128xf32>
    %87 = vector.shape_cast %86 : vector<2x8x8x128xf32> to vector<128x128xf32>
    %c128_118 = arith.constant 128 : index
    %c0_119 = arith.constant 0 : index
    %88 = vector.load %arg5[%c128_118, %c0_119] : memref<1152x128xf32, #tpu.memory_space<vmem>>, vector<128x128xf32>
    %cst_120 = arith.constant dense<0.000000e+00> : vector<128x128xf32>
    %89 = tpu.matmul %87, %88, %cst_120 {dimension_numbers = #tpu.dot_dimension_numbers<[1], [0], [0], [1], [0, 0, 1, 1], [], []>} : vector<128x128xf32>, vector<128x128xf32>, vector<128x128xf32> -> vector<128x128xf32>
    %90 = arith.addf %85, %89 : vector<128x128xf32>
    %c0_121 = arith.constant 0 : index
    %c0_122 = arith.constant 0 : index
    %c2_123 = arith.constant 2 : index
    %c0_124 = arith.constant 0 : index
    %91 = vector.load %arg10[%c0_121, %c0_122, %c2_123, %c0_124] : memref<2x10x10x128xf32, #tpu.memory_space<vmem>>, vector<2x8x8x128xf32>
    %92 = vector.shape_cast %91 : vector<2x8x8x128xf32> to vector<128x128xf32>
    %c256_125 = arith.constant 256 : index
    %c0_126 = arith.constant 0 : index
    %93 = vector.load %arg5[%c256_125, %c0_126] : memref<1152x128xf32, #tpu.memory_space<vmem>>, vector<128x128xf32>
    %cst_127 = arith.constant dense<0.000000e+00> : vector<128x128xf32>
    %94 = tpu.matmul %92, %93, %cst_127 {dimension_numbers = #tpu.dot_dimension_numbers<[1], [0], [0], [1], [0, 0, 1, 1], [], []>} : vector<128x128xf32>, vector<128x128xf32>, vector<128x128xf32> -> vector<128x128xf32>
    %95 = arith.addf %90, %94 : vector<128x128xf32>
    %c0_128 = arith.constant 0 : index
    %c1_129 = arith.constant 1 : index
    %c0_130 = arith.constant 0 : index
    %c0_131 = arith.constant 0 : index
    %96 = vector.load %arg10[%c0_128, %c1_129, %c0_130, %c0_131] : memref<2x10x10x128xf32, #tpu.memory_space<vmem>>, vector<2x8x8x128xf32>
    %97 = vector.shape_cast %96 : vector<2x8x8x128xf32> to vector<128x128xf32>
    %c384_132 = arith.constant 384 : index
    %c0_133 = arith.constant 0 : index
    %98 = vector.load %arg5[%c384_132, %c0_133] : memref<1152x128xf32, #tpu.memory_space<vmem>>, vector<128x128xf32>
    %cst_134 = arith.constant dense<0.000000e+00> : vector<128x128xf32>
    %99 = tpu.matmul %97, %98, %cst_134 {dimension_numbers = #tpu.dot_dimension_numbers<[1], [0], [0], [1], [0, 0, 1, 1], [], []>} : vector<128x128xf32>, vector<128x128xf32>, vector<128x128xf32> -> vector<128x128xf32>
    %100 = arith.addf %95, %99 : vector<128x128xf32>
    %c0_135 = arith.constant 0 : index
    %c1_136 = arith.constant 1 : index
    %c1_137 = arith.constant 1 : index
    %c0_138 = arith.constant 0 : index
    %101 = vector.load %arg10[%c0_135, %c1_136, %c1_137, %c0_138] : memref<2x10x10x128xf32, #tpu.memory_space<vmem>>, vector<2x8x8x128xf32>
    %102 = vector.shape_cast %101 : vector<2x8x8x128xf32> to vector<128x128xf32>
    %c512_139 = arith.constant 512 : index
    %c0_140 = arith.constant 0 : index
    %103 = vector.load %arg5[%c512_139, %c0_140] : memref<1152x128xf32, #tpu.memory_space<vmem>>, vector<128x128xf32>
    %cst_141 = arith.constant dense<0.000000e+00> : vector<128x128xf32>
    %104 = tpu.matmul %102, %103, %cst_141 {dimension_numbers = #tpu.dot_dimension_numbers<[1], [0], [0], [1], [0, 0, 1, 1], [], []>} : vector<128x128xf32>, vector<128x128xf32>, vector<128x128xf32> -> vector<128x128xf32>
    %105 = arith.addf %100, %104 : vector<128x128xf32>
    %c0_142 = arith.constant 0 : index
    %c1_143 = arith.constant 1 : index
    %c2_144 = arith.constant 2 : index
    %c0_145 = arith.constant 0 : index
    %106 = vector.load %arg10[%c0_142, %c1_143, %c2_144, %c0_145] : memref<2x10x10x128xf32, #tpu.memory_space<vmem>>, vector<2x8x8x128xf32>
    %107 = vector.shape_cast %106 : vector<2x8x8x128xf32> to vector<128x128xf32>
    %c640_146 = arith.constant 640 : index
    %c0_147 = arith.constant 0 : index
    %108 = vector.load %arg5[%c640_146, %c0_147] : memref<1152x128xf32, #tpu.memory_space<vmem>>, vector<128x128xf32>
    %cst_148 = arith.constant dense<0.000000e+00> : vector<128x128xf32>
    %109 = tpu.matmul %107, %108, %cst_148 {dimension_numbers = #tpu.dot_dimension_numbers<[1], [0], [0], [1], [0, 0, 1, 1], [], []>} : vector<128x128xf32>, vector<128x128xf32>, vector<128x128xf32> -> vector<128x128xf32>
    %110 = arith.addf %105, %109 : vector<128x128xf32>
    %c0_149 = arith.constant 0 : index
    %c2_150 = arith.constant 2 : index
    %c0_151 = arith.constant 0 : index
    %c0_152 = arith.constant 0 : index
    %111 = vector.load %arg10[%c0_149, %c2_150, %c0_151, %c0_152] : memref<2x10x10x128xf32, #tpu.memory_space<vmem>>, vector<2x8x8x128xf32>
    %112 = vector.shape_cast %111 : vector<2x8x8x128xf32> to vector<128x128xf32>
    %c768_153 = arith.constant 768 : index
    %c0_154 = arith.constant 0 : index
    %113 = vector.load %arg5[%c768_153, %c0_154] : memref<1152x128xf32, #tpu.memory_space<vmem>>, vector<128x128xf32>
    %cst_155 = arith.constant dense<0.000000e+00> : vector<128x128xf32>
    %114 = tpu.matmul %112, %113, %cst_155 {dimension_numbers = #tpu.dot_dimension_numbers<[1], [0], [0], [1], [0, 0, 1, 1], [], []>} : vector<128x128xf32>, vector<128x128xf32>, vector<128x128xf32> -> vector<128x128xf32>
    %115 = arith.addf %110, %114 : vector<128x128xf32>
    %c0_156 = arith.constant 0 : index
    %c2_157 = arith.constant 2 : index
    %c1_158 = arith.constant 1 : index
    %c0_159 = arith.constant 0 : index
    %116 = vector.load %arg10[%c0_156, %c2_157, %c1_158, %c0_159] : memref<2x10x10x128xf32, #tpu.memory_space<vmem>>, vector<2x8x8x128xf32>
    %117 = vector.shape_cast %116 : vector<2x8x8x128xf32> to vector<128x128xf32>
    %c896_160 = arith.constant 896 : index
    %c0_161 = arith.constant 0 : index
    %118 = vector.load %arg5[%c896_160, %c0_161] : memref<1152x128xf32, #tpu.memory_space<vmem>>, vector<128x128xf32>
    %cst_162 = arith.constant dense<0.000000e+00> : vector<128x128xf32>
    %119 = tpu.matmul %117, %118, %cst_162 {dimension_numbers = #tpu.dot_dimension_numbers<[1], [0], [0], [1], [0, 0, 1, 1], [], []>} : vector<128x128xf32>, vector<128x128xf32>, vector<128x128xf32> -> vector<128x128xf32>
    %120 = arith.addf %115, %119 : vector<128x128xf32>
    %c0_163 = arith.constant 0 : index
    %c2_164 = arith.constant 2 : index
    %c2_165 = arith.constant 2 : index
    %c0_166 = arith.constant 0 : index
    %121 = vector.load %arg10[%c0_163, %c2_164, %c2_165, %c0_166] : memref<2x10x10x128xf32, #tpu.memory_space<vmem>>, vector<2x8x8x128xf32>
    %122 = vector.shape_cast %121 : vector<2x8x8x128xf32> to vector<128x128xf32>
    %c1024_167 = arith.constant 1024 : index
    %c0_168 = arith.constant 0 : index
    %123 = vector.load %arg5[%c1024_167, %c0_168] : memref<1152x128xf32, #tpu.memory_space<vmem>>, vector<128x128xf32>
    %cst_169 = arith.constant dense<0.000000e+00> : vector<128x128xf32>
    %124 = tpu.matmul %122, %123, %cst_169 {dimension_numbers = #tpu.dot_dimension_numbers<[1], [0], [0], [1], [0, 0, 1, 1], [], []>} : vector<128x128xf32>, vector<128x128xf32>, vector<128x128xf32> -> vector<128x128xf32>
    %125 = arith.addf %120, %124 : vector<128x128xf32>
    %c0_170 = arith.constant 0 : index
    %c0_171 = arith.constant 0 : index
    %126 = vector.load %arg6[%c0_170, %c0_171] : memref<1x128xf32, #tpu.memory_space<vmem>>, vector<1x128xf32>
    %127 = vector.broadcast %126 : vector<1x128xf32> to vector<128x128xf32>
    %128 = arith.mulf %125, %127 : vector<128x128xf32>
    %c0_172 = arith.constant 0 : index
    %c0_173 = arith.constant 0 : index
    %129 = vector.load %arg7[%c0_172, %c0_173] : memref<1x128xf32, #tpu.memory_space<vmem>>, vector<1x128xf32>
    %130 = vector.broadcast %129 : vector<1x128xf32> to vector<128x128xf32>
    %131 = arith.addf %128, %130 : vector<128x128xf32>
    %cst_174 = arith.constant 0.000000e+00 : f32
    %132 = vector.broadcast %cst_174 : f32 to vector<128x128xf32>
    %133 = arith.maximumf %131, %132 : vector<128x128xf32>
    %134 = vector.shape_cast %133 : vector<128x128xf32> to vector<2x64x128xf32>
    %c0_175 = arith.constant 0 : index
    %c0_176 = arith.constant 0 : index
    %c0_177 = arith.constant 0 : index
    %135 = vector.load %arg8[%c0_175, %c0_176, %c0_177] : memref<2x64x128xf32, #tpu.memory_space<vmem>>, vector<2x64x128xf32>
    tpu.vector_store %arg8[%c0_175, %c0_176, %c0_177], %134 {strides = array<i32>} : memref<2x64x128xf32, #tpu.memory_space<vmem>>, vector<2x64x128xf32>,
    return
  }
  func.func @transform_0(%arg0: i32) -> (i32, i32, i32, i32, i32) {
    %c0_i32 = arith.constant 0 : i32
    %c0_i32_0 = arith.constant 0 : i32
    %c0_i32_1 = arith.constant 0 : i32
    %c0_i32_2 = arith.constant 0 : i32
    %c0_i32_3 = arith.constant 0 : i32
    return %arg0, %c0_i32, %c0_i32_0, %c0_i32_1, %c0_i32_2 : i32, i32, i32, i32, i32
  }
  func.func @transform_1(%arg0: i32) -> (i32, i32) {
    %c0_i32 = arith.constant 0 : i32
    %c0_i32_0 = arith.constant 0 : i32
    %c0_i32_1 = arith.constant 0 : i32
    return %c0_i32, %c0_i32_0 : i32, i32
  }
  func.func @transform_2(%arg0: i32) -> (i32, i32) {
    %c0_i32 = arith.constant 0 : i32
    %c0_i32_0 = arith.constant 0 : i32
    %c0_i32_1 = arith.constant 0 : i32
    return %c0_i32, %c0_i32_0 : i32, i32
  }
  func.func @transform_3(%arg0: i32) -> (i32, i32) {
    %c0_i32 = arith.constant 0 : i32
    %c0_i32_0 = arith.constant 0 : i32
    %c0_i32_1 = arith.constant 0 : i32
    return %c0_i32, %c0_i32_0 : i32, i32
  }
  func.func @transform_4(%arg0: i32) -> (i32, i32) {
    %c0_i32 = arith.constant 0 : i32
    %c0_i32_0 = arith.constant 0 : i32
    %c0_i32_1 = arith.constant 0 : i32
    return %c0_i32, %c0_i32_0 : i32, i32
  }
  func.func @transform_5(%arg0: i32) -> (i32, i32) {
    %c0_i32 = arith.constant 0 : i32
    %c0_i32_0 = arith.constant 0 : i32
    %c0_i32_1 = arith.constant 0 : i32
    return %c0_i32, %c0_i32_0 : i32, i32
  }
  func.func @transform_6(%arg0: i32) -> (i32, i32) {
    %c0_i32 = arith.constant 0 : i32
    %c0_i32_0 = arith.constant 0 : i32
    %c0_i32_1 = arith.constant 0 : i32
    return %c0_i32, %c0_i32_0 : i32, i32
  }
  func.func @transform_7(%arg0: i32) -> (i32, i32, i32) {
    %c0_i32 = arith.constant 0 : i32
    %c0_i32_0 = arith.constant 0 : i32
    %c0_i32_1 = arith.constant 0 : i32
    return %arg0, %c0_i32, %c0_i32_0 : i32, i32, i32
  }
}

</mosaic_0001>

<llo_original>
// kernel: down_forward_nhwc.1
$region0: #{down_forward_nhwc.1}
  #allocation0 [shape = 'u32[]', space=smem, size = 0x4, offset = 0x4, fixed_abs, tag = 'smem constant byte address 0x4 - core index']
  #allocation1 [shape = 'u32[144,128]{1,0:T(1,128)}', space=vmem, size = 0x12000, scoped, tag = 'internal scratch']
  #allocation2 [shape = 'f32[2,10,10,128]{3,2,1,0:T(8,128)}', space=vmem, size = 0x28000, scoped, tag = 'scratch operand']
  #allocation3 [shape = 'f32[2,10,10,128]{3,2,1,0:T(8,128)}', space=vmem, size = 0x28000, scoped, tag = 'scratch operand']
  %s0 = inlined_call_operand.vmem [shape: f32[2,8,2,8,8], index: 0, kind: input, shape index: {}]
  %s1 = inlined_call_operand.vmem [shape: f32[1152,128], index: 1, kind: input, shape index: {}]
  %s2 = inlined_call_operand.vmem [shape: f32[1,128], index: 2, kind: input, shape index: {}]
  %s3 = inlined_call_operand.vmem [shape: f32[1,128], index: 3, kind: input, shape index: {}]
  %s4 = inlined_call_operand.vmem [shape: f32[1152,128], index: 4, kind: input, shape index: {}]
  %s5 = inlined_call_operand.vmem [shape: f32[1,128], index: 5, kind: input, shape index: {}]
  %s6 = inlined_call_operand.vmem [shape: f32[1,128], index: 6, kind: input, shape index: {}]
  %s7 = inlined_call_operand.vmem [shape: f32[2,64,128], index: 7, kind: output, shape index: {}]
  %s8 = sld [smem:[#allocation0]]
  $region38: #{down_forward_nhwc.1} parent=0
    _
  %s10 = ssub.s32 1, %s8
  %s11 = scalar_select 0, %s10, %s8
  // Predicated region
  $region2: #{down_forward_nhwc.1} parent=0 // pred_check
    _
  $region3: #{down_forward_nhwc.1} parent=0 // pred_check_branch
    %13 = sbr.rel (0) target = $region5
  $region4: #{down_forward_nhwc.1} parent=0 // pred_region
    _
  $region5: #{down_forward_nhwc.1} parent=0 // pred_fallthru
    _
  // Predicated region
  $region6: #{down_forward_nhwc.1} parent=0 // pred_check
    _
  $region7: #{down_forward_nhwc.1} parent=0 // pred_check_branch
    %15 = sbr.rel (0) target = $region9
  $region8: #{down_forward_nhwc.1} parent=0 // pred_region
    _
  $region9: #{down_forward_nhwc.1} parent=0 // pred_fallthru
    _
  // Predicated region
  $region10: #{down_forward_nhwc.1} parent=0 // pred_check
    _
  $region11: #{down_forward_nhwc.1} parent=0 // pred_check_branch
    %17 = sbr.rel (0) target = $region13
  $region12: #{down_forward_nhwc.1} parent=0 // pred_region
    _
  $region13: #{down_forward_nhwc.1} parent=0 // pred_fallthru
    _
  // Predicated region
  $region14: #{down_forward_nhwc.1} parent=0 // pred_check
    _
  $region15: #{down_forward_nhwc.1} parent=0 // pred_check_branch
    %19 = sbr.rel (0) target = $region17
  $region16: #{down_forward_nhwc.1} parent=0 // pred_region
    _
  $region17: #{down_forward_nhwc.1} parent=0 // pred_fallthru
    _
  // Predicated region
  $region18: #{down_forward_nhwc.1} parent=0 // pred_check
    _
  $region19: #{down_forward_nhwc.1} parent=0 // pred_check_branch
    %21 = sbr.rel (0) target = $region21
  $region20: #{down_forward_nhwc.1} parent=0 // pred_region
    _
  $region21: #{down_forward_nhwc.1} parent=0 // pred_fallthru
    _
  // Predicated region
  $region22: #{down_forward_nhwc.1} parent=0 // pred_check
    _
  $region23: #{down_forward_nhwc.1} parent=0 // pred_check_branch
    %23 = sbr.rel (0) target = $region25
  $region24: #{down_forward_nhwc.1} parent=0 // pred_region
    _
  $region25: #{down_forward_nhwc.1} parent=0 // pred_fallthru
    _
  // Predicated region
  $region26: #{down_forward_nhwc.1} parent=0 // pred_check
    _
  $region27: #{down_forward_nhwc.1} parent=0 // pred_check_branch
    %25 = sbr.rel (0) target = $region29
  $region28: #{down_forward_nhwc.1} parent=0 // pred_region
    _
  $region29: #{down_forward_nhwc.1} parent=0 // pred_fallthru
    _
  %v26 = vld [vmem:[%s0] sm:$0xff]
  %v27 = vld [vmem:[%s0 + $0x8] sm:$0xff]
  %v28 = vld [vmem:[%s0 + $0x10] sm:$0xff]
  %v29 = vld [vmem:[%s0 + $0x18] sm:$0xff]
  %v30 = vld [vmem:[%s0 + $0x20] sm:$0xff]
  %v31 = vld [vmem:[%s0 + $0x28] sm:$0xff]
  %v32 = vld [vmem:[%s0 + $0x30] sm:$0xff]
  %v33 = vld [vmem:[%s0 + $0x38] sm:$0xff]
  %v34 = vld [vmem:[%s0 + $0x40] sm:$0xff]
  %v35 = vld [vmem:[%s0 + $0x48] sm:$0xff]
  %v36 = vld [vmem:[%s0 + $0x50] sm:$0xff]
  %v37 = vld [vmem:[%s0 + $0x58] sm:$0xff]
  %v38 = vld [vmem:[%s0 + $0x60] sm:$0xff]
  %v39 = vld [vmem:[%s0 + $0x68] sm:$0xff]
  %v40 = vld [vmem:[%s0 + $0x70] sm:$0xff]
  %v41 = vld [vmem:[%s0 + $0x78] sm:$0xff]
  %v42 = vld [vmem:[%s0 + $0x80] sm:$0xff]
  %v43 = vld [vmem:[%s0 + $0x88] sm:$0xff]
  %v44 = vld [vmem:[%s0 + $0x90] sm:$0xff]
  %v45 = vld [vmem:[%s0 + $0x98] sm:$0xff]
  %v46 = vld [vmem:[%s0 + $0xa0] sm:$0xff]
  %v47 = vld [vmem:[%s0 + $0xa8] sm:$0xff]
  %v48 = vld [vmem:[%s0 + $0xb0] sm:$0xff]
  %v49 = vld [vmem:[%s0 + $0xb8] sm:$0xff]
  %v50 = vld [vmem:[%s0 + $0xc0] sm:$0xff]
  %v51 = vld [vmem:[%s0 + $0xc8] sm:$0xff]
  %v52 = vld [vmem:[%s0 + $0xd0] sm:$0xff]
  %v53 = vld [vmem:[%s0 + $0xd8] sm:$0xff]
  %v54 = vld [vmem:[%s0 + $0xe0] sm:$0xff]
  %v55 = vld [vmem:[%s0 + $0xe8] sm:$0xff]
  %v56 = vld [vmem:[%s0 + $0xf0] sm:$0xff]
  %v57 = vld [vmem:[%s0 + $0xf8] sm:$0xff]
  %v58 = vmax.f32 %v26, %v27
  %v59 = vmax.f32 %v28, %v29
  %v60 = vmax.f32 %v30, %v31
  %v61 = vmax.f32 %v32, %v33
  %v62 = vmax.f32 %v34, %v35
  %v63 = vmax.f32 %v36, %v37
  %v64 = vmax.f32 %v38, %v39
  %v65 = vmax.f32 %v40, %v41
  %v66 = vmax.f32 %v42, %v43
  %v67 = vmax.f32 %v44, %v45
  %v68 = vmax.f32 %v46, %v47
  %v69 = vmax.f32 %v48, %v49
  %v70 = vmax.f32 %v50, %v51
  %v71 = vmax.f32 %v52, %v53
  %v72 = vmax.f32 %v54, %v55
  %v73 = vmax.f32 %v56, %v57
  %90 = vrot.lane.b32.xlu0 %v58, 124
  %v91 = vpop.permute.xlu0 %90
  %92 = vrot.lane.b32.xlu0 %v59, 124
  %v93 = vpop.permute.xlu0 %92
  %94 = vrot.lane.b32.xlu0 %v60, 124
  %v95 = vpop.permute.xlu0 %94
  %96 = vrot.lane.b32.xlu0 %v61, 124
  %v97 = vpop.permute.xlu0 %96
  %98 = vrot.lane.b32.xlu0 %v62, 124
  %v99 = vpop.permute.xlu0 %98
  %100 = vrot.lane.b32.xlu0 %v63, 124
  %v101 = vpop.permute.xlu0 %100
  %102 = vrot.lane.b32.xlu0 %v64, 124
  %v103 = vpop.permute.xlu0 %102
  %104 = vrot.lane.b32.xlu0 %v65, 124
  %v105 = vpop.permute.xlu0 %104
  %106 = vrot.lane.b32.xlu0 %v66, 124
  %v107 = vpop.permute.xlu0 %106
  %108 = vrot.lane.b32.xlu0 %v67, 124
  %v109 = vpop.permute.xlu0 %108
  %110 = vrot.lane.b32.xlu0 %v68, 124
  %v111 = vpop.permute.xlu0 %110
  %112 = vrot.lane.b32.xlu0 %v69, 124
  %v113 = vpop.permute.xlu0 %112
  %114 = vrot.lane.b32.xlu0 %v70, 124
  %v115 = vpop.permute.xlu0 %114
  %116 = vrot.lane.b32.xlu0 %v71, 124
  %v117 = vpop.permute.xlu0 %116
  %118 = vrot.lane.b32.xlu0 %v72, 124
  %v119 = vpop.permute.xlu0 %118
  %120 = vrot.lane.b32.xlu0 %v73, 124
  %v121 = vpop.permute.xlu0 %120
  %v138 = vmax.f32 %v58, %v91
  %v139 = vmax.f32 %v59, %v93
  %v140 = vmax.f32 %v60, %v95
  %v141 = vmax.f32 %v61, %v97
  %v142 = vmax.f32 %v62, %v99
  %v143 = vmax.f32 %v63, %v101
  %v144 = vmax.f32 %v64, %v103
  %v145 = vmax.f32 %v65, %v105
  %v146 = vmax.f32 %v66, %v107
  %v147 = vmax.f32 %v67, %v109
  %v148 = vmax.f32 %v68, %v111
  %v149 = vmax.f32 %v69, %v113
  %v150 = vmax.f32 %v70, %v115
  %v151 = vmax.f32 %v71, %v117
  %v152 = vmax.f32 %v72, %v119
  %v153 = vmax.f32 %v73, %v121
  %vm154 = vcmask 31744
  %v155 = vsel %vm154, %v138, 0.0
  %v156 = vsel %vm154, %v139, 0.0
  %v157 = vsel %vm154, %v140, 0.0
  %v158 = vsel %vm154, %v141, 0.0
  %v159 = vsel %vm154, %v142, 0.0
  %v160 = vsel %vm154, %v143, 0.0
  %v161 = vsel %vm154, %v144, 0.0
  %v162 = vsel %vm154, %v145, 0.0
  %v163 = vsel %vm154, %v146, 0.0
  %v164 = vsel %vm154, %v147, 0.0
  %v165 = vsel %vm154, %v148, 0.0
  %v166 = vsel %vm154, %v149, 0.0
  %v167 = vsel %vm154, %v150, 0.0
  %v168 = vsel %vm154, %v151, 0.0
  %v169 = vsel %vm154, %v152, 0.0
  %v170 = vsel %vm154, %v153, 0.0
  %171 = vst [vmem:[#allocation2] sm:$0xff] 0.0
  %172 = vst [vmem:[#allocation2 + $0x8] sm:$0x3] 0.0
  %173 = vst [vmem:[#allocation2 + $0xa0] sm:$0xff] 0.0
  %174 = vst [vmem:[#allocation2 + $0xa8] sm:$0x3] 0.0
  %s175 = scalar_lea.vmem [#allocation2], 144
  %176 = vst [vmem:[%s175] sm:$0xff] 0.0
  %177 = vst [vmem:[%s175 + $0x8] sm:$0x3] 0.0
  %178 = vst [vmem:[%s175 + $0xa0] sm:$0xff] 0.0
  %179 = vst [vmem:[%s175 + $0xa8] sm:$0x3] 0.0
  %s180 = scalar_lea.vmem [#allocation2], 16
  %181 = vst [vmem:[%s180] sm:$0x1] 0.0
  %182 = vst [vmem:[%s180 + $0x10] sm:$0x1] 0.0
  %183 = vst [vmem:[%s180 + $0x20] sm:$0x1] 0.0
  %184 = vst [vmem:[%s180 + $0x30] sm:$0x1] 0.0
  %185 = vst [vmem:[%s180 + $0x40] sm:$0x1] 0.0
  %186 = vst [vmem:[%s180 + $0x50] sm:$0x1] 0.0
  %187 = vst [vmem:[%s180 + $0x60] sm:$0x1] 0.0
  %188 = vst [vmem:[%s180 + $0x70] sm:$0x1] 0.0
  %189 = vst [vmem:[%s180 + $0xa0] sm:$0x1] 0.0
  %190 = vst [vmem:[%s180 + $0xb0] sm:$0x1] 0.0
  %191 = vst [vmem:[%s180 + $0xc0] sm:$0x1] 0.0
  %192 = vst [vmem:[%s180 + $0xd0] sm:$0x1] 0.0
  %193 = vst [vmem:[%s180 + $0xe0] sm:$0x1] 0.0
  %194 = vst [vmem:[%s180 + $0xf0] sm:$0x1] 0.0
  %195 = vst [vmem:[%s180 + $0x100] sm:$0x1] 0.0
  %196 = vst [vmem:[%s180 + $0x110] sm:$0x1] 0.0
  %197 = vst [vmem:[%s180 + $0x9] sm:$0x1] 0.0
  %198 = vst [vmem:[%s180 + $0x19] sm:$0x1] 0.0
  %199 = vst [vmem:[%s180 + $0x29] sm:$0x1] 0.0
  %200 = vst [vmem:[%s180 + $0x39] sm:$0x1] 0.0
  %201 = vst [vmem:[%s180 + $0x49] sm:$0x1] 0.0
  %202 = vst [vmem:[%s180 + $0x59] sm:$0x1] 0.0
  %203 = vst [vmem:[%s180 + $0x69] sm:$0x1] 0.0
  %204 = vst [vmem:[%s180 + $0x79] sm:$0x1] 0.0
  %205 = vst [vmem:[%s180 + $0xa9] sm:$0x1] 0.0
  %206 = vst [vmem:[%s180 + $0xb9] sm:$0x1] 0.0
  %207 = vst [vmem:[%s180 + $0xc9] sm:$0x1] 0.0
  %208 = vst [vmem:[%s180 + $0xd9] sm:$0x1] 0.0
  %209 = vst [vmem:[%s180 + $0xe9] sm:$0x1] 0.0
  %210 = vst [vmem:[%s180 + $0xf9] sm:$0x1] 0.0
  %211 = vst [vmem:[%s180 + $0x109] sm:$0x1] 0.0
  %212 = vst [vmem:[%s180 + $0x119] sm:$0x1] 0.0
  %213 = vst [vmem:[%s180 + $0x1] sm:$0xff] %v155
  %214 = vst [vmem:[%s180 + $0x11] sm:$0xff] %v156
  %215 = vst [vmem:[%s180 + $0x21] sm:$0xff] %v157
  %216 = vst [vmem:[%s180 + $0x31] sm:$0xff] %v158
  %217 = vst [vmem:[%s180 + $0x41] sm:$0xff] %v159
  %218 = vst [vmem:[%s180 + $0x51] sm:$0xff] %v160
  %219 = vst [vmem:[%s180 + $0x61] sm:$0xff] %v161
  %220 = vst [vmem:[%s180 + $0x71] sm:$0xff] %v162
  %221 = vst [vmem:[%s180 + $0xa1] sm:$0xff] %v163
  %222 = vst [vmem:[%s180 + $0xb1] sm:$0xff] %v164
  %223 = vst [vmem:[%s180 + $0xc1] sm:$0xff] %v165
  %224 = vst [vmem:[%s180 + $0xd1] sm:$0xff] %v166
  %225 = vst [vmem:[%s180 + $0xe1] sm:$0xff] %v167
  %226 = vst [vmem:[%s180 + $0xf1] sm:$0xff] %v168
  %227 = vst [vmem:[%s180 + $0x101] sm:$0xff] %v169
  %228 = vst [vmem:[%s180 + $0x111] sm:$0xff] %v170
  %v229 = vld [vmem:[#allocation2] sm:$0xff]
  %v230 = vld [vmem:[#allocation2 + $0x10] sm:$0xff]
  %v231 = vld [vmem:[#allocation2 + $0x20] sm:$0xff]
  %v232 = vld [vmem:[#allocation2 + $0x30] sm:$0xff]
  %v233 = vld [vmem:[#allocation2 + $0x40] sm:$0xff]
  %v234 = vld [vmem:[#allocation2 + $0x50] sm:$0xff]
  %v235 = vld [vmem:[#allocation2 + $0x60] sm:$0xff]
  %v236 = vld [vmem:[#allocation2 + $0x70] sm:$0xff]
  %v237 = vld [vmem:[#allocation2 + $0xa0] sm:$0xff]
  %v238 = vld [vmem:[#allocation2 + $0xb0] sm:$0xff]
  %v239 = vld [vmem:[#allocation2 + $0xc0] sm:$0xff]
  %v240 = vld [vmem:[#allocation2 + $0xd0] sm:$0xff]
  %v241 = vld [vmem:[#allocation2 + $0xe0] sm:$0xff]
  %v242 = vld [vmem:[#allocation2 + $0xf0] sm:$0xff]
  %v243 = vld [vmem:[#allocation2 + $0x100] sm:$0xff]
  %v244 = vld [vmem:[#allocation2 + $0x110] sm:$0xff]
  %v245 = vld [vmem:[%s1] sm:$0xff]
  %v246 = vld [vmem:[%s1 + $0x8] sm:$0xff]
  %v247 = vld [vmem:[%s1 + $0x10] sm:$0xff]
  %v248 = vld [vmem:[%s1 + $0x18] sm:$0xff]
  %v249 = vld [vmem:[%s1 + $0x20] sm:$0xff]
  %v250 = vld [vmem:[%s1 + $0x28] sm:$0xff]
  %v251 = vld [vmem:[%s1 + $0x30] sm:$0xff]
  %v252 = vld [vmem:[%s1 + $0x38] sm:$0xff]
  %v253 = vld [vmem:[%s1 + $0x40] sm:$0xff]
  %v254 = vld [vmem:[%s1 + $0x48] sm:$0xff]
  %v255 = vld [vmem:[%s1 + $0x50] sm:$0xff]
  %v256 = vld [vmem:[%s1 + $0x58] sm:$0xff]
  %v257 = vld [vmem:[%s1 + $0x60] sm:$0xff]
  %v258 = vld [vmem:[%s1 + $0x68] sm:$0xff]
  %v259 = vld [vmem:[%s1 + $0x70] sm:$0xff]
  %v260 = vld [vmem:[%s1 + $0x78] sm:$0xff]
  %v261 = vld [vmem:[#allocation2 + $0x1] sm:$0xff]
  %v262 = vld [vmem:[#allocation2 + $0x11] sm:$0xff]
  %v263 = vld [vmem:[#allocation2 + $0x21] sm:$0xff]
  %v264 = vld [vmem:[#allocation2 + $0x31] sm:$0xff]
  %v265 = vld [vmem:[#allocation2 + $0x41] sm:$0xff]
  %v266 = vld [vmem:[#allocation2 + $0x51] sm:$0xff]
  %v267 = vld [vmem:[#allocation2 + $0x61] sm:$0xff]
  %v268 = vld [vmem:[#allocation2 + $0x71] sm:$0xff]
  %v269 = vld [vmem:[#allocation2 + $0xa1] sm:$0xff]
  %v270 = vld [vmem:[#allocation2 + $0xb1] sm:$0xff]
  %v271 = vld [vmem:[#allocation2 + $0xc1] sm:$0xff]
  %v272 = vld [vmem:[#allocation2 + $0xd1] sm:$0xff]
  %v273 = vld [vmem:[#allocation2 + $0xe1] sm:$0xff]
  %v274 = vld [vmem:[#allocation2 + $0xf1] sm:$0xff]
  %v275 = vld [vmem:[#allocation2 + $0x101] sm:$0xff]
  %v276 = vld [vmem:[#allocation2 + $0x111] sm:$0xff]
  %v277 = vld [vmem:[%s1 + $0x80] sm:$0xff]
  %v278 = vld [vmem:[%s1 + $0x88] sm:$0xff]
  %v279 = vld [vmem:[%s1 + $0x90] sm:$0xff]
  %v280 = vld [vmem:[%s1 + $0x98] sm:$0xff]
  %v281 = vld [vmem:[%s1 + $0xa0] sm:$0xff]
  %v282 = vld [vmem:[%s1 + $0xa8] sm:$0xff]
  %v283 = vld [vmem:[%s1 + $0xb0] sm:$0xff]
  %v284 = vld [vmem:[%s1 + $0xb8] sm:$0xff]
  %v285 = vld [vmem:[%s1 + $0xc0] sm:$0xff]
  %v286 = vld [vmem:[%s1 + $0xc8] sm:$0xff]
  %v287 = vld [vmem:[%s1 + $0xd0] sm:$0xff]
  %v288 = vld [vmem:[%s1 + $0xd8] sm:$0xff]
  %v289 = vld [vmem:[%s1 + $0xe0] sm:$0xff]
  %v290 = vld [vmem:[%s1 + $0xe8] sm:$0xff]
  %v291 = vld [vmem:[%s1 + $0xf0] sm:$0xff]
  %v292 = vld [vmem:[%s1 + $0xf8] sm:$0xff]
  %293 = vmatprep.subr.mxu0 0.0
  %294 = vmatpush1.msra.mxu0 %v277
  %295 = vmatprep.subr.mxu0 0.0
  %296 = vmatpush1.msra.mxu0 %v278
  %297 = vmatprep.subr.mxu0 0.0
  %298 = vmatpush1.msra.mxu0 %v279
  %299 = vmatprep.subr.mxu0 0.0
  %300 = vmatpush1.msra.mxu0 %v280
  %301 = vmatprep.subr.mxu0 0.0
  %302 = vmatpush1.msra.mxu0 %v281
  %303 = vmatprep.subr.mxu0 0.0
  %304 = vmatpush1.msra.mxu0 %v282
  %305 = vmatprep.subr.mxu0 0.0
  %306 = vmatpush1.msra.mxu0 %v283
  %307 = vmatprep.subr.mxu0 0.0
  %308 = vmatpush1.msra.mxu0 %v284
  %309 = vmatprep.subr.mxu0 0.0
  %310 = vmatpush1.msra.mxu0 %v285
  %311 = vmatprep.subr.mxu0 0.0
  %312 = vmatpush1.msra.mxu0 %v286
  %313 = vmatprep.subr.mxu0 0.0
  %314 = vmatpush1.msra.mxu0 %v287
  %315 = vmatprep.subr.mxu0 0.0
  %316 = vmatpush1.msra.mxu0 %v288
  %317 = vmatprep.subr.mxu0 0.0
  %318 = vmatpush1.msra.mxu0 %v289
  %319 = vmatprep.subr.mxu0 0.0
  %320 = vmatpush1.msra.mxu0 %v290
  %321 = vmatprep.subr.mxu0 0.0
  %322 = vmatpush1.msra.mxu0 %v291
  %323 = vmatprep.subr.mxu0 0.0
  %324 = vmatpush1.msra.mxu0 %v292
  %325 = vmatprep.subr.mxu0 0.0
  %326 = vmatpush1.msra.mxu0 0.0
  %327 = vmatprep.subr.mxu0 0.0
  %328 = vmatpush1.msra.mxu0 0.0
  %329 = vmatprep.subr.mxu0 0.0
  %330 = vmatpush1.msra.mxu0 0.0
  %331 = vmatprep.subr.mxu0 0.0
  %332 = vmatpush1.msra.mxu0 0.0
  %333 = vmatprep.subr.mxu0 0.0
  %334 = vmatpush1.msra.mxu0 0.0
  %335 = vmatprep.subr.mxu0 0.0
  %336 = vmatpush1.msra.mxu0 0.0
  %337 = vmatprep.subr.mxu0 0.0
  %338 = vmatpush1.msra.mxu0 0.0
  %339 = vmatprep.subr.mxu0 0.0
  %340 = vmatpush1.msra.mxu0 0.0
  %341 = vmatprep.subr.mxu0 0.0
  %342 = vmatpush1.msra.mxu0 0.0
  %343 = vmatprep.subr.mxu0 0.0
  %344 = vmatpush1.msra.mxu0 0.0
  %345 = vmatprep.subr.mxu0 0.0
  %346 = vmatpush1.msra.mxu0 0.0
  %347 = vmatprep.subr.mxu0 0.0
  %348 = vmatpush1.msra.mxu0 0.0
  %349 = vmatprep.subr.mxu0 0.0
  %350 = vmatpush1.msra.mxu0 0.0
  %351 = vmatprep.subr.mxu0 0.0
  %352 = vmatpush1.msra.mxu0 0.0
  %353 = vmatprep.subr.mxu0 0.0
  %354 = vmatpush1.msra.mxu0 0.0
  %355 = vmatprep.subr.mxu0 0.0
  %356 = vmatpush1.msra.mxu0 0.0
  %357 = vmatprep.mubr.f32.mxu0 0.0
  %358 = vmatmul.mubr.f32.gmra.mrb[0].mxu0 %v261
  %v359 = vpop.f32.mrb[0].mxu0
  %v360 = vadd.f32 0.0, %v359
  %v361 = vpop.f32.mrb[0].mxu0
  %362 = vmatprep.mubr.f32.mxu0 0.0
  %363 = vmatmul.mubr.f32.gmra.mrb[0].mxu0 %v262
  %v364 = vpop.f32.mrb[0].mxu0
  %v365 = vadd.f32 0.0, %v364
  %v366 = vpop.f32.mrb[0].mxu0
  %367 = vmatprep.mubr.f32.mxu0 0.0
  %368 = vmatmul.mubr.f32.gmra.mrb[0].mxu0 %v263
  %v369 = vpop.f32.mrb[0].mxu0
  %v370 = vadd.f32 0.0, %v369
  %v371 = vpop.f32.mrb[0].mxu0
  %372 = vmatprep.mubr.f32.mxu0 0.0
  %373 = vmatmul.mubr.f32.gmra.mrb[0].mxu0 %v264
  %v374 = vpop.f32.mrb[0].mxu0
  %v375 = vadd.f32 0.0, %v374
  %v376 = vpop.f32.mrb[0].mxu0
  %377 = vmatprep.mubr.f32.mxu0 0.0
  %378 = vmatmul.mubr.f32.gmra.mrb[0].mxu0 %v265
  %v379 = vpop.f32.mrb[0].mxu0
  %v380 = vadd.f32 0.0, %v379
  %v381 = vpop.f32.mrb[0].mxu0
  %382 = vmatprep.mubr.f32.mxu0 0.0
  %383 = vmatmul.mubr.f32.gmra.mrb[0].mxu0 %v266
  %v384 = vpop.f32.mrb[0].mxu0
  %v385 = vadd.f32 0.0, %v384
  %v386 = vpop.f32.mrb[0].mxu0
  %387 = vmatprep.mubr.f32.mxu0 0.0
  %388 = vmatmul.mubr.f32.gmra.mrb[0].mxu0 %v267
  %v389 = vpop.f32.mrb[0].mxu0
  %v390 = vadd.f32 0.0, %v389
  %v391 = vpop.f32.mrb[0].mxu0
  %392 = vmatprep.mubr.f32.mxu0 0.0
  %393 = vmatmul.mubr.f32.gmra.mrb[0].mxu0 %v268
  %v394 = vpop.f32.mrb[0].mxu0
  %v395 = vadd.f32 0.0, %v394
  %v396 = vpop.f32.mrb[0].mxu0
  %397 = vmatprep.mubr.f32.mxu0 0.0
  %398 = vmatmul.mubr.f32.gmra.mrb[0].mxu0 %v269
  %v399 = vpop.f32.mrb[0].mxu0
  %v400 = vadd.f32 0.0, %v399
  %v401 = vpop.f32.mrb[0].mxu0
  %402 = vmatprep.mubr.f32.mxu0 0.0
  %403 = vmatmul.mubr.f32.gmra.mrb[0].mxu0 %v270
  %v404 = vpop.f32.mrb[0].mxu0
  %v405 = vadd.f32 0.0, %v404
  %v406 = vpop.f32.mrb[0].mxu0
  %407 = vmatprep.mubr.f32.mxu0 0.0
  %408 = vmatmul.mubr.f32.gmra.mrb[0].mxu0 %v271
  %v409 = vpop.f32.mrb[0].mxu0
  %v410 = vadd.f32 0.0, %v409
  %v411 = vpop.f32.mrb[0].mxu0
  %412 = vmatprep.mubr.f32.mxu0 0.0
  %413 = vmatmul.mubr.f32.gmra.mrb[0].mxu0 %v272
  %v414 = vpop.f32.mrb[0].mxu0
  %v415 = vadd.f32 0.0, %v414
  %v416 = vpop.f32.mrb[0].mxu0
  %417 = vmatprep.mubr.f32.mxu0 0.0
  %418 = vmatmul.mubr.f32.gmra.mrb[0].mxu0 %v273
  %v419 = vpop.f32.mrb[0].mxu0
  %v420 = vadd.f32 0.0, %v419
  %v421 = vpop.f32.mrb[0].mxu0
  %422 = vmatprep.mubr.f32.mxu0 0.0
  %423 = vmatmul.mubr.f32.gmra.mrb[0].mxu0 %v274
  %v424 = vpop.f32.mrb[0].mxu0
  %v425 = vadd.f32 0.0, %v424
  %v426 = vpop.f32.mrb[0].mxu0
  %427 = vmatprep.mubr.f32.mxu0 0.0
  %428 = vmatmul.mubr.f32.gmra.mrb[0].mxu0 %v275
  %v429 = vpop.f32.mrb[0].mxu0
  %v430 = vadd.f32 0.0, %v429
  %v431 = vpop.f32.mrb[0].mxu0
  %432 = vmatprep.mubr.f32.mxu0 0.0
  %433 = vmatmul.mubr.f32.gmra.mrb[0].mxu0 %v276
  %v434 = vpop.f32.mrb[0].mxu0
  %v435 = vadd.f32 0.0, %v434
  %v436 = vpop.f32.mrb[0].mxu0
  %437 = vdwg.mxu0
  %438 = vmatprep.subr.mxu0 0.0
  %439 = vmatpush1.msra.mxu0 %v245
  %440 = vmatprep.subr.mxu0 0.0
  %441 = vmatpush1.msra.mxu0 %v246
  %442 = vmatprep.subr.mxu0 0.0
  %443 = vmatpush1.msra.mxu0 %v247
  %444 = vmatprep.subr.mxu0 0.0
  %445 = vmatpush1.msra.mxu0 %v248
  %446 = vmatprep.subr.mxu0 0.0
  %447 = vmatpush1.msra.mxu0 %v249
  %448 = vmatprep.subr.mxu0 0.0
  %449 = vmatpush1.msra.mxu0 %v250
  %450 = vmatprep.subr.mxu0 0.0
  %451 = vmatpush1.msra.mxu0 %v251
  %452 = vmatprep.subr.mxu0 0.0
  %453 = vmatpush1.msra.mxu0 %v252
  %454 = vmatprep.subr.mxu0 0.0
  %455 = vmatpush1.msra.mxu0 %v253
  %456 = vmatprep.subr.mxu0 0.0
  %457 = vmatpush1.msra.mxu0 %v254
  %458 = vmatprep.subr.mxu0 0.0
  %459 = vmatpush1.msra.mxu0 %v255
  %460 = vmatprep.subr.mxu0 0.0
  %461 = vmatpush1.msra.mxu0 %v256
  %462 = vmatprep.subr.mxu0 0.0
  %463 = vmatpush1.msra.mxu0 %v257
  %464 = vmatprep.subr.mxu0 0.0
  %465 = vmatpush1.msra.mxu0 %v258
  %466 = vmatprep.subr.mxu0 0.0
  %467 = vmatpush1.msra.mxu0 %v259
  %468 = vmatprep.subr.mxu0 0.0
  %469 = vmatpush1.msra.mxu0 %v260
  %470 = vmatprep.subr.mxu0 0.0
  %471 = vmatpush1.msra.mxu0 0.0
  %472 = vmatprep.subr.mxu0 0.0
  %473 = vmatpush1.msra.mxu0 0.0
  %474 = vmatprep.subr.mxu0 0.0
  %475 = vmatpush1.msra.mxu0 0.0
  %476 = vmatprep.subr.mxu0 0.0
  %477 = vmatpush1.msra.mxu0 0.0
  %478 = vmatprep.subr.mxu0 0.0
  %479 = vmatpush1.msra.mxu0 0.0
  %480 = vmatprep.subr.mxu0 0.0
  %481 = vmatpush1.msra.mxu0 0.0
  %482 = vmatprep.subr.mxu0 0.0
  %483 = vmatpush1.msra.mxu0 0.0
  %484 = vmatprep.subr.mxu0 0.0
  %485 = vmatpush1.msra.mxu0 0.0
  %486 = vmatprep.subr.mxu0 0.0
  %487 = vmatpush1.msra.mxu0 0.0
  %488 = vmatprep.subr.mxu0 0.0
  %489 = vmatpush1.msra.mxu0 0.0
  %490 = vmatprep.subr.mxu0 0.0
  %491 = vmatpush1.msra.mxu0 0.0
  %492 = vmatprep.subr.mxu0 0.0
  %493 = vmatpush1.msra.mxu0 0.0
  %494 = vmatprep.subr.mxu0 0.0
  %495 = vmatpush1.msra.mxu0 0.0
  %496 = vmatprep.subr.mxu0 0.0
  %497 = vmatpush1.msra.mxu0 0.0
  %498 = vmatprep.subr.mxu0 0.0
  %499 = vmatpush1.msra.mxu0 0.0
  %500 = vmatprep.subr.mxu0 0.0
  %501 = vmatpush1.msra.mxu0 0.0
  %502 = vmatprep.mubr.f32.mxu0 0.0
  %503 = vmatmul.mubr.f32.gmra.mrb[0].mxu0 %v229
  %v504 = vpop.f32.mrb[0].mxu0
  %v505 = vadd.f32 %v360, %v504
  %v506 = vpop.f32.mrb[0].mxu0
  %507 = vmatprep.mubr.f32.mxu0 0.0
  %508 = vmatmul.mubr.f32.gmra.mrb[0].mxu0 %v230
  %v509 = vpop.f32.mrb[0].mxu0
  %v510 = vadd.f32 %v365, %v509
  %v511 = vpop.f32.mrb[0].mxu0
  %512 = vmatprep.mubr.f32.mxu0 0.0
  %513 = vmatmul.mubr.f32.gmra.mrb[0].mxu0 %v231
  %v514 = vpop.f32.mrb[0].mxu0
  %v515 = vadd.f32 %v370, %v514
  %v516 = vpop.f32.mrb[0].mxu0
  %517 = vmatprep.mubr.f32.mxu0 0.0
  %518 = vmatmul.mubr.f32.gmra.mrb[0].mxu0 %v232
  %v519 = vpop.f32.mrb[0].mxu0
  %v520 = vadd.f32 %v375, %v519
  %v521 = vpop.f32.mrb[0].mxu0
  %522 = vmatprep.mubr.f32.mxu0 0.0
  %523 = vmatmul.mubr.f32.gmra.mrb[0].mxu0 %v233
  %v524 = vpop.f32.mrb[0].mxu0
  %v525 = vadd.f32 %v380, %v524
  %v526 = vpop.f32.mrb[0].mxu0
  %527 = vmatprep.mubr.f32.mxu0 0.0
  %528 = vmatmul.mubr.f32.gmra.mrb[0].mxu0 %v234
  %v529 = vpop.f32.mrb[0].mxu0
  %v530 = vadd.f32 %v385, %v529
  %v531 = vpop.f32.mrb[0].mxu0
  %532 = vmatprep.mubr.f32.mxu0 0.0
  %533 = vmatmul.mubr.f32.gmra.mrb[0].mxu0 %v235
  %v534 = vpop.f32.mrb[0].mxu0
  %v535 = vadd.f32 %v390, %v534
  %v536 = vpop.f32.mrb[0].mxu0
  %537 = vmatprep.mubr.f32.mxu0 0.0
  %538 = vmatmul.mubr.f32.gmra.mrb[0].mxu0 %v236
  %v539 = vpop.f32.mrb[0].mxu0
  %v540 = vadd.f32 %v395, %v539
  %v541 = vpop.f32.mrb[0].mxu0
  %542 = vmatprep.mubr.f32.mxu0 0.0
  %543 = vmatmul.mubr.f32.gmra.mrb[0].mxu0 %v237
  %v544 = vpop.f32.mrb[0].mxu0
  %v545 = vadd.f32 %v400, %v544
  %v546 = vpop.f32.mrb[0].mxu0
  %547 = vmatprep.mubr.f32.mxu0 0.0
  %548 = vmatmul.mubr.f32.gmra.mrb[0].mxu0 %v238
  %v549 = vpop.f32.mrb[0].mxu0
  %v550 = vadd.f32 %v405, %v549
  %v551 = vpop.f32.mrb[0].mxu0
  %552 = vmatprep.mubr.f32.mxu0 0.0
  %553 = vmatmul.mubr.f32.gmra.mrb[0].mxu0 %v239
  %v554 = vpop.f32.mrb[0].mxu0
  %v555 = vadd.f32 %v410, %v554
  %v556 = vpop.f32.mrb[0].mxu0
  %557 = vmatprep.mubr.f32.mxu0 0.0
  %558 = vmatmul.mubr.f32.gmra.mrb[0].mxu0 %v240
  %v559 = vpop.f32.mrb[0].mxu0
  %v560 = vadd.f32 %v415, %v559
  %v561 = vpop.f32.mrb[0].mxu0
  %562 = vmatprep.mubr.f32.mxu0 0.0
  %563 = vmatmul.mubr.f32.gmra.mrb[0].mxu0 %v241
  %v564 = vpop.f32.mrb[0].mxu0
  %v565 = vadd.f32 %v420, %v564
  %v566 = vpop.f32.mrb[0].mxu0
  %567 = vmatprep.mubr.f32.mxu0 0.0
  %568 = vmatmul.mubr.f32.gmra.mrb[0].mxu0 %v242
  %v569 = vpop.f32.mrb[0].mxu0
  %v570 = vadd.f32 %v425, %v569
  %v571 = vpop.f32.mrb[0].mxu0
  %572 = vmatprep.mubr.f32.mxu0 0.0
  %573 = vmatmul.mubr.f32.gmra.mrb[0].mxu0 %v243
  %v574 = vpop.f32.mrb[0].mxu0
  %v575 = vadd.f32 %v430, %v574
  %v576 = vpop.f32.mrb[0].mxu0
  %577 = vmatprep.mubr.f32.mxu0 0.0
  %578 = vmatmul.mubr.f32.gmra.mrb[0].mxu0 %v244
  %v579 = vpop.f32.mrb[0].mxu0
  %v580 = vadd.f32 %v435, %v579
  %v581 = vpop.f32.mrb[0].mxu0
  %582 = vdwg.mxu0
  %v583 = vld [vmem:[#allocation2 + $0x2] sm:$0xff]
  %v584 = vld [vmem:[#allocation2 + $0x12] sm:$0xff]
  %v585 = vld [vmem:[#allocation2 + $0x22] sm:$0xff]
  %v586 = vld [vmem:[#allocation2 + $0x32] sm:$0xff]
  %v587 = vld [vmem:[#allocation2 + $0x42] sm:$0xff]
  %v588 = vld [vmem:[#allocation2 + $0x52] sm:$0xff]
  %v589 = vld [vmem:[#allocation2 + $0x62] sm:$0xff]
  %v590 = vld [vmem:[#allocation2 + $0x72] sm:$0xff]
  %v591 = vld [vmem:[#allocation2 + $0xa2] sm:$0xff]
  %v592 = vld [vmem:[#allocation2 + $0xb2] sm:$0xff]
  %v593 = vld [vmem:[#allocation2 + $0xc2] sm:$0xff]
  %v594 = vld [vmem:[#allocation2 + $0xd2] sm:$0xff]
  %v595 = vld [vmem:[#allocation2 + $0xe2] sm:$0xff]
  %v596 = vld [vmem:[#allocation2 + $0xf2] sm:$0xff]
  %v597 = vld [vmem:[#allocation2 + $0x102] sm:$0xff]
  %v598 = vld [vmem:[#allocation2 + $0x112] sm:$0xff]
  %v599 = vld [vmem:[%s1 + $0x100] sm:$0xff]
  %v600 = vld [vmem:[%s1 + $0x108] sm:$0xff]
  %v601 = vld [vmem:[%s1 + $0x110] sm:$0xff]
  %v602 = vld [vmem:[%s1 + $0x118] sm:$0xff]
  %v603 = vld [vmem:[%s1 + $0x120] sm:$0xff]
  %v604 = vld [vmem:[%s1 + $0x128] sm:$0xff]
  %v605 = vld [vmem:[%s1 + $0x130] sm:$0xff]
  %v606 = vld [vmem:[%s1 + $0x138] sm:$0xff]
  %v607 = vld [vmem:[%s1 + $0x140] sm:$0xff]
  %v608 = vld [vmem:[%s1 + $0x148] sm:$0xff]
  %v609 = vld [vmem:[%s1 + $0x150] sm:$0xff]
  %v610 = vld [vmem:[%s1 + $0x158] sm:$0xff]
  %v611 = vld [vmem:[%s1 + $0x160] sm:$0xff]
  %v612 = vld [vmem:[%s1 + $0x168] sm:$0xff]
  %v613 = vld [vmem:[%s1 + $0x170] sm:$0xff]
  %v614 = vld [vmem:[%s1 + $0x178] sm:$0xff]
  %615 = vmatprep.subr.mxu0 0.0
  %616 = vmatpush1.msra.mxu0 %v599
  %617 = vmatprep.subr.mxu0 0.0
  %618 = vmatpush1.msra.mxu0 %v600
  %619 = vmatprep.subr.mxu0 0.0
  %620 = vmatpush1.msra.mxu0 %v601
  %621 = vmatprep.subr.mxu0 0.0
  %622 = vmatpush1.msra.mxu0 %v602
  %623 = vmatprep.subr.mxu0 0.0
  %624 = vmatpush1.msra.mxu0 %v603
  %625 = vmatprep.subr.mxu0 0.0
  %626 = vmatpush1.msra.mxu0 %v604
  %627 = vmatprep.subr.mxu0 0.0
  %628 = vmatpush1.msra.mxu0 %v605
  %629 = vmatprep.subr.mxu0 0.0
  %630 = vmatpush1.msra.mxu0 %v606
  %631 = vmatprep.subr.mxu0 0.0
  %632 = vmatpush1.msra.mxu0 %v607
  %633 = vmatprep.subr.mxu0 0.0
  %634 = vmatpush1.msra.mxu0 %v608
  %635 = vmatprep.subr.mxu0 0.0
  %636 = vmatpush1.msra.mxu0 %v609
  %637 = vmatprep.subr.mxu0 0.0
  %638 = vmatpush1.msra.mxu0 %v610
  %639 = vmatprep.subr.mxu0 0.0
  %640 = vmatpush1.msra.mxu0 %v611
  %641 = vmatprep.subr.mxu0 0.0
  %642 = vmatpush1.msra.mxu0 %v612
  %643 = vmatprep.subr.mxu0 0.0
  %644 = vmatpush1.msra.mxu0 %v613
  %645 = vmatprep.subr.mxu0 0.0
  %646 = vmatpush1.msra.mxu0 %v614
  %647 = vmatprep.subr.mxu0 0.0
  %648 = vmatpush1.msra.mxu0 0.0
  %649 = vmatprep.subr.mxu0 0.0
  %650 = vmatpush1.msra.mxu0 0.0
  %651 = vmatprep.subr.mxu0 0.0
  %652 = vmatpush1.msra.mxu0 0.0
  %653 = vmatprep.subr.mxu0 0.0
  %654 = vmatpush1.msra.mxu0 0.0
  %655 = vmatprep.subr.mxu0 0.0
  %656 = vmatpush1.msra.mxu0 0.0
  %657 = vmatprep.subr.mxu0 0.0
  %658 = vmatpush1.msra.mxu0 0.0
  %659 = vmatprep.subr.mxu0 0.0
  %660 = vmatpush1.msra.mxu0 0.0
  %661 = vmatprep.subr.mxu0 0.0
  %662 = vmatpush1.msra.mxu0 0.0
  %663 = vmatprep.subr.mxu0 0.0
  %664 = vmatpush1.msra.mxu0 0.0
  %665 = vmatprep.subr.mxu0 0.0
  %666 = vmatpush1.msra.mxu0 0.0
  %667 = vmatprep.subr.mxu0 0.0
  %668 = vmatpush1.msra.mxu0 0.0
  %669 = vmatprep.subr.mxu0 0.0
  %670 = vmatpush1.msra.mxu0 0.0
  %671 = vmatprep.subr.mxu0 0.0
  %672 = vmatpush1.msra.mxu0 0.0
  %673 = vmatprep.subr.mxu0 0.0
  %674 = vmatpush1.msra.mxu0 0.0
  %675 = vmatprep.subr.mxu0 0.0
  %676 = vmatpush1.msra.mxu0 0.0
  %677 = vmatprep.subr.mxu0 0.0
  %678 = vmatpush1.msra.mxu0 0.0
  %679 = vmatprep.mubr.f32.mxu0 0.0
  %680 = vmatmul.mubr.f32.gmra.mrb[0].mxu0 %v583
  %v681 = vpop.f32.mrb[0].mxu0
  %v682 = vadd.f32 0.0, %v681
  %v683 = vpop.f32.mrb[0].mxu0
  %684 = vmatprep.mubr.f32.mxu0 0.0
  %685 = vmatmul.mubr.f32.gmra.mrb[0].mxu0 %v584
  %v686 = vpop.f32.mrb[0].mxu0
  %v687 = vadd.f32 0.0, %v686
  %v688 = vpop.f32.mrb[0].mxu0
  %689 = vmatprep.mubr.f32.mxu0 0.0
  %690 = vmatmul.mubr.f32.gmra.mrb[0].mxu0 %v585
  %v691 = vpop.f32.mrb[0].mxu0
  %v692 = vadd.f32 0.0, %v691
  %v693 = vpop.f32.mrb[0].mxu0
  %694 = vmatprep.mubr.f32.mxu0 0.0
  %695 = vmatmul.mubr.f32.gmra.mrb[0].mxu0 %v586
  %v696 = vpop.f32.mrb[0].mxu0
  %v697 = vadd.f32 0.0, %v696
  %v698 = vpop.f32.mrb[0].mxu0
  %699 = vmatprep.mubr.f32.mxu0 0.0
  %700 = vmatmul.mubr.f32.gmra.mrb[0].mxu0 %v587
  %v701 = vpop.f32.mrb[0].mxu0
  %v702 = vadd.f32 0.0, %v701
  %v703 = vpop.f32.mrb[0].mxu0
  %704 = vmatprep.mubr.f32.mxu0 0.0
  %705 = vmatmul.mubr.f32.gmra.mrb[0].mxu0 %v588
  %v706 = vpop.f32.mrb[0].mxu0
  %v707 = vadd.f32 0.0, %v706
  %v708 = vpop.f32.mrb[0].mxu0
  %709 = vmatprep.mubr.f32.mxu0 0.0
  %710 = vmatmul.mubr.f32.gmra.mrb[0].mxu0 %v589
  %v711 = vpop.f32.mrb[0].mxu0
  %v712 = vadd.f32 0.0, %v711
  %v713 = vpop.f32.mrb[0].mxu0
  %714 = vmatprep.mubr.f32.mxu0 0.0
  %715 = vmatmul.mubr.f32.gmra.mrb[0].mxu0 %v590
  %v716 = vpop.f32.mrb[0].mxu0
  %v717 = vadd.f32 0.0, %v716
  %v718 = vpop.f32.mrb[0].mxu0
  %719 = vmatprep.mubr.f32.mxu0 0.0
  %720 = vmatmul.mubr.f32.gmra.mrb[0].mxu0 %v591
  %v721 = vpop.f32.mrb[0].mxu0
  %v722 = vadd.f32 0.0, %v721
  %v723 = vpop.f32.mrb[0].mxu0
  %724 = vmatprep.mubr.f32.mxu0 0.0
  %725 = vmatmul.mubr.f32.gmra.mrb[0].mxu0 %v592
  %v726 = vpop.f32.mrb[0].mxu0
  %v727 = vadd.f32 0.0, %v726
  %v728 = vpop.f32.mrb[0].mxu0
  %729 = vmatprep.mubr.f32.mxu0 0.0
  %730 = vmatmul.mubr.f32.gmra.mrb[0].mxu0 %v593
  %v731 = vpop.f32.mrb[0].mxu0
  %v732 = vadd.f32 0.0, %v731
  %v733 = vpop.f32.mrb[0].mxu0
  %734 = vmatprep.mubr.f32.mxu0 0.0
  %735 = vmatmul.mubr.f32.gmra.mrb[0].mxu0 %v594
  %v736 = vpop.f32.mrb[0].mxu0
  %v737 = vadd.f32 0.0, %v736
  %v738 = vpop.f32.mrb[0].mxu0
  %739 = vmatprep.mubr.f32.mxu0 0.0
  %740 = vmatmul.mubr.f32.gmra.mrb[0].mxu0 %v595
  %v741 = vpop.f32.mrb[0].mxu0
  %v742 = vadd.f32 0.0, %v741
  %v743 = vpop.f32.mrb[0].mxu0
  %744 = vmatprep.mubr.f32.mxu0 0.0
  %745 = vmatmul.mubr.f32.gmra.mrb[0].mxu0 %v596
  %v746 = vpop.f32.mrb[0].mxu0
  %v747 = vadd.f32 0.0, %v746
  %v748 = vpop.f32.mrb[0].mxu0
  %749 = vmatprep.mubr.f32.mxu0 0.0
  %750 = vmatmul.mubr.f32.gmra.mrb[0].mxu0 %v597
  %v751 = vpop.f32.mrb[0].mxu0
  %v752 = vadd.f32 0.0, %v751
  %v753 = vpop.f32.mrb[0].mxu0
  %754 = vmatprep.mubr.f32.mxu0 0.0
  %755 = vmatmul.mubr.f32.gmra.mrb[0].mxu0 %v598
  %v756 = vpop.f32.mrb[0].mxu0
  %v757 = vadd.f32 0.0, %v756
  %v758 = vpop.f32.mrb[0].mxu0
  %759 = vdwg.mxu0
  %v760 = vadd.f32 %v505, %v682
  %v761 = vadd.f32 %v510, %v687
  %v762 = vadd.f32 %v515, %v692
  %v763 = vadd.f32 %v520, %v697
  %v764 = vadd.f32 %v525, %v702
  %v765 = vadd.f32 %v530, %v707
  %v766 = vadd.f32 %v535, %v712
  %v767 = vadd.f32 %v540, %v717
  %v768 = vadd.f32 %v545, %v722
  %v769 = vadd.f32 %v550, %v727
  %v770 = vadd.f32 %v555, %v732
  %v771 = vadd.f32 %v560, %v737
  %v772 = vadd.f32 %v565, %v742
  %v773 = vadd.f32 %v570, %v747
  %v774 = vadd.f32 %v575, %v752
  %v775 = vadd.f32 %v580, %v757
  %v776 = vld [vmem:[%s180] sm:$0xff]
  %v777 = vld [vmem:[%s180 + $0x10] sm:$0xff]
  %v778 = vld [vmem:[%s180 + $0x20] sm:$0xff]
  %v779 = vld [vmem:[%s180 + $0x30] sm:$0xff]
  %v780 = vld [vmem:[%s180 + $0x40] sm:$0xff]
  %v781 = vld [vmem:[%s180 + $0x50] sm:$0xff]
  %v782 = vld [vmem:[%s180 + $0x60] sm:$0xff]
  %v783 = vld [vmem:[%s180 + $0x70] sm:$0xff]
  %v784 = vld [vmem:[%s180 + $0xa0] sm:$0xff]
  %v785 = vld [vmem:[%s180 + $0xb0] sm:$0xff]
  %v786 = vld [vmem:[%s180 + $0xc0] sm:$0xff]
  %v787 = vld [vmem:[%s180 + $0xd0] sm:$0xff]
  %v788 = vld [vmem:[%s180 + $0xe0] sm:$0xff]
  %v789 = vld [vmem:[%s180 + $0xf0] sm:$0xff]
  %v790 = vld [vmem:[%s180 + $0x100] sm:$0xff]
  %v791 = vld [vmem:[%s180 + $0x110] sm:$0xff]
  %v792 = vld [vmem:[%s1 + $0x180] sm:$0xff]
  %v793 = vld [vmem:[%s1 + $0x188] sm:$0xff]
  %v794 = vld [vmem:[%s1 + $0x190] sm:$0xff]
  %v795 = vld [vmem:[%s1 + $0x198] sm:$0xff]
  %v796 = vld [vmem:[%s1 + $0x1a0] sm:$0xff]
  %v797 = vld [vmem:[%s1 + $0x1a8] sm:$0xff]
  %v798 = vld [vmem:[%s1 + $0x1b0] sm:$0xff]
  %v799 = vld [vmem:[%s1 + $0x1b8] sm:$0xff]
  %v800 = vld [vmem:[%s1 + $0x1c0] sm:$0xff]
  %v801 = vld [vmem:[%s1 + $0x1c8] sm:$0xff]
  %v802 = vld [vmem:[%s1 + $0x1d0] sm:$0xff]
  %v803 = vld [vmem:[%s1 + $0x1d8] sm:$0xff]
  %v804 = vld [vmem:[%s1 + $0x1e0] sm:$0xff]
  %v805 = vld [vmem:[%s1 + $0x1e8] sm:$0xff]
  %v806 = vld [vmem:[%s1 + $0x1f0] sm:$0xff]
  %v807 = vld [vmem:[%s1 + $0x1f8] sm:$0xff]
  %808 = vmatprep.subr.mxu0 0.0
  %809 = vmatpush1.msra.mxu0 %v792
  %810 = vmatprep.subr.mxu0 0.0
  %811 = vmatpush1.msra.mxu0 %v793
  %812 = vmatprep.subr.mxu0 0.0
  %813 = vmatpush1.msra.mxu0 %v794
  %814 = vmatprep.subr.mxu0 0.0
  %815 = vmatpush1.msra.mxu0 %v795
  %816 = vmatprep.subr.mxu0 0.0
  %817 = vmatpush1.msra.mxu0 %v796
  %818 = vmatprep.subr.mxu0 0.0
  %819 = vmatpush1.msra.mxu0 %v797
  %820 = vmatprep.subr.mxu0 0.0
  %821 = vmatpush1.msra.mxu0 %v798
  %822 = vmatprep.subr.mxu0 0.0
  %823 = vmatpush1.msra.mxu0 %v799
  %824 = vmatprep.subr.mxu0 0.0
  %825 = vmatpush1.msra.mxu0 %v800
  %826 = vmatprep.subr.mxu0 0.0
  %827 = vmatpush1.msra.mxu0 %v801
  %828 = vmatprep.subr.mxu0 0.0
  %829 = vmatpush1.msra.mxu0 %v802
  %830 = vmatprep.subr.mxu0 0.0
  %831 = vmatpush1.msra.mxu0 %v803
  %832 = vmatprep.subr.mxu0 0.0
  %833 = vmatpush1.msra.mxu0 %v804
  %834 = vmatprep.subr.mxu0 0.0
  %835 = vmatpush1.msra.mxu0 %v805
  %836 = vmatprep.subr.mxu0 0.0
  %837 = vmatpush1.msra.mxu0 %v806
  %838 = vmatprep.subr.mxu0 0.0
  %839 = vmatpush1.msra.mxu0 %v807
  %840 = vmatprep.subr.mxu0 0.0
  %841 = vmatpush1.msra.mxu0 0.0
  %842 = vmatprep.subr.mxu0 0.0
  %843 = vmatpush1.msra.mxu0 0.0
  %844 = vmatprep.subr.mxu0 0.0
  %845 = vmatpush1.msra.mxu0 0.0
  %846 = vmatprep.subr.mxu0 0.0
  %847 = vmatpush1.msra.mxu0 0.0
  %848 = vmatprep.subr.mxu0 0.0
  %849 = vmatpush1.msra.mxu0 0.0
  %850 = vmatprep.subr.mxu0 0.0
  %851 = vmatpush1.msra.mxu0 0.0
  %852 = vmatprep.subr.mxu0 0.0
  %853 = vmatpush1.msra.mxu0 0.0
  %854 = vmatprep.subr.mxu0 0.0
  %855 = vmatpush1.msra.mxu0 0.0
  %856 = vmatprep.subr.mxu0 0.0
  %857 = vmatpush1.msra.mxu0 0.0
  %858 = vmatprep.subr.mxu0 0.0
  %859 = vmatpush1.msra.mxu0 0.0
  %860 = vmatprep.subr.mxu0 0.0
  %861 = vmatpush1.msra.mxu0 0.0
  %862 = vmatprep.subr.mxu0 0.0
  %863 = vmatpush1.msra.mxu0 0.0
  %864 = vmatprep.subr.mxu0 0.0
  %865 = vmatpush1.msra.mxu0 0.0
  %866 = vmatprep.subr.mxu0 0.0
  %867 = vmatpush1.msra.mxu0 0.0
  %868 = vmatprep.subr.mxu0 0.0
  %869 = vmatpush1.msra.mxu0 0.0
  %870 = vmatprep.subr.mxu0 0.0
  %871 = vmatpush1.msra.mxu0 0.0
  %872 = vmatprep.mubr.f32.mxu0 0.0
  %873 = vmatmul.mubr.f32.gmra.mrb[0].mxu0 %v776
  %v874 = vpop.f32.mrb[0].mxu0
  %v875 = vadd.f32 0.0, %v874
  %v876 = vpop.f32.mrb[0].mxu0
  %877 = vmatprep.mubr.f32.mxu0 0.0
  %878 = vmatmul.mubr.f32.gmra.mrb[0].mxu0 %v777
  %v879 = vpop.f32.mrb[0].mxu0
  %v880 = vadd.f32 0.0, %v879
  %v881 = vpop.f32.mrb[0].mxu0
  %882 = vmatprep.mubr.f32.mxu0 0.0
  %883 = vmatmul.mubr.f32.gmra.mrb[0].mxu0 %v778
  %v884 = vpop.f32.mrb[0].mxu0
  %v885 = vadd.f32 0.0, %v884
  %v886 = vpop.f32.mrb[0].mxu0
  %887 = vmatprep.mubr.f32.mxu0 0.0
  %888 = vmatmul.mubr.f32.gmra.mrb[0].mxu0 %v779
  %v889 = vpop.f32.mrb[0].mxu0
  %v890 = vadd.f32 0.0, %v889
  %v891 = vpop.f32.mrb[0].mxu0
  %892 = vmatprep.mubr.f32.mxu0 0.0
  %893 = vmatmul.mubr.f32.gmra.mrb[0].mxu0 %v780
  %v894 = vpop.f32.mrb[0].mxu0
  %v895 = vadd.f32 0.0, %v894
  %v896 = vpop.f32.mrb[0].mxu0
  %897 = vmatprep.mubr.f32.mxu0 0.0
  %898 = vmatmul.mubr.f32.gmra.mrb[0].mxu0 %v781
  %v899 = vpop.f32.mrb[0].mxu0
  %v900 = vadd.f32 0.0, %v899
  %v901 = vpop.f32.mrb[0].mxu0
  %902 = vmatprep.mubr.f32.mxu0 0.0
  %903 = vmatmul.mubr.f32.gmra.mrb[0].mxu0 %v782
  %v904 = vpop.f32.mrb[0].mxu0
  %v905 = vadd.f32 0.0, %v904
  %v906 = vpop.f32.mrb[0].mxu0
  %907 = vmatprep.mubr.f32.mxu0 0.0
  %908 = vmatmul.mubr.f32.gmra.mrb[0].mxu0 %v783
  %v909 = vpop.f32.mrb[0].mxu0
  %v910 = vadd.f32 0.0, %v909
  %v911 = vpop.f32.mrb[0].mxu0
  %912 = vmatprep.mubr.f32.mxu0 0.0
  %913 = vmatmul.mubr.f32.gmra.mrb[0].mxu0 %v784
  %v914 = vpop.f32.mrb[0].mxu0
  %v915 = vadd.f32 0.0, %v914
  %v916 = vpop.f32.mrb[0].mxu0
  %917 = vmatprep.mubr.f32.mxu0 0.0
  %918 = vmatmul.mubr.f32.gmra.mrb[0].mxu0 %v785
  %v919 = vpop.f32.mrb[0].mxu0
  %v920 = vadd.f32 0.0, %v919
  %v921 = vpop.f32.mrb[0].mxu0
  %922 = vmatprep.mubr.f32.mxu0 0.0
  %923 = vmatmul.mubr.f32.gmra.mrb[0].mxu0 %v786
  %v924 = vpop.f32.mrb[0].mxu0
  %v925 = vadd.f32 0.0, %v924
  %v926 = vpop.f32.mrb[0].mxu0
  %927 = vmatprep.mubr.f32.mxu0 0.0
  %928 = vmatmul.mubr.f32.gmra.mrb[0].mxu0 %v787
  %v929 = vpop.f32.mrb[0].mxu0
  %v930 = vadd.f32 0.0, %v929
  %v931 = vpop.f32.mrb[0].mxu0
  %932 = vmatprep.mubr.f32.mxu0 0.0
  %933 = vmatmul.mubr.f32.gmra.mrb[0].mxu0 %v788
  %v934 = vpop.f32.mrb[0].mxu0
  %v935 = vadd.f32 0.0, %v934
  %v936 = vpop.f32.mrb[0].mxu0
  %937 = vmatprep.mubr.f32.mxu0 0.0
  %938 = vmatmul.mubr.f32.gmra.mrb[0].mxu0 %v789
  %v939 = vpop.f32.mrb[0].mxu0
  %v940 = vadd.f32 0.0, %v939
  %v941 = vpop.f32.mrb[0].mxu0
  %942 = vmatprep.mubr.f32.mxu0 0.0
  %943 = vmatmul.mubr.f32.gmra.mrb[0].mxu0 %v790
  %v944 = vpop.f32.mrb[0].mxu0
  %v945 = vadd.f32 0.0, %v944
  %v946 = vpop.f32.mrb[0].mxu0
  %947 = vmatprep.mubr.f32.mxu0 0.0
  %948 = vmatmul.mubr.f32.gmra.mrb[0].mxu0 %v791
  %v949 = vpop.f32.mrb[0].mxu0
  %v950 = vadd.f32 0.0, %v949
  %v951 = vpop.f32.mrb[0].mxu0
  %952 = vdwg.mxu0
  %v953 = vadd.f32 %v760, %v875
  %v954 = vadd.f32 %v761, %v880
  %v955 = vadd.f32 %v762, %v885
  %v956 = vadd.f32 %v763, %v890
  %v957 = vadd.f32 %v764, %v895
  %v958 = vadd.f32 %v765, %v900
  %v959 = vadd.f32 %v766, %v905
  %v960 = vadd.f32 %v767, %v910
  %v961 = vadd.f32 %v768, %v915
  %v962 = vadd.f32 %v769, %v920
  %v963 = vadd.f32 %v770, %v925
  %v964 = vadd.f32 %v771, %v930
  %v965 = vadd.f32 %v772, %v935
  %v966 = vadd.f32 %v773, %v940
  %v967 = vadd.f32 %v774, %v945
  %v968 = vadd.f32 %v775, %v950
  %v969 = vld [vmem:[%s180 + $0x1] sm:$0xff]
  %v970 = vld [vmem:[%s180 + $0x11] sm:$0xff]
  %v971 = vld [vmem:[%s180 + $0x21] sm:$0xff]
  %v972 = vld [vmem:[%s180 + $0x31] sm:$0xff]
  %v973 = vld [vmem:[%s180 + $0x41] sm:$0xff]
  %v974 = vld [vmem:[%s180 + $0x51] sm:$0xff]
  %v975 = vld [vmem:[%s180 + $0x61] sm:$0xff]
  %v976 = vld [vmem:[%s180 + $0x71] sm:$0xff]
  %v977 = vld [vmem:[%s180 + $0xa1] sm:$0xff]
  %v978 = vld [vmem:[%s180 + $0xb1] sm:$0xff]
  %v979 = vld [vmem:[%s180 + $0xc1] sm:$0xff]
  %v980 = vld [vmem:[%s180 + $0xd1] sm:$0xff]
  %v981 = vld [vmem:[%s180 + $0xe1] sm:$0xff]
  %v982 = vld [vmem:[%s180 + $0xf1] sm:$0xff]
  %v983 = vld [vmem:[%s180 + $0x101] sm:$0xff]
  %v984 = vld [vmem:[%s180 + $0x111] sm:$0xff]
  %v985 = vld [vmem:[%s1 + $0x200] sm:$0xff]
  %v986 = vld [vmem:[%s1 + $0x208] sm:$0xff]
  %v987 = vld [vmem:[%s1 + $0x210] sm:$0xff]
  %v988 = vld [vmem:[%s1 + $0x218] sm:$0xff]
  %v989 = vld [vmem:[%s1 + $0x220] sm:$0xff]
  %v990 = vld [vmem:[%s1 + $0x228] sm:$0xff]
  %v991 = vld [vmem:[%s1 + $0x230] sm:$0xff]
  %v992 = vld [vmem:[%s1 + $0x238] sm:$0xff]
  %v993 = vld [vmem:[%s1 + $0x240] sm:$0xff]
  %v994 = vld [vmem:[%s1 + $0x248] sm:$0xff]
  %v995 = vld [vmem:[%s1 + $0x250] sm:$0xff]
  %v996 = vld [vmem:[%s1 + $0x258] sm:$0xff]
  %v997 = vld [vmem:[%s1 + $0x260] sm:$0xff]
  %v998 = vld [vmem:[%s1 + $0x268] sm:$0xff]
  %v999 = vld [vmem:[%s1 + $0x270] sm:$0xff]
  %v1000 = vld [vmem:[%s1 + $0x278] sm:$0xff]
  %1001 = vmatprep.subr.mxu0 0.0
  %1002 = vmatpush1.msra.mxu0 %v985
  %1003 = vmatprep.subr.mxu0 0.0
  %1004 = vmatpush1.msra.mxu0 %v986
  %1005 = vmatprep.subr.mxu0 0.0
  %1006 = vmatpush1.msra.mxu0 %v987
  %1007 = vmatprep.subr.mxu0 0.0
  %1008 = vmatpush1.msra.mxu0 %v988
  %1009 = vmatprep.subr.mxu0 0.0
  %1010 = vmatpush1.msra.mxu0 %v989
  %1011 = vmatprep.subr.mxu0 0.0
  %1012 = vmatpush1.msra.mxu0 %v990
  %1013 = vmatprep.subr.mxu0 0.0
  %1014 = vmatpush1.msra.mxu0 %v991
  %1015 = vmatprep.subr.mxu0 0.0
  %1016 = vmatpush1.msra.mxu0 %v992
  %1017 = vmatprep.subr.mxu0 0.0
  %1018 = vmatpush1.msra.mxu0 %v993
  %1019 = vmatprep.subr.mxu0 0.0
  %1020 = vmatpush1.msra.mxu0 %v994
  %1021 = vmatprep.subr.mxu0 0.0
  %1022 = vmatpush1.msra.mxu0 %v995
  %1023 = vmatprep.subr.mxu0 0.0
  %1024 = vmatpush1.msra.mxu0 %v996
  %1025 = vmatprep.subr.mxu0 0.0
  %1026 = vmatpush1.msra.mxu0 %v997
  %1027 = vmatprep.subr.mxu0 0.0
  %1028 = vmatpush1.msra.mxu0 %v998
  %1029 = vmatprep.subr.mxu0 0.0
  %1030 = vmatpush1.msra.mxu0 %v999
  %1031 = vmatprep.subr.mxu0 0.0
  %1032 = vmatpush1.msra.mxu0 %v1000
  %1033 = vmatprep.subr.mxu0 0.0
  %1034 = vmatpush1.msra.mxu0 0.0
  %1035 = vmatprep.subr.mxu0 0.0
  %1036 = vmatpush1.msra.mxu0 0.0
  %1037 = vmatprep.subr.mxu0 0.0
  %1038 = vmatpush1.msra.mxu0 0.0
  %1039 = vmatprep.subr.mxu0 0.0
  %1040 = vmatpush1.msra.mxu0 0.0
  %1041 = vmatprep.subr.mxu0 0.0
  %1042 = vmatpush1.msra.mxu0 0.0
  %1043 = vmatprep.subr.mxu0 0.0
  %1044 = vmatpush1.msra.mxu0 0.0
  %1045 = vmatprep.subr.mxu0 0.0
  %1046 = vmatpush1.msra.mxu0 0.0
  %1047 = vmatprep.subr.mxu0 0.0
  %1048 = vmatpush1.msra.mxu0 0.0
  %1049 = vmatprep.subr.mxu0 0.0
  %1050 = vmatpush1.msra.mxu0 0.0
  %1051 = vmatprep.subr.mxu0 0.0
  %1052 = vmatpush1.msra.mxu0 0.0
  %1053 = vmatprep.subr.mxu0 0.0
  %1054 = vmatpush1.msra.mxu0 0.0
  %1055 = vmatprep.subr.mxu0 0.0
  %1056 = vmatpush1.msra.mxu0 0.0
  %1057 = vmatprep.subr.mxu0 0.0
  %1058 = vmatpush1.msra.mxu0 0.0
  %1059 = vmatprep.subr.mxu0 0.0
  %1060 = vmatpush1.msra.mxu0 0.0
  %1061 = vmatprep.subr.mxu0 0.0
  %1062 = vmatpush1.msra.mxu0 0.0
  %1063 = vmatprep.subr.mxu0 0.0
  %1064 = vmatpush1.msra.mxu0 0.0
  %1065 = vmatprep.mubr.f32.mxu0 0.0
  %1066 = vmatmul.mubr.f32.gmra.mrb[0].mxu0 %v969
  %v1067 = vpop.f32.mrb[0].mxu0
  %v1068 = vadd.f32 0.0, %v1067
  %v1069 = vpop.f32.mrb[0].mxu0
  %1070 = vmatprep.mubr.f32.mxu0 0.0
  %1071 = vmatmul.mubr.f32.gmra.mrb[0].mxu0 %v970
  %v1072 = vpop.f32.mrb[0].mxu0
  %v1073 = vadd.f32 0.0, %v1072
  %v1074 = vpop.f32.mrb[0].mxu0
  %1075 = vmatprep.mubr.f32.mxu0 0.0
  %1076 = vmatmul.mubr.f32.gmra.mrb[0].mxu0 %v971
  %v1077 = vpop.f32.mrb[0].mxu0
  %v1078 = vadd.f32 0.0, %v1077
  %v1079 = vpop.f32.mrb[0].mxu0
  %1080 = vmatprep.mubr.f32.mxu0 0.0
  %1081 = vmatmul.mubr.f32.gmra.mrb[0].mxu0 %v972
  %v1082 = vpop.f32.mrb[0].mxu0
  %v1083 = vadd.f32 0.0, %v1082
  %v1084 = vpop.f32.mrb[0].mxu0
  %1085 = vmatprep.mubr.f32.mxu0 0.0
  %1086 = vmatmul.mubr.f32.gmra.mrb[0].mxu0 %v973
  %v1087 = vpop.f32.mrb[0].mxu0
  %v1088 = vadd.f32 0.0, %v1087
  %v1089 = vpop.f32.mrb[0].mxu0
  %1090 = vmatprep.mubr.f32.mxu0 0.0
  %1091 = vmatmul.mubr.f32.gmra.mrb[0].mxu0 %v974
  %v1092 = vpop.f32.mrb[0].mxu0
  %v1093 = vadd.f32 0.0, %v1092
  %v1094 = vpop.f32.mrb[0].mxu0
  %1095 = vmatprep.mubr.f32.mxu0 0.0
  %1096 = vmatmul.mubr.f32.gmra.mrb[0].mxu0 %v975
  %v1097 = vpop.f32.mrb[0].mxu0
  %v1098 = vadd.f32 0.0, %v1097
  %v1099 = vpop.f32.mrb[0].mxu0
  %1100 = vmatprep.mubr.f32.mxu0 0.0
  %1101 = vmatmul.mubr.f32.gmra.mrb[0].mxu0 %v976
  %v1102 = vpop.f32.mrb[0].mxu0
  %v1103 = vadd.f32 0.0, %v1102
  %v1104 = vpop.f32.mrb[0].mxu0
  %1105 = vmatprep.mubr.f32.mxu0 0.0
  %1106 = vmatmul.mubr.f32.gmra.mrb[0].mxu0 %v977
  %v1107 = vpop.f32.mrb[0].mxu0
  %v1108 = vadd.f32 0.0, %v1107
  %v1109 = vpop.f32.mrb[0].mxu0
  %1110 = vmatprep.mubr.f32.mxu0 0.0
  %1111 = vmatmul.mubr.f32.gmra.mrb[0].mxu0 %v978
  %v1112 = vpop.f32.mrb[0].mxu0
  %v1113 = vadd.f32 0.0, %v1112
  %v1114 = vpop.f32.mrb[0].mxu0
  %1115 = vmatprep.mubr.f32.mxu0 0.0
  %1116 = vmatmul.mubr.f32.gmra.mrb[0].mxu0 %v979
  %v1117 = vpop.f32.mrb[0].mxu0
  %v1118 = vadd.f32 0.0, %v1117
  %v1119 = vpop.f32.mrb[0].mxu0
  %1120 = vmatprep.mubr.f32.mxu0 0.0
  %1121 = vmatmul.mubr.f32.gmra.mrb[0].mxu0 %v980
  %v1122 = vpop.f32.mrb[0].mxu0
  %v1123 = vadd.f32 0.0, %v1122
  %v1124 = vpop.f32.mrb[0].mxu0
  %1125 = vmatprep.mubr.f32.mxu0 0.0
  %1126 = vmatmul.mubr.f32.gmra.mrb[0].mxu0 %v981
  %v1127 = vpop.f32.mrb[0].mxu0
  %v1128 = vadd.f32 0.0, %v1127
  %v1129 = vpop.f32.mrb[0].mxu0
  %1130 = vmatprep.mubr.f32.mxu0 0.0
  %1131 = vmatmul.mubr.f32.gmra.mrb[0].mxu0 %v982
  %v1132 = vpop.f32.mrb[0].mxu0
  %v1133 = vadd.f32 0.0, %v1132
  %v1134 = vpop.f32.mrb[0].mxu0
  %1135 = vmatprep.mubr.f32.mxu0 0.0
  %1136 = vmatmul.mubr.f32.gmra.mrb[0].mxu0 %v983
  %v1137 = vpop.f32.mrb[0].mxu0
  %v1138 = vadd.f32 0.0, %v1137
  %v1139 = vpop.f32.mrb[0].mxu0
  %1140 = vmatprep.mubr.f32.mxu0 0.0
  %1141 = vmatmul.mubr.f32.gmra.mrb[0].mxu0 %v984
  %v1142 = vpop.f32.mrb[0].mxu0
  %v1143 = vadd.f32 0.0, %v1142
  %v1144 = vpop.f32.mrb[0].mxu0
  %1145 = vdwg.mxu0
  %v1146 = vadd.f32 %v953, %v1068
  %v1147 = vadd.f32 %v954, %v1073
  %v1148 = vadd.f32 %v955, %v1078
  %v1149 = vadd.f32 %v956, %v1083
  %v1150 = vadd.f32 %v957, %v1088
  %v1151 = vadd.f32 %v958, %v1093
  %v1152 = vadd.f32 %v959, %v1098
  %v1153 = vadd.f32 %v960, %v1103
  %v1154 = vadd.f32 %v961, %v1108
  %v1155 = vadd.f32 %v962, %v1113
  %v1156 = vadd.f32 %v963, %v1118
  %v1157 = vadd.f32 %v964, %v1123
  %v1158 = vadd.f32 %v965, %v1128
  %v1159 = vadd.f32 %v966, %v1133
  %v1160 = vadd.f32 %v967, %v1138
  %v1161 = vadd.f32 %v968, %v1143
  %v1162 = vld [vmem:[%s180 + $0x2] sm:$0xff]
  %v1163 = vld [vmem:[%s180 + $0x12] sm:$0xff]
  %v1164 = vld [vmem:[%s180 + $0x22] sm:$0xff]
  %v1165 = vld [vmem:[%s180 + $0x32] sm:$0xff]
  %v1166 = vld [vmem:[%s180 + $0x42] sm:$0xff]
  %v1167 = vld [vmem:[%s180 + $0x52] sm:$0xff]
  %v1168 = vld [vmem:[%s180 + $0x62] sm:$0xff]
  %v1169 = vld [vmem:[%s180 + $0x72] sm:$0xff]
  %v1170 = vld [vmem:[%s180 + $0xa2] sm:$0xff]
  %v1171 = vld [vmem:[%s180 + $0xb2] sm:$0xff]
  %v1172 = vld [vmem:[%s180 + $0xc2] sm:$0xff]
  %v1173 = vld [vmem:[%s180 + $0xd2] sm:$0xff]
  %v1174 = vld [vmem:[%s180 + $0xe2] sm:$0xff]
  %v1175 = vld [vmem:[%s180 + $0xf2] sm:$0xff]
  %v1176 = vld [vmem:[%s180 + $0x102] sm:$0xff]
  %v1177 = vld [vmem:[%s180 + $0x112] sm:$0xff]
  %v1178 = vld [vmem:[%s1 + $0x280] sm:$0xff]
  %v1179 = vld [vmem:[%s1 + $0x288] sm:$0xff]
  %v1180 = vld [vmem:[%s1 + $0x290] sm:$0xff]
  %v1181 = vld [vmem:[%s1 + $0x298] sm:$0xff]
  %v1182 = vld [vmem:[%s1 + $0x2a0] sm:$0xff]
  %v1183 = vld [vmem:[%s1 + $0x2a8] sm:$0xff]
  %v1184 = vld [vmem:[%s1 + $0x2b0] sm:$0xff]
  %v1185 = vld [vmem:[%s1 + $0x2b8] sm:$0xff]
  %v1186 = vld [vmem:[%s1 + $0x2c0] sm:$0xff]
  %v1187 = vld [vmem:[%s1 + $0x2c8] sm:$0xff]
  %v1188 = vld [vmem:[%s1 + $0x2d0] sm:$0xff]
  %v1189 = vld [vmem:[%s1 + $0x2d8] sm:$0xff]
  %v1190 = vld [vmem:[%s1 + $0x2e0] sm:$0xff]
  %v1191 = vld [vmem:[%s1 + $0x2e8] sm:$0xff]
  %v1192 = vld [vmem:[%s1 + $0x2f0] sm:$0xff]
  %v1193 = vld [vmem:[%s1 + $0x2f8] sm:$0xff]
  %1194 = vmatprep.subr.mxu0 0.0
  %1195 = vmatpush1.msra.mxu0 %v1178
  %1196 = vmatprep.subr.mxu0 0.0
  %1197 = vmatpush1.msra.mxu0 %v1179
  %1198 = vmatprep.subr.mxu0 0.0
  %1199 = vmatpush1.msra.mxu0 %v1180
  %1200 = vmatprep.subr.mxu0 0.0
  %1201 = vmatpush1.msra.mxu0 %v1181
  %1202 = vmatprep.subr.mxu0 0.0
  %1203 = vmatpush1.msra.mxu0 %v1182
  %1204 = vmatprep.subr.mxu0 0.0
  %1205 = vmatpush1.msra.mxu0 %v1183
  %1206 = vmatprep.subr.mxu0 0.0
  %1207 = vmatpush1.msra.mxu0 %v1184
  %1208 = vmatprep.subr.mxu0 0.0
  %1209 = vmatpush1.msra.mxu0 %v1185
  %1210 = vmatprep.subr.mxu0 0.0
  %1211 = vmatpush1.msra.mxu0 %v1186
  %1212 = vmatprep.subr.mxu0 0.0
  %1213 = vmatpush1.msra.mxu0 %v1187
  %1214 = vmatprep.subr.mxu0 0.0
  %1215 = vmatpush1.msra.mxu0 %v1188
  %1216 = vmatprep.subr.mxu0 0.0
  %1217 = vmatpush1.msra.mxu0 %v1189
  %1218 = vmatprep.subr.mxu0 0.0
  %1219 = vmatpush1.msra.mxu0 %v1190
  %1220 = vmatprep.subr.mxu0 0.0
  %1221 = vmatpush1.msra.mxu0 %v1191
  %1222 = vmatprep.subr.mxu0 0.0
  %1223 = vmatpush1.msra.mxu0 %v1192
  %1224 = vmatprep.subr.mxu0 0.0
  %1225 = vmatpush1.msra.mxu0 %v1193
  %1226 = vmatprep.subr.mxu0 0.0
  %1227 = vmatpush1.msra.mxu0 0.0
  %1228 = vmatprep.subr.mxu0 0.0
  %1229 = vmatpush1.msra.mxu0 0.0
  %1230 = vmatprep.subr.mxu0 0.0
  %1231 = vmatpush1.msra.mxu0 0.0
  %1232 = vmatprep.subr.mxu0 0.0
  %1233 = vmatpush1.msra.mxu0 0.0
  %1234 = vmatprep.subr.mxu0 0.0
  %1235 = vmatpush1.msra.mxu0 0.0
  %1236 = vmatprep.subr.mxu0 0.0
  %1237 = vmatpush1.msra.mxu0 0.0
  %1238 = vmatprep.subr.mxu0 0.0
  %1239 = vmatpush1.msra.mxu0 0.0
  %1240 = vmatprep.subr.mxu0 0.0
  %1241 = vmatpush1.msra.mxu0 0.0
  %1242 = vmatprep.subr.mxu0 0.0
  %1243 = vmatpush1.msra.mxu0 0.0
  %1244 = vmatprep.subr.mxu0 0.0
  %1245 = vmatpush1.msra.mxu0 0.0
  %1246 = vmatprep.subr.mxu0 0.0
  %1247 = vmatpush1.msra.mxu0 0.0
  %1248 = vmatprep.subr.mxu0 0.0
  %1249 = vmatpush1.msra.mxu0 0.0
  %1250 = vmatprep.subr.mxu0 0.0
  %1251 = vmatpush1.msra.mxu0 0.0
  %1252 = vmatprep.subr.mxu0 0.0
  %1253 = vmatpush1.msra.mxu0 0.0
  %1254 = vmatprep.subr.mxu0 0.0
  %1255 = vmatpush1.msra.mxu0 0.0
  %1256 = vmatprep.subr.mxu0 0.0
  %1257 = vmatpush1.msra.mxu0 0.0
  %1258 = vmatprep.mubr.f32.mxu0 0.0
  %1259 = vmatmul.mubr.f32.gmra.mrb[0].mxu0 %v1162
  %v1260 = vpop.f32.mrb[0].mxu0
  %v1261 = vadd.f32 0.0, %v1260
  %v1262 = vpop.f32.mrb[0].mxu0
  %1263 = vmatprep.mubr.f32.mxu0 0.0
  %1264 = vmatmul.mubr.f32.gmra.mrb[0].mxu0 %v1163
  %v1265 = vpop.f32.mrb[0].mxu0
  %v1266 = vadd.f32 0.0, %v1265
  %v1267 = vpop.f32.mrb[0].mxu0
  %1268 = vmatprep.mubr.f32.mxu0 0.0
  %1269 = vmatmul.mubr.f32.gmra.mrb[0].mxu0 %v1164
  %v1270 = vpop.f32.mrb[0].mxu0
  %v1271 = vadd.f32 0.0, %v1270
  %v1272 = vpop.f32.mrb[0].mxu0
  %1273 = vmatprep.mubr.f32.mxu0 0.0
  %1274 = vmatmul.mubr.f32.gmra.mrb[0].mxu0 %v1165
  %v1275 = vpop.f32.mrb[0].mxu0
  %v1276 = vadd.f32 0.0, %v1275
  %v1277 = vpop.f32.mrb[0].mxu0
  %1278 = vmatprep.mubr.f32.mxu0 0.0
  %1279 = vmatmul.mubr.f32.gmra.mrb[0].mxu0 %v1166
  %v1280 = vpop.f32.mrb[0].mxu0
  %v1281 = vadd.f32 0.0, %v1280
  %v1282 = vpop.f32.mrb[0].mxu0
  %1283 = vmatprep.mubr.f32.mxu0 0.0
  %1284 = vmatmul.mubr.f32.gmra.mrb[0].mxu0 %v1167
  %v1285 = vpop.f32.mrb[0].mxu0
  %v1286 = vadd.f32 0.0, %v1285
  %v1287 = vpop.f32.mrb[0].mxu0
  %1288 = vmatprep.mubr.f32.mxu0 0.0
  %1289 = vmatmul.mubr.f32.gmra.mrb[0].mxu0 %v1168
  %v1290 = vpop.f32.mrb[0].mxu0
  %v1291 = vadd.f32 0.0, %v1290
  %v1292 = vpop.f32.mrb[0].mxu0
  %1293 = vmatprep.mubr.f32.mxu0 0.0
  %1294 = vmatmul.mubr.f32.gmra.mrb[0].mxu0 %v1169
  %v1295 = vpop.f32.mrb[0].mxu0
  %v1296 = vadd.f32 0.0, %v1295
  %v1297 = vpop.f32.mrb[0].mxu0
  %1298 = vmatprep.mubr.f32.mxu0 0.0
  %1299 = vmatmul.mubr.f32.gmra.mrb[0].mxu0 %v1170
  %v1300 = vpop.f32.mrb[0].mxu0
  %v1301 = vadd.f32 0.0, %v1300
  %v1302 = vpop.f32.mrb[0].mxu0
  %1303 = vmatprep.mubr.f32.mxu0 0.0
  %1304 = vmatmul.mubr.f32.gmra.mrb[0].mxu0 %v1171
  %v1305 = vpop.f32.mrb[0].mxu0
  %v1306 = vadd.f32 0.0, %v1305
  %v1307 = vpop.f32.mrb[0].mxu0
  %1308 = vmatprep.mubr.f32.mxu0 0.0
  %1309 = vmatmul.mubr.f32.gmra.mrb[0].mxu0 %v1172
  %v1310 = vpop.f32.mrb[0].mxu0
  %v1311 = vadd.f32 0.0, %v1310
  %v1312 = vpop.f32.mrb[0].mxu0
  %1313 = vmatprep.mubr.f32.mxu0 0.0
  %1314 = vmatmul.mubr.f32.gmra.mrb[0].mxu0 %v1173
  %v1315 = vpop.f32.mrb[0].mxu0
  %v1316 = vadd.f32 0.0, %v1315
  %v1317 = vpop.f32.mrb[0].mxu0
  %1318 = vmatprep.mubr.f32.mxu0 0.0
  %1319 = vmatmul.mubr.f32.gmra.mrb[0].mxu0 %v1174
  %v1320 = vpop.f32.mrb[0].mxu0
  %v1321 = vadd.f32 0.0, %v1320
  %v1322 = vpop.f32.mrb[0].mxu0
  %1323 = vmatprep.mubr.f32.mxu0 0.0
  %1324 = vmatmul.mubr.f32.gmra.mrb[0].mxu0 %v1175
  %v1325 = vpop.f32.mrb[0].mxu0
  %v1326 = vadd.f32 0.0, %v1325
  %v1327 = vpop.f32.mrb[0].mxu0
  %1328 = vmatprep.mubr.f32.mxu0 0.0
  %1329 = vmatmul.mubr.f32.gmra.mrb[0].mxu0 %v1176
  %v1330 = vpop.f32.mrb[0].mxu0
  %v1331 = vadd.f32 0.0, %v1330
  %v1332 = vpop.f32.mrb[0].mxu0
  %1333 = vmatprep.mubr.f32.mxu0 0.0
  %1334 = vmatmul.mubr.f32.gmra.mrb[0].mxu0 %v1177
  %v1335 = vpop.f32.mrb[0].mxu0
  %v1336 = vadd.f32 0.0, %v1335
  %v1337 = vpop.f32.mrb[0].mxu0
  %1338 = vdwg.mxu0
  %v1339 = vadd.f32 %v1146, %v1261
  %v1340 = vadd.f32 %v1147, %v1266
  %v1341 = vadd.f32 %v1148, %v1271
  %v1342 = vadd.f32 %v1149, %v1276
  %v1343 = vadd.f32 %v1150, %v1281
  %v1344 = vadd.f32 %v1151, %v1286
  %v1345 = vadd.f32 %v1152, %v1291
  %v1346 = vadd.f32 %v1153, %v1296
  %v1347 = vadd.f32 %v1154, %v1301
  %v1348 = vadd.f32 %v1155, %v1306
  %v1349 = vadd.f32 %v1156, %v1311
  %v1350 = vadd.f32 %v1157, %v1316
  %v1351 = vadd.f32 %v1158, %v1321
  %v1352 = vadd.f32 %v1159, %v1326
  %v1353 = vadd.f32 %v1160, %v1331
  %v1354 = vadd.f32 %v1161, %v1336
  %s1355 = scalar_lea.vmem [#allocation2], 32
  %v1356 = vld [vmem:[%s1355] sm:$0xff]
  %v1357 = vld [vmem:[%s1355 + $0x10] sm:$0xff]
  %v1358 = vld [vmem:[%s1355 + $0x20] sm:$0xff]
  %v1359 = vld [vmem:[%s1355 + $0x30] sm:$0xff]
  %v1360 = vld [vmem:[%s1355 + $0x40] sm:$0xff]
  %v1361 = vld [vmem:[%s1355 + $0x50] sm:$0xff]
  %v1362 = vld [vmem:[%s1355 + $0x60] sm:$0xff]
  %v1363 = vld [vmem:[%s1355 + $0x70] sm:$0xff]
  %v1364 = vld [vmem:[%s1355 + $0xa0] sm:$0xff]
  %v1365 = vld [vmem:[%s1355 + $0xb0] sm:$0xff]
  %v1366 = vld [vmem:[%s1355 + $0xc0] sm:$0xff]
  %v1367 = vld [vmem:[%s1355 + $0xd0] sm:$0xff]
  %v1368 = vld [vmem:[%s1355 + $0xe0] sm:$0xff]
  %v1369 = vld [vmem:[%s1355 + $0xf0] sm:$0xff]
  %v1370 = vld [vmem:[%s1355 + $0x100] sm:$0xff]
  %v1371 = vld [vmem:[%s1355 + $0x110] sm:$0xff]
  %v1372 = vld [vmem:[%s1 + $0x300] sm:$0xff]
  %v1373 = vld [vmem:[%s1 + $0x308] sm:$0xff]
  %v1374 = vld [vmem:[%s1 + $0x310] sm:$0xff]
  %v1375 = vld [vmem:[%s1 + $0x318] sm:$0xff]
  %v1376 = vld [vmem:[%s1 + $0x320] sm:$0xff]
  %v1377 = vld [vmem:[%s1 + $0x328] sm:$0xff]
  %v1378 = vld [vmem:[%s1 + $0x330] sm:$0xff]
  %v1379 = vld [vmem:[%s1 + $0x338] sm:$0xff]
  %v1380 = vld [vmem:[%s1 + $0x340] sm:$0xff]
  %v1381 = vld [vmem:[%s1 + $0x348] sm:$0xff]
  %v1382 = vld [vmem:[%s1 + $0x350] sm:$0xff]
  %v1383 = vld [vmem:[%s1 + $0x358] sm:$0xff]
  %v1384 = vld [vmem:[%s1 + $0x360] sm:$0xff]
  %v1385 = vld [vmem:[%s1 + $0x368] sm:$0xff]
  %v1386 = vld [vmem:[%s1 + $0x370] sm:$0xff]
  %v1387 = vld [vmem:[%s1 + $0x378] sm:$0xff]
  %1388 = vmatprep.subr.mxu0 0.0
  %1389 = vmatpush1.msra.mxu0 %v1372
  %1390 = vmatprep.subr.mxu0 0.0
  %1391 = vmatpush1.msra.mxu0 %v1373
  %1392 = vmatprep.subr.mxu0 0.0
  %1393 = vmatpush1.msra.mxu0 %v1374
  %1394 = vmatprep.subr.mxu0 0.0
  %1395 = vmatpush1.msra.mxu0 %v1375
  %1396 = vmatprep.subr.mxu0 0.0
  %1397 = vmatpush1.msra.mxu0 %v1376
  %1398 = vmatprep.subr.mxu0 0.0
  %1399 = vmatpush1.msra.mxu0 %v1377
  %1400 = vmatprep.subr.mxu0 0.0
  %1401 = vmatpush1.msra.mxu0 %v1378
  %1402 = vmatprep.subr.mxu0 0.0
  %1403 = vmatpush1.msra.mxu0 %v1379
  %1404 = vmatprep.subr.mxu0 0.0
  %1405 = vmatpush1.msra.mxu0 %v1380
  %1406 = vmatprep.subr.mxu0 0.0
  %1407 = vmatpush1.msra.mxu0 %v1381
  %1408 = vmatprep.subr.mxu0 0.0
  %1409 = vmatpush1.msra.mxu0 %v1382
  %1410 = vmatprep.subr.mxu0 0.0
  %1411 = vmatpush1.msra.mxu0 %v1383
  %1412 = vmatprep.subr.mxu0 0.0
  %1413 = vmatpush1.msra.mxu0 %v1384
  %1414 = vmatprep.subr.mxu0 0.0
  %1415 = vmatpush1.msra.mxu0 %v1385
  %1416 = vmatprep.subr.mxu0 0.0
  %1417 = vmatpush1.msra.mxu0 %v1386
  %1418 = vmatprep.subr.mxu0 0.0
  %1419 = vmatpush1.msra.mxu0 %v1387
  %1420 = vmatprep.subr.mxu0 0.0
  %1421 = vmatpush1.msra.mxu0 0.0
  %1422 = vmatprep.subr.mxu0 0.0
  %1423 = vmatpush1.msra.mxu0 0.0
  %1424 = vmatprep.subr.mxu0 0.0
  %1425 = vmatpush1.msra.mxu0 0.0
  %1426 = vmatprep.subr.mxu0 0.0
  %1427 = vmatpush1.msra.mxu0 0.0
  %1428 = vmatprep.subr.mxu0 0.0
  %1429 = vmatpush1.msra.mxu0 0.0
  %1430 = vmatprep.subr.mxu0 0.0
  %1431 = vmatpush1.msra.mxu0 0.0
  %1432 = vmatprep.subr.mxu0 0.0
  %1433 = vmatpush1.msra.mxu0 0.0
  %1434 = vmatprep.subr.mxu0 0.0
  %1435 = vmatpush1.msra.mxu0 0.0
  %1436 = vmatprep.subr.mxu0 0.0
  %1437 = vmatpush1.msra.mxu0 0.0
  %1438 = vmatprep.subr.mxu0 0.0
  %1439 = vmatpush1.msra.mxu0 0.0
  %1440 = vmatprep.subr.mxu0 0.0
  %1441 = vmatpush1.msra.mxu0 0.0
  %1442 = vmatprep.subr.mxu0 0.0
  %1443 = vmatpush1.msra.mxu0 0.0
  %1444 = vmatprep.subr.mxu0 0.0
  %1445 = vmatpush1.msra.mxu0 0.0
  %1446 = vmatprep.subr.mxu0 0.0
  %1447 = vmatpush1.msra.mxu0 0.0
  %1448 = vmatprep.subr.mxu0 0.0
  %1449 = vmatpush1.msra.mxu0 0.0
  %1450 = vmatprep.subr.mxu0 0.0
  %1451 = vmatpush1.msra.mxu0 0.0
  %1452 = vmatprep.mubr.f32.mxu0 0.0
  %1453 = vmatmul.mubr.f32.gmra.mrb[0].mxu0 %v1356
  %v1454 = vpop.f32.mrb[0].mxu0
  %v1455 = vadd.f32 0.0, %v1454
  %v1456 = vpop.f32.mrb[0].mxu0
  %1457 = vmatprep.mubr.f32.mxu0 0.0
  %1458 = vmatmul.mubr.f32.gmra.mrb[0].mxu0 %v1357
  %v1459 = vpop.f32.mrb[0].mxu0
  %v1460 = vadd.f32 0.0, %v1459
  %v1461 = vpop.f32.mrb[0].mxu0
  %1462 = vmatprep.mubr.f32.mxu0 0.0
  %1463 = vmatmul.mubr.f32.gmra.mrb[0].mxu0 %v1358
  %v1464 = vpop.f32.mrb[0].mxu0
  %v1465 = vadd.f32 0.0, %v1464
  %v1466 = vpop.f32.mrb[0].mxu0
  %1467 = vmatprep.mubr.f32.mxu0 0.0
  %1468 = vmatmul.mubr.f32.gmra.mrb[0].mxu0 %v1359
  %v1469 = vpop.f32.mrb[0].mxu0
  %v1470 = vadd.f32 0.0, %v1469
  %v1471 = vpop.f32.mrb[0].mxu0
  %1472 = vmatprep.mubr.f32.mxu0 0.0
  %1473 = vmatmul.mubr.f32.gmra.mrb[0].mxu0 %v1360
  %v1474 = vpop.f32.mrb[0].mxu0
  %v1475 = vadd.f32 0.0, %v1474
  %v1476 = vpop.f32.mrb[0].mxu0
  %1477 = vmatprep.mubr.f32.mxu0 0.0
  %1478 = vmatmul.mubr.f32.gmra.mrb[0].mxu0 %v1361
  %v1479 = vpop.f32.mrb[0].mxu0
  %v1480 = vadd.f32 0.0, %v1479
  %v1481 = vpop.f32.mrb[0].mxu0
  %1482 = vmatprep.mubr.f32.mxu0 0.0
  %1483 = vmatmul.mubr.f32.gmra.mrb[0].mxu0 %v1362
  %v1484 = vpop.f32.mrb[0].mxu0
  %v1485 = vadd.f32 0.0, %v1484
  %v1486 = vpop.f32.mrb[0].mxu0
  %1487 = vmatprep.mubr.f32.mxu0 0.0
  %1488 = vmatmul.mubr.f32.gmra.mrb[0].mxu0 %v1363
  %v1489 = vpop.f32.mrb[0].mxu0
  %v1490 = vadd.f32 0.0, %v1489
  %v1491 = vpop.f32.mrb[0].mxu0
  %1492 = vmatprep.mubr.f32.mxu0 0.0
  %1493 = vmatmul.mubr.f32.gmra.mrb[0].mxu0 %v1364
  %v1494 = vpop.f32.mrb[0].mxu0
  %v1495 = vadd.f32 0.0, %v1494
  %v1496 = vpop.f32.mrb[0].mxu0
  %1497 = vmatprep.mubr.f32.mxu0 0.0
  %1498 = vmatmul.mubr.f32.gmra.mrb[0].mxu0 %v1365
  %v1499 = vpop.f32.mrb[0].mxu0
  %v1500 = vadd.f32 0.0, %v1499
  %v1501 = vpop.f32.mrb[0].mxu0
  %1502 = vmatprep.mubr.f32.mxu0 0.0
  %1503 = vmatmul.mubr.f32.gmra.mrb[0].mxu0 %v1366
  %v1504 = vpop.f32.mrb[0].mxu0
  %v1505 = vadd.f32 0.0, %v1504
  %v1506 = vpop.f32.mrb[0].mxu0
  %1507 = vmatprep.mubr.f32.mxu0 0.0
  %1508 = vmatmul.mubr.f32.gmra.mrb[0].mxu0 %v1367
  %v1509 = vpop.f32.mrb[0].mxu0
  %v1510 = vadd.f32 0.0, %v1509
  %v1511 = vpop.f32.mrb[0].mxu0
  %1512 = vmatprep.mubr.f32.mxu0 0.0
  %1513 = vmatmul.mubr.f32.gmra.mrb[0].mxu0 %v1368
  %v1514 = vpop.f32.mrb[0].mxu0
  %v1515 = vadd.f32 0.0, %v1514
  %v1516 = vpop.f32.mrb[0].mxu0
  %1517 = vmatprep.mubr.f32.mxu0 0.0
  %1518 = vmatmul.mubr.f32.gmra.mrb[0].mxu0 %v1369
  %v1519 = vpop.f32.mrb[0].mxu0
  %v1520 = vadd.f32 0.0, %v1519
  %v1521 = vpop.f32.mrb[0].mxu0
  %1522 = vmatprep.mubr.f32.mxu0 0.0
  %1523 = vmatmul.mubr.f32.gmra.mrb[0].mxu0 %v1370
  %v1524 = vpop.f32.mrb[0].mxu0
  %v1525 = vadd.f32 0.0, %v1524
  %v1526 = vpop.f32.mrb[0].mxu0
  %1527 = vmatprep.mubr.f32.mxu0 0.0
  %1528 = vmatmul.mubr.f32.gmra.mrb[0].mxu0 %v1371
  %v1529 = vpop.f32.mrb[0].mxu0
  %v1530 = vadd.f32 0.0, %v1529
  %v1531 = vpop.f32.mrb[0].mxu0
  %1532 = vdwg.mxu0
  %v1533 = vadd.f32 %v1339, %v1455
  %v1534 = vadd.f32 %v1340, %v1460
  %v1535 = vadd.f32 %v1341, %v1465
  %v1536 = vadd.f32 %v1342, %v1470
  %v1537 = vadd.f32 %v1343, %v1475
  %v1538 = vadd.f32 %v1344, %v1480
  %v1539 = vadd.f32 %v1345, %v1485
  %v1540 = vadd.f32 %v1346, %v1490
  %v1541 = vadd.f32 %v1347, %v1495
  %v1542 = vadd.f32 %v1348, %v1500
  %v1543 = vadd.f32 %v1349, %v1505
  %v1544 = vadd.f32 %v1350, %v1510
  %v1545 = vadd.f32 %v1351, %v1515
  %v1546 = vadd.f32 %v1352, %v1520
  %v1547 = vadd.f32 %v1353, %v1525
  %v1548 = vadd.f32 %v1354, %v1530
  %v1549 = vld [vmem:[%s1355 + $0x1] sm:$0xff]
  %v1550 = vld [vmem:[%s1355 + $0x11] sm:$0xff]
  %v1551 = vld [vmem:[%s1355 + $0x21] sm:$0xff]
  %v1552 = vld [vmem:[%s1355 + $0x31] sm:$0xff]
  %v1553 = vld [vmem:[%s1355 + $0x41] sm:$0xff]
  %v1554 = vld [vmem:[%s1355 + $0x51] sm:$0xff]
  %v1555 = vld [vmem:[%s1355 + $0x61] sm:$0xff]
  %v1556 = vld [vmem:[%s1355 + $0x71] sm:$0xff]
  %v1557 = vld [vmem:[%s1355 + $0xa1] sm:$0xff]
  %v1558 = vld [vmem:[%s1355 + $0xb1] sm:$0xff]
  %v1559 = vld [vmem:[%s1355 + $0xc1] sm:$0xff]
  %v1560 = vld [vmem:[%s1355 + $0xd1] sm:$0xff]
  %v1561 = vld [vmem:[%s1355 + $0xe1] sm:$0xff]
  %v1562 = vld [vmem:[%s1355 + $0xf1] sm:$0xff]
  %v1563 = vld [vmem:[%s1355 + $0x101] sm:$0xff]
  %v1564 = vld [vmem:[%s1355 + $0x111] sm:$0xff]
  %v1565 = vld [vmem:[%s1 + $0x380] sm:$0xff]
  %v1566 = vld [vmem:[%s1 + $0x388] sm:$0xff]
  %v1567 = vld [vmem:[%s1 + $0x390] sm:$0xff]
  %v1568 = vld [vmem:[%s1 + $0x398] sm:$0xff]
  %v1569 = vld [vmem:[%s1 + $0x3a0] sm:$0xff]
  %v1570 = vld [vmem:[%s1 + $0x3a8] sm:$0xff]
  %v1571 = vld [vmem:[%s1 + $0x3b0] sm:$0xff]
  %v1572 = vld [vmem:[%s1 + $0x3b8] sm:$0xff]
  %v1573 = vld [vmem:[%s1 + $0x3c0] sm:$0xff]
  %v1574 = vld [vmem:[%s1 + $0x3c8] sm:$0xff]
  %v1575 = vld [vmem:[%s1 + $0x3d0] sm:$0xff]
  %v1576 = vld [vmem:[%s1 + $0x3d8] sm:$0xff]
  %v1577 = vld [vmem:[%s1 + $0x3e0] sm:$0xff]
  %v1578 = vld [vmem:[%s1 + $0x3e8] sm:$0xff]
  %v1579 = vld [vmem:[%s1 + $0x3f0] sm:$0xff]
  %v1580 = vld [vmem:[%s1 + $0x3f8] sm:$0xff]
  %1581 = vmatprep.subr.mxu0 0.0
  %1582 = vmatpush1.msra.mxu0 %v1565
  %1583 = vmatprep.subr.mxu0 0.0
  %1584 = vmatpush1.msra.mxu0 %v1566
  %1585 = vmatprep.subr.mxu0 0.0
  %1586 = vmatpush1.msra.mxu0 %v1567
  %1587 = vmatprep.subr.mxu0 0.0
  %1588 = vmatpush1.msra.mxu0 %v1568
  %1589 = vmatprep.subr.mxu0 0.0
  %1590 = vmatpush1.msra.mxu0 %v1569
  %1591 = vmatprep.subr.mxu0 0.0
  %1592 = vmatpush1.msra.mxu0 %v1570
  %1593 = vmatprep.subr.mxu0 0.0
  %1594 = vmatpush1.msra.mxu0 %v1571
  %1595 = vmatprep.subr.mxu0 0.0
  %1596 = vmatpush1.msra.mxu0 %v1572
  %1597 = vmatprep.subr.mxu0 0.0
  %1598 = vmatpush1.msra.mxu0 %v1573
  %1599 = vmatprep.subr.mxu0 0.0
  %1600 = vmatpush1.msra.mxu0 %v1574
  %1601 = vmatprep.subr.mxu0 0.0
  %1602 = vmatpush1.msra.mxu0 %v1575
  %1603 = vmatprep.subr.mxu0 0.0
  %1604 = vmatpush1.msra.mxu0 %v1576
  %1605 = vmatprep.subr.mxu0 0.0
  %1606 = vmatpush1.msra.mxu0 %v1577
  %1607 = vmatprep.subr.mxu0 0.0
  %1608 = vmatpush1.msra.mxu0 %v1578
  %1609 = vmatprep.subr.mxu0 0.0
  %1610 = vmatpush1.msra.mxu0 %v1579
  %1611 = vmatprep.subr.mxu0 0.0
  %1612 = vmatpush1.msra.mxu0 %v1580
  %1613 = vmatprep.subr.mxu0 0.0
  %1614 = vmatpush1.msra.mxu0 0.0
  %1615 = vmatprep.subr.mxu0 0.0
  %1616 = vmatpush1.msra.mxu0 0.0
  %1617 = vmatprep.subr.mxu0 0.0
  %1618 = vmatpush1.msra.mxu0 0.0
  %1619 = vmatprep.subr.mxu0 0.0
  %1620 = vmatpush1.msra.mxu0 0.0
  %1621 = vmatprep.subr.mxu0 0.0
  %1622 = vmatpush1.msra.mxu0 0.0
  %1623 = vmatprep.subr.mxu0 0.0
  %1624 = vmatpush1.msra.mxu0 0.0
  %1625 = vmatprep.subr.mxu0 0.0
  %1626 = vmatpush1.msra.mxu0 0.0
  %1627 = vmatprep.subr.mxu0 0.0
  %1628 = vmatpush1.msra.mxu0 0.0
  %1629 = vmatprep.subr.mxu0 0.0
  %1630 = vmatpush1.msra.mxu0 0.0
  %1631 = vmatprep.subr.mxu0 0.0
  %1632 = vmatpush1.msra.mxu0 0.0
  %1633 = vmatprep.subr.mxu0 0.0
  %1634 = vmatpush1.msra.mxu0 0.0
  %1635 = vmatprep.subr.mxu0 0.0
  %1636 = vmatpush1.msra.mxu0 0.0
  %1637 = vmatprep.subr.mxu0 0.0
  %1638 = vmatpush1.msra.mxu0 0.0
  %1639 = vmatprep.subr.mxu0 0.0
  %1640 = vmatpush1.msra.mxu0 0.0
  %1641 = vmatprep.subr.mxu0 0.0
  %1642 = vmatpush1.msra.mxu0 0.0
  %1643 = vmatprep.subr.mxu0 0.0
  %1644 = vmatpush1.msra.mxu0 0.0
  %1645 = vmatprep.mubr.f32.mxu0 0.0
  %1646 = vmatmul.mubr.f32.gmra.mrb[0].mxu0 %v1549
  %v1647 = vpop.f32.mrb[0].mxu0
  %v1648 = vadd.f32 0.0, %v1647
  %v1649 = vpop.f32.mrb[0].mxu0
  %1650 = vmatprep.mubr.f32.mxu0 0.0
  %1651 = vmatmul.mubr.f32.gmra.mrb[0].mxu0 %v1550
  %v1652 = vpop.f32.mrb[0].mxu0
  %v1653 = vadd.f32 0.0, %v1652
  %v1654 = vpop.f32.mrb[0].mxu0
  %1655 = vmatprep.mubr.f32.mxu0 0.0
  %1656 = vmatmul.mubr.f32.gmra.mrb[0].mxu0 %v1551
  %v1657 = vpop.f32.mrb[0].mxu0
  %v1658 = vadd.f32 0.0, %v1657
  %v1659 = vpop.f32.mrb[0].mxu0
  %1660 = vmatprep.mubr.f32.mxu0 0.0
  %1661 = vmatmul.mubr.f32.gmra.mrb[0].mxu0 %v1552
  %v1662 = vpop.f32.mrb[0].mxu0
  %v1663 = vadd.f32 0.0, %v1662
  %v1664 = vpop.f32.mrb[0].mxu0
  %1665 = vmatprep.mubr.f32.mxu0 0.0
  %1666 = vmatmul.mubr.f32.gmra.mrb[0].mxu0 %v1553
  %v1667 = vpop.f32.mrb[0].mxu0
  %v1668 = vadd.f32 0.0, %v1667
  %v1669 = vpop.f32.mrb[0].mxu0
  %1670 = vmatprep.mubr.f32.mxu0 0.0
  %1671 = vmatmul.mubr.f32.gmra.mrb[0].mxu0 %v1554
  %v1672 = vpop.f32.mrb[0].mxu0
  %v1673 = vadd.f32 0.0, %v1672
  %v1674 = vpop.f32.mrb[0].mxu0
  %1675 = vmatprep.mubr.f32.mxu0 0.0
  %1676 = vmatmul.mubr.f32.gmra.mrb[0].mxu0 %v1555
  %v1677 = vpop.f32.mrb[0].mxu0
  %v1678 = vadd.f32 0.0, %v1677
  %v1679 = vpop.f32.mrb[0].mxu0
  %1680 = vmatprep.mubr.f32.mxu0 0.0
  %1681 = vmatmul.mubr.f32.gmra.mrb[0].mxu0 %v1556
  %v1682 = vpop.f32.mrb[0].mxu0
  %v1683 = vadd.f32 0.0, %v1682
  %v1684 = vpop.f32.mrb[0].mxu0
  %1685 = vmatprep.mubr.f32.mxu0 0.0
  %1686 = vmatmul.mubr.f32.gmra.mrb[0].mxu0 %v1557
  %v1687 = vpop.f32.mrb[0].mxu0
  %v1688 = vadd.f32 0.0, %v1687
  %v1689 = vpop.f32.mrb[0].mxu0
  %1690 = vmatprep.mubr.f32.mxu0 0.0
  %1691 = vmatmul.mubr.f32.gmra.mrb[0].mxu0 %v1558
  %v1692 = vpop.f32.mrb[0].mxu0
  %v1693 = vadd.f32 0.0, %v1692
  %v1694 = vpop.f32.mrb[0].mxu0
  %1695 = vmatprep.mubr.f32.mxu0 0.0
  %1696 = vmatmul.mubr.f32.gmra.mrb[0].mxu0 %v1559
  %v1697 = vpop.f32.mrb[0].mxu0
  %v1698 = vadd.f32 0.0, %v1697
  %v1699 = vpop.f32.mrb[0].mxu0
  %1700 = vmatprep.mubr.f32.mxu0 0.0
  %1701 = vmatmul.mubr.f32.gmra.mrb[0].mxu0 %v1560
  %v1702 = vpop.f32.mrb[0].mxu0
  %v1703 = vadd.f32 0.0, %v1702
  %v1704 = vpop.f32.mrb[0].mxu0
  %1705 = vmatprep.mubr.f32.mxu0 0.0
  %1706 = vmatmul.mubr.f32.gmra.mrb[0].mxu0 %v1561
  %v1707 = vpop.f32.mrb[0].mxu0
  %v1708 = vadd.f32 0.0, %v1707
  %v1709 = vpop.f32.mrb[0].mxu0
  %1710 = vmatprep.mubr.f32.mxu0 0.0
  %1711 = vmatmul.mubr.f32.gmra.mrb[0].mxu0 %v1562
  %v1712 = vpop.f32.mrb[0].mxu0
  %v1713 = vadd.f32 0.0, %v1712
  %v1714 = vpop.f32.mrb[0].mxu0
  %1715 = vmatprep.mubr.f32.mxu0 0.0
  %1716 = vmatmul.mubr.f32.gmra.mrb[0].mxu0 %v1563
  %v1717 = vpop.f32.mrb[0].mxu0
  %v1718 = vadd.f32 0.0, %v1717
  %v1719 = vpop.f32.mrb[0].mxu0
  %1720 = vmatprep.mubr.f32.mxu0 0.0
  %1721 = vmatmul.mubr.f32.gmra.mrb[0].mxu0 %v1564
  %v1722 = vpop.f32.mrb[0].mxu0
  %v1723 = vadd.f32 0.0, %v1722
  %v1724 = vpop.f32.mrb[0].mxu0
  %1725 = vdwg.mxu0
  %v1726 = vadd.f32 %v1533, %v1648
  %v1727 = vadd.f32 %v1534, %v1653
  %v1728 = vadd.f32 %v1535, %v1658
  %v1729 = vadd.f32 %v1536, %v1663
  %v1730 = vadd.f32 %v1537, %v1668
  %v1731 = vadd.f32 %v1538, %v1673
  %v1732 = vadd.f32 %v1539, %v1678
  %v1733 = vadd.f32 %v1540, %v1683
  %v1734 = vadd.f32 %v1541, %v1688
  %v1735 = vadd.f32 %v1542, %v1693
  %v1736 = vadd.f32 %v1543, %v1698
  %v1737 = vadd.f32 %v1544, %v1703
  %v1738 = vadd.f32 %v1545, %v1708
  %v1739 = vadd.f32 %v1546, %v1713
  %v1740 = vadd.f32 %v1547, %v1718
  %v1741 = vadd.f32 %v1548, %v1723
  %v1742 = vld [vmem:[%s1355 + $0x2] sm:$0xff]
  %v1743 = vld [vmem:[%s1355 + $0x12] sm:$0xff]
  %v1744 = vld [vmem:[%s1355 + $0x22] sm:$0xff]
  %v1745 = vld [vmem:[%s1355 + $0x32] sm:$0xff]
  %v1746 = vld [vmem:[%s1355 + $0x42] sm:$0xff]
  %v1747 = vld [vmem:[%s1355 + $0x52] sm:$0xff]
  %v1748 = vld [vmem:[%s1355 + $0x62] sm:$0xff]
  %v1749 = vld [vmem:[%s1355 + $0x72] sm:$0xff]
  %v1750 = vld [vmem:[%s1355 + $0xa2] sm:$0xff]
  %v1751 = vld [vmem:[%s1355 + $0xb2] sm:$0xff]
  %v1752 = vld [vmem:[%s1355 + $0xc2] sm:$0xff]
  %v1753 = vld [vmem:[%s1355 + $0xd2] sm:$0xff]
  %v1754 = vld [vmem:[%s1355 + $0xe2] sm:$0xff]
  %v1755 = vld [vmem:[%s1355 + $0xf2] sm:$0xff]
  %v1756 = vld [vmem:[%s1355 + $0x102] sm:$0xff]
  %v1757 = vld [vmem:[%s1355 + $0x112] sm:$0xff]
  %v1758 = vld [vmem:[%s1 + $0x400] sm:$0xff]
  %v1759 = vld [vmem:[%s1 + $0x408] sm:$0xff]
  %v1760 = vld [vmem:[%s1 + $0x410] sm:$0xff]
  %v1761 = vld [vmem:[%s1 + $0x418] sm:$0xff]
  %v1762 = vld [vmem:[%s1 + $0x420] sm:$0xff]
  %v1763 = vld [vmem:[%s1 + $0x428] sm:$0xff]
  %v1764 = vld [vmem:[%s1 + $0x430] sm:$0xff]
  %v1765 = vld [vmem:[%s1 + $0x438] sm:$0xff]
  %v1766 = vld [vmem:[%s1 + $0x440] sm:$0xff]
  %v1767 = vld [vmem:[%s1 + $0x448] sm:$0xff]
  %v1768 = vld [vmem:[%s1 + $0x450] sm:$0xff]
  %v1769 = vld [vmem:[%s1 + $0x458] sm:$0xff]
  %v1770 = vld [vmem:[%s1 + $0x460] sm:$0xff]
  %v1771 = vld [vmem:[%s1 + $0x468] sm:$0xff]
  %v1772 = vld [vmem:[%s1 + $0x470] sm:$0xff]
  %v1773 = vld [vmem:[%s1 + $0x478] sm:$0xff]
  %1774 = vmatprep.subr.mxu0 0.0
  %1775 = vmatpush1.msra.mxu0 %v1758
  %1776 = vmatprep.subr.mxu0 0.0
  %1777 = vmatpush1.msra.mxu0 %v1759
  %1778 = vmatprep.subr.mxu0 0.0
  %1779 = vmatpush1.msra.mxu0 %v1760
  %1780 = vmatprep.subr.mxu0 0.0
  %1781 = vmatpush1.msra.mxu0 %v1761
  %1782 = vmatprep.subr.mxu0 0.0
  %1783 = vmatpush1.msra.mxu0 %v1762
  %1784 = vmatprep.subr.mxu0 0.0
  %1785 = vmatpush1.msra.mxu0 %v1763
  %1786 = vmatprep.subr.mxu0 0.0
  %1787 = vmatpush1.msra.mxu0 %v1764
  %1788 = vmatprep.subr.mxu0 0.0
  %1789 = vmatpush1.msra.mxu0 %v1765
  %1790 = vmatprep.subr.mxu0 0.0
  %1791 = vmatpush1.msra.mxu0 %v1766
  %1792 = vmatprep.subr.mxu0 0.0
  %1793 = vmatpush1.msra.mxu0 %v1767
  %1794 = vmatprep.subr.mxu0 0.0
  %1795 = vmatpush1.msra.mxu0 %v1768
  %1796 = vmatprep.subr.mxu0 0.0
  %1797 = vmatpush1.msra.mxu0 %v1769
  %1798 = vmatprep.subr.mxu0 0.0
  %1799 = vmatpush1.msra.mxu0 %v1770
  %1800 = vmatprep.subr.mxu0 0.0
  %1801 = vmatpush1.msra.mxu0 %v1771
  %1802 = vmatprep.subr.mxu0 0.0
  %1803 = vmatpush1.msra.mxu0 %v1772
  %1804 = vmatprep.subr.mxu0 0.0
  %1805 = vmatpush1.msra.mxu0 %v1773
  %1806 = vmatprep.subr.mxu0 0.0
  %1807 = vmatpush1.msra.mxu0 0.0
  %1808 = vmatprep.subr.mxu0 0.0
  %1809 = vmatpush1.msra.mxu0 0.0
  %1810 = vmatprep.subr.mxu0 0.0
  %1811 = vmatpush1.msra.mxu0 0.0
  %1812 = vmatprep.subr.mxu0 0.0
  %1813 = vmatpush1.msra.mxu0 0.0
  %1814 = vmatprep.subr.mxu0 0.0
  %1815 = vmatpush1.msra.mxu0 0.0
  %1816 = vmatprep.subr.mxu0 0.0
  %1817 = vmatpush1.msra.mxu0 0.0
  %1818 = vmatprep.subr.mxu0 0.0
  %1819 = vmatpush1.msra.mxu0 0.0
  %1820 = vmatprep.subr.mxu0 0.0
  %1821 = vmatpush1.msra.mxu0 0.0
  %1822 = vmatprep.subr.mxu0 0.0
  %1823 = vmatpush1.msra.mxu0 0.0
  %1824 = vmatprep.subr.mxu0 0.0
  %1825 = vmatpush1.msra.mxu0 0.0
  %1826 = vmatprep.subr.mxu0 0.0
  %1827 = vmatpush1.msra.mxu0 0.0
  %1828 = vmatprep.subr.mxu0 0.0
  %1829 = vmatpush1.msra.mxu0 0.0
  %1830 = vmatprep.subr.mxu0 0.0
  %1831 = vmatpush1.msra.mxu0 0.0
  %1832 = vmatprep.subr.mxu0 0.0
  %1833 = vmatpush1.msra.mxu0 0.0
  %1834 = vmatprep.subr.mxu0 0.0
  %1835 = vmatpush1.msra.mxu0 0.0
  %1836 = vmatprep.subr.mxu0 0.0
  %1837 = vmatpush1.msra.mxu0 0.0
  %1838 = vmatprep.mubr.f32.mxu0 0.0
  %1839 = vmatmul.mubr.f32.gmra.mrb[0].mxu0 %v1742
  %v1840 = vpop.f32.mrb[0].mxu0
  %v1841 = vadd.f32 0.0, %v1840
  %v1842 = vpop.f32.mrb[0].mxu0
  %1843 = vmatprep.mubr.f32.mxu0 0.0
  %1844 = vmatmul.mubr.f32.gmra.mrb[0].mxu0 %v1743
  %v1845 = vpop.f32.mrb[0].mxu0
  %v1846 = vadd.f32 0.0, %v1845
  %v1847 = vpop.f32.mrb[0].mxu0
  %1848 = vmatprep.mubr.f32.mxu0 0.0
  %1849 = vmatmul.mubr.f32.gmra.mrb[0].mxu0 %v1744
  %v1850 = vpop.f32.mrb[0].mxu0
  %v1851 = vadd.f32 0.0, %v1850
  %v1852 = vpop.f32.mrb[0].mxu0
  %1853 = vmatprep.mubr.f32.mxu0 0.0
  %1854 = vmatmul.mubr.f32.gmra.mrb[0].mxu0 %v1745
  %v1855 = vpop.f32.mrb[0].mxu0
  %v1856 = vadd.f32 0.0, %v1855
  %v1857 = vpop.f32.mrb[0].mxu0
  %1858 = vmatprep.mubr.f32.mxu0 0.0
  %1859 = vmatmul.mubr.f32.gmra.mrb[0].mxu0 %v1746
  %v1860 = vpop.f32.mrb[0].mxu0
  %v1861 = vadd.f32 0.0, %v1860
  %v1862 = vpop.f32.mrb[0].mxu0
  %1863 = vmatprep.mubr.f32.mxu0 0.0
  %1864 = vmatmul.mubr.f32.gmra.mrb[0].mxu0 %v1747
  %v1865 = vpop.f32.mrb[0].mxu0
  %v1866 = vadd.f32 0.0, %v1865
  %v1867 = vpop.f32.mrb[0].mxu0
  %1868 = vmatprep.mubr.f32.mxu0 0.0
  %1869 = vmatmul.mubr.f32.gmra.mrb[0].mxu0 %v1748
  %v1870 = vpop.f32.mrb[0].mxu0
  %v1871 = vadd.f32 0.0, %v1870
  %v1872 = vpop.f32.mrb[0].mxu0
  %1873 = vmatprep.mubr.f32.mxu0 0.0
  %1874 = vmatmul.mubr.f32.gmra.mrb[0].mxu0 %v1749
  %v1875 = vpop.f32.mrb[0].mxu0
  %v1876 = vadd.f32 0.0, %v1875
  %v1877 = vpop.f32.mrb[0].mxu0
  %1878 = vmatprep.mubr.f32.mxu0 0.0
  %1879 = vmatmul.mubr.f32.gmra.mrb[0].mxu0 %v1750
  %v1880 = vpop.f32.mrb[0].mxu0
  %v1881 = vadd.f32 0.0, %v1880
  %v1882 = vpop.f32.mrb[0].mxu0
  %1883 = vmatprep.mubr.f32.mxu0 0.0
  %1884 = vmatmul.mubr.f32.gmra.mrb[0].mxu0 %v1751
  %v1885 = vpop.f32.mrb[0].mxu0
  %v1886 = vadd.f32 0.0, %v1885
  %v1887 = vpop.f32.mrb[0].mxu0
  %1888 = vmatprep.mubr.f32.mxu0 0.0
  %1889 = vmatmul.mubr.f32.gmra.mrb[0].mxu0 %v1752
  %v1890 = vpop.f32.mrb[0].mxu0
  %v1891 = vadd.f32 0.0, %v1890
  %v1892 = vpop.f32.mrb[0].mxu0
  %1893 = vmatprep.mubr.f32.mxu0 0.0
  %1894 = vmatmul.mubr.f32.gmra.mrb[0].mxu0 %v1753
  %v1895 = vpop.f32.mrb[0].mxu0
  %v1896 = vadd.f32 0.0, %v1895
  %v1897 = vpop.f32.mrb[0].mxu0
  %1898 = vmatprep.mubr.f32.mxu0 0.0
  %1899 = vmatmul.mubr.f32.gmra.mrb[0].mxu0 %v1754
  %v1900 = vpop.f32.mrb[0].mxu0
  %v1901 = vadd.f32 0.0, %v1900
  %v1902 = vpop.f32.mrb[0].mxu0
  %1903 = vmatprep.mubr.f32.mxu0 0.0
  %1904 = vmatmul.mubr.f32.gmra.mrb[0].mxu0 %v1755
  %v1905 = vpop.f32.mrb[0].mxu0
  %v1906 = vadd.f32 0.0, %v1905
  %v1907 = vpop.f32.mrb[0].mxu0
  %1908 = vmatprep.mubr.f32.mxu0 0.0
  %1909 = vmatmul.mubr.f32.gmra.mrb[0].mxu0 %v1756
  %v1910 = vpop.f32.mrb[0].mxu0
  %v1911 = vadd.f32 0.0, %v1910
  %v1912 = vpop.f32.mrb[0].mxu0
  %1913 = vmatprep.mubr.f32.mxu0 0.0
  %1914 = vmatmul.mubr.f32.gmra.mrb[0].mxu0 %v1757
  %v1915 = vpop.f32.mrb[0].mxu0
  %v1916 = vadd.f32 0.0, %v1915
  %v1917 = vpop.f32.mrb[0].mxu0
  %1918 = vdwg.mxu0
  %v1919 = vadd.f32 %v1726, %v1841
  %v1920 = vadd.f32 %v1727, %v1846
  %v1921 = vadd.f32 %v1728, %v1851
  %v1922 = vadd.f32 %v1729, %v1856
  %v1923 = vadd.f32 %v1730, %v1861
  %v1924 = vadd.f32 %v1731, %v1866
  %v1925 = vadd.f32 %v1732, %v1871
  %v1926 = vadd.f32 %v1733, %v1876
  %v1927 = vadd.f32 %v1734, %v1881
  %v1928 = vadd.f32 %v1735, %v1886
  %v1929 = vadd.f32 %v1736, %v1891
  %v1930 = vadd.f32 %v1737, %v1896
  %v1931 = vadd.f32 %v1738, %v1901
  %v1932 = vadd.f32 %v1739, %v1906
  %v1933 = vadd.f32 %v1740, %v1911
  %v1934 = vadd.f32 %v1741, %v1916
  %v1935 = vld [vmem:[%s2] sm:$0x1]
  %v1937 = vlaneseq
  %v1938 = vshrl.u32 %v1937, 7
  %v1939 = vsub.s32 0, %v1938
  %v1940 = vrot.slane %v1935, %v1939
  %v1942 = vmul.f32 %v1919, %v1940
  %v1943 = vmul.f32 %v1920, %v1940
  %v1944 = vmul.f32 %v1921, %v1940
  %v1945 = vmul.f32 %v1922, %v1940
  %v1946 = vmul.f32 %v1923, %v1940
  %v1947 = vmul.f32 %v1924, %v1940
  %v1948 = vmul.f32 %v1925, %v1940
  %v1949 = vmul.f32 %v1926, %v1940
  %v1950 = vmul.f32 %v1927, %v1940
  %v1951 = vmul.f32 %v1928, %v1940
  %v1952 = vmul.f32 %v1929, %v1940
  %v1953 = vmul.f32 %v1930, %v1940
  %v1954 = vmul.f32 %v1931, %v1940
  %v1955 = vmul.f32 %v1932, %v1940
  %v1956 = vmul.f32 %v1933, %v1940
  %v1957 = vmul.f32 %v1934, %v1940
  %v1958 = vld [vmem:[%s3] sm:$0x1]
  %v1960 = vlaneseq
  %v1961 = vshrl.u32 %v1960, 7
  %v1962 = vsub.s32 0, %v1961
  %v1963 = vrot.slane %v1958, %v1962
  %v1965 = vadd.f32 %v1942, %v1963
  %v1966 = vadd.f32 %v1943, %v1963
  %v1967 = vadd.f32 %v1944, %v1963
  %v1968 = vadd.f32 %v1945, %v1963
  %v1969 = vadd.f32 %v1946, %v1963
  %v1970 = vadd.f32 %v1947, %v1963
  %v1971 = vadd.f32 %v1948, %v1963
  %v1972 = vadd.f32 %v1949, %v1963
  %v1973 = vadd.f32 %v1950, %v1963
  %v1974 = vadd.f32 %v1951, %v1963
  %v1975 = vadd.f32 %v1952, %v1963
  %v1976 = vadd.f32 %v1953, %v1963
  %v1977 = vadd.f32 %v1954, %v1963
  %v1978 = vadd.f32 %v1955, %v1963
  %v1979 = vadd.f32 %v1956, %v1963
  %v1980 = vadd.f32 %v1957, %v1963
  %v1981 = vmax.f32 %v1965, 0.0
  %v1982 = vmax.f32 %v1966, 0.0
  %v1983 = vmax.f32 %v1967, 0.0
  %v1984 = vmax.f32 %v1968, 0.0
  %v1985 = vmax.f32 %v1969, 0.0
  %v1986 = vmax.f32 %v1970, 0.0
  %v1987 = vmax.f32 %v1971, 0.0
  %v1988 = vmax.f32 %v1972, 0.0
  %v1989 = vmax.f32 %v1973, 0.0
  %v1990 = vmax.f32 %v1974, 0.0
  %v1991 = vmax.f32 %v1975, 0.0
  %v1992 = vmax.f32 %v1976, 0.0
  %v1993 = vmax.f32 %v1977, 0.0
  %v1994 = vmax.f32 %v1978, 0.0
  %v1995 = vmax.f32 %v1979, 0.0
  %v1996 = vmax.f32 %v1980, 0.0
  %1997 = vst [vmem:[#allocation3] sm:$0xff] 0.0
  %1998 = vst [vmem:[#allocation3 + $0x8] sm:$0x3] 0.0
  %1999 = vst [vmem:[#allocation3 + $0xa0] sm:$0xff] 0.0
  %2000 = vst [vmem:[#allocation3 + $0xa8] sm:$0x3] 0.0
  %s2001 = scalar_lea.vmem [#allocation3], 144
  %2002 = vst [vmem:[%s2001] sm:$0xff] 0.0
  %2003 = vst [vmem:[%s2001 + $0x8] sm:$0x3] 0.0
  %2004 = vst [vmem:[%s2001 + $0xa0] sm:$0xff] 0.0
  %2005 = vst [vmem:[%s2001 + $0xa8] sm:$0x3] 0.0
  %s2006 = scalar_lea.vmem [#allocation3], 16
  %2007 = vst [vmem:[%s2006] sm:$0x1] 0.0
  %2008 = vst [vmem:[%s2006 + $0x10] sm:$0x1] 0.0
  %2009 = vst [vmem:[%s2006 + $0x20] sm:$0x1] 0.0
  %2010 = vst [vmem:[%s2006 + $0x30] sm:$0x1] 0.0
  %2011 = vst [vmem:[%s2006 + $0x40] sm:$0x1] 0.0
  %2012 = vst [vmem:[%s2006 + $0x50] sm:$0x1] 0.0
  %2013 = vst [vmem:[%s2006 + $0x60] sm:$0x1] 0.0
  %2014 = vst [vmem:[%s2006 + $0x70] sm:$0x1] 0.0
  %2015 = vst [vmem:[%s2006 + $0xa0] sm:$0x1] 0.0
  %2016 = vst [vmem:[%s2006 + $0xb0] sm:$0x1] 0.0
  %2017 = vst [vmem:[%s2006 + $0xc0] sm:$0x1] 0.0
  %2018 = vst [vmem:[%s2006 + $0xd0] sm:$0x1] 0.0
  %2019 = vst [vmem:[%s2006 + $0xe0] sm:$0x1] 0.0
  %2020 = vst [vmem:[%s2006 + $0xf0] sm:$0x1] 0.0
  %2021 = vst [vmem:[%s2006 + $0x100] sm:$0x1] 0.0
  %2022 = vst [vmem:[%s2006 + $0x110] sm:$0x1] 0.0
  %2023 = vst [vmem:[%s2006 + $0x9] sm:$0x1] 0.0
  %2024 = vst [vmem:[%s2006 + $0x19] sm:$0x1] 0.0
  %2025 = vst [vmem:[%s2006 + $0x29] sm:$0x1] 0.0
  %2026 = vst [vmem:[%s2006 + $0x39] sm:$0x1] 0.0
  %2027 = vst [vmem:[%s2006 + $0x49] sm:$0x1] 0.0
  %2028 = vst [vmem:[%s2006 + $0x59] sm:$0x1] 0.0
  %2029 = vst [vmem:[%s2006 + $0x69] sm:$0x1] 0.0
  %2030 = vst [vmem:[%s2006 + $0x79] sm:$0x1] 0.0
  %2031 = vst [vmem:[%s2006 + $0xa9] sm:$0x1] 0.0
  %2032 = vst [vmem:[%s2006 + $0xb9] sm:$0x1] 0.0
  %2033 = vst [vmem:[%s2006 + $0xc9] sm:$0x1] 0.0
  %2034 = vst [vmem:[%s2006 + $0xd9] sm:$0x1] 0.0
  %2035 = vst [vmem:[%s2006 + $0xe9] sm:$0x1] 0.0
  %2036 = vst [vmem:[%s2006 + $0xf9] sm:$0x1] 0.0
  %2037 = vst [vmem:[%s2006 + $0x109] sm:$0x1] 0.0
  %2038 = vst [vmem:[%s2006 + $0x119] sm:$0x1] 0.0
  %2039 = vst [vmem:[%s2006 + $0x1] sm:$0xff] %v1981
  %2040 = vst [vmem:[%s2006 + $0x11] sm:$0xff] %v1982
  %2041 = vst [vmem:[%s2006 + $0x21] sm:$0xff] %v1983
  %2042 = vst [vmem:[%s2006 + $0x31] sm:$0xff] %v1984
  %2043 = vst [vmem:[%s2006 + $0x41] sm:$0xff] %v1985
  %2044 = vst [vmem:[%s2006 + $0x51] sm:$0xff] %v1986
  %2045 = vst [vmem:[%s2006 + $0x61] sm:$0xff] %v1987
  %2046 = vst [vmem:[%s2006 + $0x71] sm:$0xff] %v1988
  %2047 = vst [vmem:[%s2006 + $0xa1] sm:$0xff] %v1989
  %2048 = vst [vmem:[%s2006 + $0xb1] sm:$0xff] %v1990
  %2049 = vst [vmem:[%s2006 + $0xc1] sm:$0xff] %v1991
  %2050 = vst [vmem:[%s2006 + $0xd1] sm:$0xff] %v1992
  %2051 = vst [vmem:[%s2006 + $0xe1] sm:$0xff] %v1993
  %2052 = vst [vmem:[%s2006 + $0xf1] sm:$0xff] %v1994
  %2053 = vst [vmem:[%s2006 + $0x101] sm:$0xff] %v1995
  %2054 = vst [vmem:[%s2006 + $0x111] sm:$0xff] %v1996
  %v2055 = vld [vmem:[#allocation3] sm:$0xff]
  %v2056 = vld [vmem:[#allocation3 + $0x10] sm:$0xff]
  %v2057 = vld [vmem:[#allocation3 + $0x20] sm:$0xff]
  %v2058 = vld [vmem:[#allocation3 + $0x30] sm:$0xff]
  %v2059 = vld [vmem:[#allocation3 + $0x40] sm:$0xff]
  %v2060 = vld [vmem:[#allocation3 + $0x50] sm:$0xff]
  %v2061 = vld [vmem:[#allocation3 + $0x60] sm:$0xff]
  %v2062 = vld [vmem:[#allocation3 + $0x70] sm:$0xff]
  %v2063 = vld [vmem:[#allocation3 + $0xa0] sm:$0xff]
  %v2064 = vld [vmem:[#allocation3 + $0xb0] sm:$0xff]
  %v2065 = vld [vmem:[#allocation3 + $0xc0] sm:$0xff]
  %v2066 = vld [vmem:[#allocation3 + $0xd0] sm:$0xff]
  %v2067 = vld [vmem:[#allocation3 + $0xe0] sm:$0xff]
  %v2068 = vld [vmem:[#allocation3 + $0xf0] sm:$0xff]
  %v2069 = vld [vmem:[#allocation3 + $0x100] sm:$0xff]
  %v2070 = vld [vmem:[#allocation3 + $0x110] sm:$0xff]
  %v2071 = vld [vmem:[%s4] sm:$0xff]
  %v2072 = vld [vmem:[%s4 + $0x8] sm:$0xff]
  %v2073 = vld [vmem:[%s4 + $0x10] sm:$0xff]
  %v2074 = vld [vmem:[%s4 + $0x18] sm:$0xff]
  %v2075 = vld [vmem:[%s4 + $0x20] sm:$0xff]
  %v2076 = vld [vmem:[%s4 + $0x28] sm:$0xff]
  %v2077 = vld [vmem:[%s4 + $0x30] sm:$0xff]
  %v2078 = vld [vmem:[%s4 + $0x38] sm:$0xff]
  %v2079 = vld [vmem:[%s4 + $0x40] sm:$0xff]
  %v2080 = vld [vmem:[%s4 + $0x48] sm:$0xff]
  %v2081 = vld [vmem:[%s4 + $0x50] sm:$0xff]
  %v2082 = vld [vmem:[%s4 + $0x58] sm:$0xff]
  %v2083 = vld [vmem:[%s4 + $0x60] sm:$0xff]
  %v2084 = vld [vmem:[%s4 + $0x68] sm:$0xff]
  %v2085 = vld [vmem:[%s4 + $0x70] sm:$0xff]
  %v2086 = vld [vmem:[%s4 + $0x78] sm:$0xff]
  %v2087 = vld [vmem:[#allocation3 + $0x1] sm:$0xff]
  %v2088 = vld [vmem:[#allocation3 + $0x11] sm:$0xff]
  %v2089 = vld [vmem:[#allocation3 + $0x21] sm:$0xff]
  %v2090 = vld [vmem:[#allocation3 + $0x31] sm:$0xff]
  %v2091 = vld [vmem:[#allocation3 + $0x41] sm:$0xff]
  %v2092 = vld [vmem:[#allocation3 + $0x51] sm:$0xff]
  %v2093 = vld [vmem:[#allocation3 + $0x61] sm:$0xff]
  %v2094 = vld [vmem:[#allocation3 + $0x71] sm:$0xff]
  %v2095 = vld [vmem:[#allocation3 + $0xa1] sm:$0xff]
  %v2096 = vld [vmem:[#allocation3 + $0xb1] sm:$0xff]
  %v2097 = vld [vmem:[#allocation3 + $0xc1] sm:$0xff]
  %v2098 = vld [vmem:[#allocation3 + $0xd1] sm:$0xff]
  %v2099 = vld [vmem:[#allocation3 + $0xe1] sm:$0xff]
  %v2100 = vld [vmem:[#allocation3 + $0xf1] sm:$0xff]
  %v2101 = vld [vmem:[#allocation3 + $0x101] sm:$0xff]
  %v2102 = vld [vmem:[#allocation3 + $0x111] sm:$0xff]
  %v2103 = vld [vmem:[%s4 + $0x80] sm:$0xff]
  %v2104 = vld [vmem:[%s4 + $0x88] sm:$0xff]
  %v2105 = vld [vmem:[%s4 + $0x90] sm:$0xff]
  %v2106 = vld [vmem:[%s4 + $0x98] sm:$0xff]
  %v2107 = vld [vmem:[%s4 + $0xa0] sm:$0xff]
  %v2108 = vld [vmem:[%s4 + $0xa8] sm:$0xff]
  %v2109 = vld [vmem:[%s4 + $0xb0] sm:$0xff]
  %v2110 = vld [vmem:[%s4 + $0xb8] sm:$0xff]
  %v2111 = vld [vmem:[%s4 + $0xc0] sm:$0xff]
  %v2112 = vld [vmem:[%s4 + $0xc8] sm:$0xff]
  %v2113 = vld [vmem:[%s4 + $0xd0] sm:$0xff]
  %v2114 = vld [vmem:[%s4 + $0xd8] sm:$0xff]
  %v2115 = vld [vmem:[%s4 + $0xe0] sm:$0xff]
  %v2116 = vld [vmem:[%s4 + $0xe8] sm:$0xff]
  %v2117 = vld [vmem:[%s4 + $0xf0] sm:$0xff]
  %v2118 = vld [vmem:[%s4 + $0xf8] sm:$0xff]
  %2119 = vmatprep.subr.mxu0 0.0
  %2120 = vmatpush1.msra.mxu0 %v2103
  %2121 = vmatprep.subr.mxu0 0.0
  %2122 = vmatpush1.msra.mxu0 %v2104
  %2123 = vmatprep.subr.mxu0 0.0
  %2124 = vmatpush1.msra.mxu0 %v2105
  %2125 = vmatprep.subr.mxu0 0.0
  %2126 = vmatpush1.msra.mxu0 %v2106
  %2127 = vmatprep.subr.mxu0 0.0
  %2128 = vmatpush1.msra.mxu0 %v2107
  %2129 = vmatprep.subr.mxu0 0.0
  %2130 = vmatpush1.msra.mxu0 %v2108
  %2131 = vmatprep.subr.mxu0 0.0
  %2132 = vmatpush1.msra.mxu0 %v2109
  %2133 = vmatprep.subr.mxu0 0.0
  %2134 = vmatpush1.msra.mxu0 %v2110
  %2135 = vmatprep.subr.mxu0 0.0
  %2136 = vmatpush1.msra.mxu0 %v2111
  %2137 = vmatprep.subr.mxu0 0.0
  %2138 = vmatpush1.msra.mxu0 %v2112
  %2139 = vmatprep.subr.mxu0 0.0
  %2140 = vmatpush1.msra.mxu0 %v2113
  %2141 = vmatprep.subr.mxu0 0.0
  %2142 = vmatpush1.msra.mxu0 %v2114
  %2143 = vmatprep.subr.mxu0 0.0
  %2144 = vmatpush1.msra.mxu0 %v2115
  %2145 = vmatprep.subr.mxu0 0.0
  %2146 = vmatpush1.msra.mxu0 %v2116
  %2147 = vmatprep.subr.mxu0 0.0
  %2148 = vmatpush1.msra.mxu0 %v2117
  %2149 = vmatprep.subr.mxu0 0.0
  %2150 = vmatpush1.msra.mxu0 %v2118
  %2151 = vmatprep.subr.mxu0 0.0
  %2152 = vmatpush1.msra.mxu0 0.0
  %2153 = vmatprep.subr.mxu0 0.0
  %2154 = vmatpush1.msra.mxu0 0.0
  %2155 = vmatprep.subr.mxu0 0.0
  %2156 = vmatpush1.msra.mxu0 0.0
  %2157 = vmatprep.subr.mxu0 0.0
  %2158 = vmatpush1.msra.mxu0 0.0
  %2159 = vmatprep.subr.mxu0 0.0
  %2160 = vmatpush1.msra.mxu0 0.0
  %2161 = vmatprep.subr.mxu0 0.0
  %2162 = vmatpush1.msra.mxu0 0.0
  %2163 = vmatprep.subr.mxu0 0.0
  %2164 = vmatpush1.msra.mxu0 0.0
  %2165 = vmatprep.subr.mxu0 0.0
  %2166 = vmatpush1.msra.mxu0 0.0
  %2167 = vmatprep.subr.mxu0 0.0
  %2168 = vmatpush1.msra.mxu0 0.0
  %2169 = vmatprep.subr.mxu0 0.0
  %2170 = vmatpush1.msra.mxu0 0.0
  %2171 = vmatprep.subr.mxu0 0.0
  %2172 = vmatpush1.msra.mxu0 0.0
  %2173 = vmatprep.subr.mxu0 0.0
  %2174 = vmatpush1.msra.mxu0 0.0
  %2175 = vmatprep.subr.mxu0 0.0
  %2176 = vmatpush1.msra.mxu0 0.0
  %2177 = vmatprep.subr.mxu0 0.0
  %2178 = vmatpush1.msra.mxu0 0.0
  %2179 = vmatprep.subr.mxu0 0.0
  %2180 = vmatpush1.msra.mxu0 0.0
  %2181 = vmatprep.subr.mxu0 0.0
  %2182 = vmatpush1.msra.mxu0 0.0
  %2183 = vmatprep.mubr.f32.mxu0 0.0
  %2184 = vmatmul.mubr.f32.gmra.mrb[0].mxu0 %v2087
  %v2185 = vpop.f32.mrb[0].mxu0
  %v2186 = vadd.f32 0.0, %v2185
  %v2187 = vpop.f32.mrb[0].mxu0
  %2188 = vmatprep.mubr.f32.mxu0 0.0
  %2189 = vmatmul.mubr.f32.gmra.mrb[0].mxu0 %v2088
  %v2190 = vpop.f32.mrb[0].mxu0
  %v2191 = vadd.f32 0.0, %v2190
  %v2192 = vpop.f32.mrb[0].mxu0
  %2193 = vmatprep.mubr.f32.mxu0 0.0
  %2194 = vmatmul.mubr.f32.gmra.mrb[0].mxu0 %v2089
  %v2195 = vpop.f32.mrb[0].mxu0
  %v2196 = vadd.f32 0.0, %v2195
  %v2197 = vpop.f32.mrb[0].mxu0
  %2198 = vmatprep.mubr.f32.mxu0 0.0
  %2199 = vmatmul.mubr.f32.gmra.mrb[0].mxu0 %v2090
  %v2200 = vpop.f32.mrb[0].mxu0
  %v2201 = vadd.f32 0.0, %v2200
  %v2202 = vpop.f32.mrb[0].mxu0
  %2203 = vmatprep.mubr.f32.mxu0 0.0
  %2204 = vmatmul.mubr.f32.gmra.mrb[0].mxu0 %v2091
  %v2205 = vpop.f32.mrb[0].mxu0
  %v2206 = vadd.f32 0.0, %v2205
  %v2207 = vpop.f32.mrb[0].mxu0
  %2208 = vmatprep.mubr.f32.mxu0 0.0
  %2209 = vmatmul.mubr.f32.gmra.mrb[0].mxu0 %v2092
  %v2210 = vpop.f32.mrb[0].mxu0
  %v2211 = vadd.f32 0.0, %v2210
  %v2212 = vpop.f32.mrb[0].mxu0
  %2213 = vmatprep.mubr.f32.mxu0 0.0
  %2214 = vmatmul.mubr.f32.gmra.mrb[0].mxu0 %v2093
  %v2215 = vpop.f32.mrb[0].mxu0
  %v2216 = vadd.f32 0.0, %v2215
  %v2217 = vpop.f32.mrb[0].mxu0
  %2218 = vmatprep.mubr.f32.mxu0 0.0
  %2219 = vmatmul.mubr.f32.gmra.mrb[0].mxu0 %v2094
  %v2220 = vpop.f32.mrb[0].mxu0
  %v2221 = vadd.f32 0.0, %v2220
  %v2222 = vpop.f32.mrb[0].mxu0
  %2223 = vmatprep.mubr.f32.mxu0 0.0
  %2224 = vmatmul.mubr.f32.gmra.mrb[0].mxu0 %v2095
  %v2225 = vpop.f32.mrb[0].mxu0
  %v2226 = vadd.f32 0.0, %v2225
  %v2227 = vpop.f32.mrb[0].mxu0
  %2228 = vmatprep.mubr.f32.mxu0 0.0
  %2229 = vmatmul.mubr.f32.gmra.mrb[0].mxu0 %v2096
  %v2230 = vpop.f32.mrb[0].mxu0
  %v2231 = vadd.f32 0.0, %v2230
  %v2232 = vpop.f32.mrb[0].mxu0
  %2233 = vmatprep.mubr.f32.mxu0 0.0
  %2234 = vmatmul.mubr.f32.gmra.mrb[0].mxu0 %v2097
  %v2235 = vpop.f32.mrb[0].mxu0
  %v2236 = vadd.f32 0.0, %v2235
  %v2237 = vpop.f32.mrb[0].mxu0
  %2238 = vmatprep.mubr.f32.mxu0 0.0
  %2239 = vmatmul.mubr.f32.gmra.mrb[0].mxu0 %v2098
  %v2240 = vpop.f32.mrb[0].mxu0
  %v2241 = vadd.f32 0.0, %v2240
  %v2242 = vpop.f32.mrb[0].mxu0
  %2243 = vmatprep.mubr.f32.mxu0 0.0
  %2244 = vmatmul.mubr.f32.gmra.mrb[0].mxu0 %v2099
  %v2245 = vpop.f32.mrb[0].mxu0
  %v2246 = vadd.f32 0.0, %v2245
  %v2247 = vpop.f32.mrb[0].mxu0
  %2248 = vmatprep.mubr.f32.mxu0 0.0
  %2249 = vmatmul.mubr.f32.gmra.mrb[0].mxu0 %v2100
  %v2250 = vpop.f32.mrb[0].mxu0
  %v2251 = vadd.f32 0.0, %v2250
  %v2252 = vpop.f32.mrb[0].mxu0
  %2253 = vmatprep.mubr.f32.mxu0 0.0
  %2254 = vmatmul.mubr.f32.gmra.mrb[0].mxu0 %v2101
  %v2255 = vpop.f32.mrb[0].mxu0
  %v2256 = vadd.f32 0.0, %v2255
  %v2257 = vpop.f32.mrb[0].mxu0
  %2258 = vmatprep.mubr.f32.mxu0 0.0
  %2259 = vmatmul.mubr.f32.gmra.mrb[0].mxu0 %v2102
  %v2260 = vpop.f32.mrb[0].mxu0
  %v2261 = vadd.f32 0.0, %v2260
  %v2262 = vpop.f32.mrb[0].mxu0
  %2263 = vdwg.mxu0
  %2264 = vmatprep.subr.mxu0 0.0
  %2265 = vmatpush1.msra.mxu0 %v2071
  %2266 = vmatprep.subr.mxu0 0.0
  %2267 = vmatpush1.msra.mxu0 %v2072
  %2268 = vmatprep.subr.mxu0 0.0
  %2269 = vmatpush1.msra.mxu0 %v2073
  %2270 = vmatprep.subr.mxu0 0.0
  %2271 = vmatpush1.msra.mxu0 %v2074
  %2272 = vmatprep.subr.mxu0 0.0
  %2273 = vmatpush1.msra.mxu0 %v2075
  %2274 = vmatprep.subr.mxu0 0.0
  %2275 = vmatpush1.msra.mxu0 %v2076
  %2276 = vmatprep.subr.mxu0 0.0
  %2277 = vmatpush1.msra.mxu0 %v2077
  %2278 = vmatprep.subr.mxu0 0.0
  %2279 = vmatpush1.msra.mxu0 %v2078
  %2280 = vmatprep.subr.mxu0 0.0
  %2281 = vmatpush1.msra.mxu0 %v2079
  %2282 = vmatprep.subr.mxu0 0.0
  %2283 = vmatpush1.msra.mxu0 %v2080
  %2284 = vmatprep.subr.mxu0 0.0
  %2285 = vmatpush1.msra.mxu0 %v2081
  %2286 = vmatprep.subr.mxu0 0.0
  %2287 = vmatpush1.msra.mxu0 %v2082
  %2288 = vmatprep.subr.mxu0 0.0
  %2289 = vmatpush1.msra.mxu0 %v2083
  %2290 = vmatprep.subr.mxu0 0.0
  %2291 = vmatpush1.msra.mxu0 %v2084
  %2292 = vmatprep.subr.mxu0 0.0
  %2293 = vmatpush1.msra.mxu0 %v2085
  %2294 = vmatprep.subr.mxu0 0.0
  %2295 = vmatpush1.msra.mxu0 %v2086
  %2296 = vmatprep.subr.mxu0 0.0
  %2297 = vmatpush1.msra.mxu0 0.0
  %2298 = vmatprep.subr.mxu0 0.0
  %2299 = vmatpush1.msra.mxu0 0.0
  %2300 = vmatprep.subr.mxu0 0.0
  %2301 = vmatpush1.msra.mxu0 0.0
  %2302 = vmatprep.subr.mxu0 0.0
  %2303 = vmatpush1.msra.mxu0 0.0
  %2304 = vmatprep.subr.mxu0 0.0
  %2305 = vmatpush1.msra.mxu0 0.0
  %2306 = vmatprep.subr.mxu0 0.0
  %2307 = vmatpush1.msra.mxu0 0.0
  %2308 = vmatprep.subr.mxu0 0.0
  %2309 = vmatpush1.msra.mxu0 0.0
  %2310 = vmatprep.subr.mxu0 0.0
  %2311 = vmatpush1.msra.mxu0 0.0
  %2312 = vmatprep.subr.mxu0 0.0
  %2313 = vmatpush1.msra.mxu0 0.0
  %2314 = vmatprep.subr.mxu0 0.0
  %2315 = vmatpush1.msra.mxu0 0.0
  %2316 = vmatprep.subr.mxu0 0.0
  %2317 = vmatpush1.msra.mxu0 0.0
  %2318 = vmatprep.subr.mxu0 0.0
  %2319 = vmatpush1.msra.mxu0 0.0
  %2320 = vmatprep.subr.mxu0 0.0
  %2321 = vmatpush1.msra.mxu0 0.0
  %2322 = vmatprep.subr.mxu0 0.0
  %2323 = vmatpush1.msra.mxu0 0.0
  %2324 = vmatprep.subr.mxu0 0.0
  %2325 = vmatpush1.msra.mxu0 0.0
  %2326 = vmatprep.subr.mxu0 0.0
  %2327 = vmatpush1.msra.mxu0 0.0
  %2328 = vmatprep.mubr.f32.mxu0 0.0
  %2329 = vmatmul.mubr.f32.gmra.mrb[0].mxu0 %v2055
  %v2330 = vpop.f32.mrb[0].mxu0
  %v2331 = vadd.f32 %v2186, %v2330
  %v2332 = vpop.f32.mrb[0].mxu0
  %2333 = vmatprep.mubr.f32.mxu0 0.0
  %2334 = vmatmul.mubr.f32.gmra.mrb[0].mxu0 %v2056
  %v2335 = vpop.f32.mrb[0].mxu0
  %v2336 = vadd.f32 %v2191, %v2335
  %v2337 = vpop.f32.mrb[0].mxu0
  %2338 = vmatprep.mubr.f32.mxu0 0.0
  %2339 = vmatmul.mubr.f32.gmra.mrb[0].mxu0 %v2057
  %v2340 = vpop.f32.mrb[0].mxu0
  %v2341 = vadd.f32 %v2196, %v2340
  %v2342 = vpop.f32.mrb[0].mxu0
  %2343 = vmatprep.mubr.f32.mxu0 0.0
  %2344 = vmatmul.mubr.f32.gmra.mrb[0].mxu0 %v2058
  %v2345 = vpop.f32.mrb[0].mxu0
  %v2346 = vadd.f32 %v2201, %v2345
  %v2347 = vpop.f32.mrb[0].mxu0
  %2348 = vmatprep.mubr.f32.mxu0 0.0
  %2349 = vmatmul.mubr.f32.gmra.mrb[0].mxu0 %v2059
  %v2350 = vpop.f32.mrb[0].mxu0
  %v2351 = vadd.f32 %v2206, %v2350
  %v2352 = vpop.f32.mrb[0].mxu0
  %2353 = vmatprep.mubr.f32.mxu0 0.0
  %2354 = vmatmul.mubr.f32.gmra.mrb[0].mxu0 %v2060
  %v2355 = vpop.f32.mrb[0].mxu0
  %v2356 = vadd.f32 %v2211, %v2355
  %v2357 = vpop.f32.mrb[0].mxu0
  %2358 = vmatprep.mubr.f32.mxu0 0.0
  %2359 = vmatmul.mubr.f32.gmra.mrb[0].mxu0 %v2061
  %v2360 = vpop.f32.mrb[0].mxu0
  %v2361 = vadd.f32 %v2216, %v2360
  %v2362 = vpop.f32.mrb[0].mxu0
  %2363 = vmatprep.mubr.f32.mxu0 0.0
  %2364 = vmatmul.mubr.f32.gmra.mrb[0].mxu0 %v2062
  %v2365 = vpop.f32.mrb[0].mxu0
  %v2366 = vadd.f32 %v2221, %v2365
  %v2367 = vpop.f32.mrb[0].mxu0
  %2368 = vmatprep.mubr.f32.mxu0 0.0
  %2369 = vmatmul.mubr.f32.gmra.mrb[0].mxu0 %v2063
  %v2370 = vpop.f32.mrb[0].mxu0
  %v2371 = vadd.f32 %v2226, %v2370
  %v2372 = vpop.f32.mrb[0].mxu0
  %2373 = vmatprep.mubr.f32.mxu0 0.0
  %2374 = vmatmul.mubr.f32.gmra.mrb[0].mxu0 %v2064
  %v2375 = vpop.f32.mrb[0].mxu0
  %v2376 = vadd.f32 %v2231, %v2375
  %v2377 = vpop.f32.mrb[0].mxu0
  %2378 = vmatprep.mubr.f32.mxu0 0.0
  %2379 = vmatmul.mubr.f32.gmra.mrb[0].mxu0 %v2065
  %v2380 = vpop.f32.mrb[0].mxu0
  %v2381 = vadd.f32 %v2236, %v2380
  %v2382 = vpop.f32.mrb[0].mxu0
  %2383 = vmatprep.mubr.f32.mxu0 0.0
  %2384 = vmatmul.mubr.f32.gmra.mrb[0].mxu0 %v2066
  %v2385 = vpop.f32.mrb[0].mxu0
  %v2386 = vadd.f32 %v2241, %v2385
  %v2387 = vpop.f32.mrb[0].mxu0
  %2388 = vmatprep.mubr.f32.mxu0 0.0
  %2389 = vmatmul.mubr.f32.gmra.mrb[0].mxu0 %v2067
  %v2390 = vpop.f32.mrb[0].mxu0
  %v2391 = vadd.f32 %v2246, %v2390
  %v2392 = vpop.f32.mrb[0].mxu0
  %2393 = vmatprep.mubr.f32.mxu0 0.0
  %2394 = vmatmul.mubr.f32.gmra.mrb[0].mxu0 %v2068
  %v2395 = vpop.f32.mrb[0].mxu0
  %v2396 = vadd.f32 %v2251, %v2395
  %v2397 = vpop.f32.mrb[0].mxu0
  %2398 = vmatprep.mubr.f32.mxu0 0.0
  %2399 = vmatmul.mubr.f32.gmra.mrb[0].mxu0 %v2069
  %v2400 = vpop.f32.mrb[0].mxu0
  %v2401 = vadd.f32 %v2256, %v2400
  %v2402 = vpop.f32.mrb[0].mxu0
  %2403 = vmatprep.mubr.f32.mxu0 0.0
  %2404 = vmatmul.mubr.f32.gmra.mrb[0].mxu0 %v2070
  %v2405 = vpop.f32.mrb[0].mxu0
  %v2406 = vadd.f32 %v2261, %v2405
  %v2407 = vpop.f32.mrb[0].mxu0
  %2408 = vdwg.mxu0
  %v2409 = vld [vmem:[#allocation3 + $0x2] sm:$0xff]
  %v2410 = vld [vmem:[#allocation3 + $0x12] sm:$0xff]
  %v2411 = vld [vmem:[#allocation3 + $0x22] sm:$0xff]
  %v2412 = vld [vmem:[#allocation3 + $0x32] sm:$0xff]
  %v2413 = vld [vmem:[#allocation3 + $0x42] sm:$0xff]
  %v2414 = vld [vmem:[#allocation3 + $0x52] sm:$0xff]
  %v2415 = vld [vmem:[#allocation3 + $0x62] sm:$0xff]
  %v2416 = vld [vmem:[#allocation3 + $0x72] sm:$0xff]
  %v2417 = vld [vmem:[#allocation3 + $0xa2] sm:$0xff]
  %v2418 = vld [vmem:[#allocation3 + $0xb2] sm:$0xff]
  %v2419 = vld [vmem:[#allocation3 + $0xc2] sm:$0xff]
  %v2420 = vld [vmem:[#allocation3 + $0xd2] sm:$0xff]
  %v2421 = vld [vmem:[#allocation3 + $0xe2] sm:$0xff]
  %v2422 = vld [vmem:[#allocation3 + $0xf2] sm:$0xff]
  %v2423 = vld [vmem:[#allocation3 + $0x102] sm:$0xff]
  %v2424 = vld [vmem:[#allocation3 + $0x112] sm:$0xff]
  %v2425 = vld [vmem:[%s4 + $0x100] sm:$0xff]
  %v2426 = vld [vmem:[%s4 + $0x108] sm:$0xff]
  %v2427 = vld [vmem:[%s4 + $0x110] sm:$0xff]
  %v2428 = vld [vmem:[%s4 + $0x118] sm:$0xff]
  %v2429 = vld [vmem:[%s4 + $0x120] sm:$0xff]
  %v2430 = vld [vmem:[%s4 + $0x128] sm:$0xff]
  %v2431 = vld [vmem:[%s4 + $0x130] sm:$0xff]
  %v2432 = vld [vmem:[%s4 + $0x138] sm:$0xff]
  %v2433 = vld [vmem:[%s4 + $0x140] sm:$0xff]
  %v2434 = vld [vmem:[%s4 + $0x148] sm:$0xff]
  %v2435 = vld [vmem:[%s4 + $0x150] sm:$0xff]
  %v2436 = vld [vmem:[%s4 + $0x158] sm:$0xff]
  %v2437 = vld [vmem:[%s4 + $0x160] sm:$0xff]
  %v2438 = vld [vmem:[%s4 + $0x168] sm:$0xff]
  %v2439 = vld [vmem:[%s4 + $0x170] sm:$0xff]
  %v2440 = vld [vmem:[%s4 + $0x178] sm:$0xff]
  %2441 = vmatprep.subr.mxu0 0.0
  %2442 = vmatpush1.msra.mxu0 %v2425
  %2443 = vmatprep.subr.mxu0 0.0
  %2444 = vmatpush1.msra.mxu0 %v2426
  %2445 = vmatprep.subr.mxu0 0.0
  %2446 = vmatpush1.msra.mxu0 %v2427
  %2447 = vmatprep.subr.mxu0 0.0
  %2448 = vmatpush1.msra.mxu0 %v2428
  %2449 = vmatprep.subr.mxu0 0.0
  %2450 = vmatpush1.msra.mxu0 %v2429
  %2451 = vmatprep.subr.mxu0 0.0
  %2452 = vmatpush1.msra.mxu0 %v2430
  %2453 = vmatprep.subr.mxu0 0.0
  %2454 = vmatpush1.msra.mxu0 %v2431
  %2455 = vmatprep.subr.mxu0 0.0
  %2456 = vmatpush1.msra.mxu0 %v2432
  %2457 = vmatprep.subr.mxu0 0.0
  %2458 = vmatpush1.msra.mxu0 %v2433
  %2459 = vmatprep.subr.mxu0 0.0
  %2460 = vmatpush1.msra.mxu0 %v2434
  %2461 = vmatprep.subr.mxu0 0.0
  %2462 = vmatpush1.msra.mxu0 %v2435
  %2463 = vmatprep.subr.mxu0 0.0
  %2464 = vmatpush1.msra.mxu0 %v2436
  %2465 = vmatprep.subr.mxu0 0.0
  %2466 = vmatpush1.msra.mxu0 %v2437
  %2467 = vmatprep.subr.mxu0 0.0
  %2468 = vmatpush1.msra.mxu0 %v2438
  %2469 = vmatprep.subr.mxu0 0.0
  %2470 = vmatpush1.msra.mxu0 %v2439
  %2471 = vmatprep.subr.mxu0 0.0
  %2472 = vmatpush1.msra.mxu0 %v2440
  %2473 = vmatprep.subr.mxu0 0.0
  %2474 = vmatpush1.msra.mxu0 0.0
  %2475 = vmatprep.subr.mxu0 0.0
  %2476 = vmatpush1.msra.mxu0 0.0
  %2477 = vmatprep.subr.mxu0 0.0
  %2478 = vmatpush1.msra.mxu0 0.0
  %2479 = vmatprep.subr.mxu0 0.0
  %2480 = vmatpush1.msra.mxu0 0.0
  %2481 = vmatprep.subr.mxu0 0.0
  %2482 = vmatpush1.msra.mxu0 0.0
  %2483 = vmatprep.subr.mxu0 0.0
  %2484 = vmatpush1.msra.mxu0 0.0
  %2485 = vmatprep.subr.mxu0 0.0
  %2486 = vmatpush1.msra.mxu0 0.0
  %2487 = vmatprep.subr.mxu0 0.0
  %2488 = vmatpush1.msra.mxu0 0.0
  %2489 = vmatprep.subr.mxu0 0.0
  %2490 = vmatpush1.msra.mxu0 0.0
  %2491 = vmatprep.subr.mxu0 0.0
  %2492 = vmatpush1.msra.mxu0 0.0
  %2493 = vmatprep.subr.mxu0 0.0
  %2494 = vmatpush1.msra.mxu0 0.0
  %2495 = vmatprep.subr.mxu0 0.0
  %2496 = vmatpush1.msra.mxu0 0.0
  %2497 = vmatprep.subr.mxu0 0.0
  %2498 = vmatpush1.msra.mxu0 0.0
  %2499 = vmatprep.subr.mxu0 0.0
  %2500 = vmatpush1.msra.mxu0 0.0
  %2501 = vmatprep.subr.mxu0 0.0
  %2502 = vmatpush1.msra.mxu0 0.0
  %2503 = vmatprep.subr.mxu0 0.0
  %2504 = vmatpush1.msra.mxu0 0.0
  %2505 = vmatprep.mubr.f32.mxu0 0.0
  %2506 = vmatmul.mubr.f32.gmra.mrb[0].mxu0 %v2409
  %v2507 = vpop.f32.mrb[0].mxu0
  %v2508 = vadd.f32 0.0, %v2507
  %v2509 = vpop.f32.mrb[0].mxu0
  %2510 = vmatprep.mubr.f32.mxu0 0.0
  %2511 = vmatmul.mubr.f32.gmra.mrb[0].mxu0 %v2410
  %v2512 = vpop.f32.mrb[0].mxu0
  %v2513 = vadd.f32 0.0, %v2512
  %v2514 = vpop.f32.mrb[0].mxu0
  %2515 = vmatprep.mubr.f32.mxu0 0.0
  %2516 = vmatmul.mubr.f32.gmra.mrb[0].mxu0 %v2411
  %v2517 = vpop.f32.mrb[0].mxu0
  %v2518 = vadd.f32 0.0, %v2517
  %v2519 = vpop.f32.mrb[0].mxu0
  %2520 = vmatprep.mubr.f32.mxu0 0.0
  %2521 = vmatmul.mubr.f32.gmra.mrb[0].mxu0 %v2412
  %v2522 = vpop.f32.mrb[0].mxu0
  %v2523 = vadd.f32 0.0, %v2522
  %v2524 = vpop.f32.mrb[0].mxu0
  %2525 = vmatprep.mubr.f32.mxu0 0.0
  %2526 = vmatmul.mubr.f32.gmra.mrb[0].mxu0 %v2413
  %v2527 = vpop.f32.mrb[0].mxu0
  %v2528 = vadd.f32 0.0, %v2527
  %v2529 = vpop.f32.mrb[0].mxu0
  %2530 = vmatprep.mubr.f32.mxu0 0.0
  %2531 = vmatmul.mubr.f32.gmra.mrb[0].mxu0 %v2414
  %v2532 = vpop.f32.mrb[0].mxu0
  %v2533 = vadd.f32 0.0, %v2532
  %v2534 = vpop.f32.mrb[0].mxu0
  %2535 = vmatprep.mubr.f32.mxu0 0.0
  %2536 = vmatmul.mubr.f32.gmra.mrb[0].mxu0 %v2415
  %v2537 = vpop.f32.mrb[0].mxu0
  %v2538 = vadd.f32 0.0, %v2537
  %v2539 = vpop.f32.mrb[0].mxu0
  %2540 = vmatprep.mubr.f32.mxu0 0.0
  %2541 = vmatmul.mubr.f32.gmra.mrb[0].mxu0 %v2416
  %v2542 = vpop.f32.mrb[0].mxu0
  %v2543 = vadd.f32 0.0, %v2542
  %v2544 = vpop.f32.mrb[0].mxu0
  %2545 = vmatprep.mubr.f32.mxu0 0.0
  %2546 = vmatmul.mubr.f32.gmra.mrb[0].mxu0 %v2417
  %v2547 = vpop.f32.mrb[0].mxu0
  %v2548 = vadd.f32 0.0, %v2547
  %v2549 = vpop.f32.mrb[0].mxu0
  %2550 = vmatprep.mubr.f32.mxu0 0.0
  %2551 = vmatmul.mubr.f32.gmra.mrb[0].mxu0 %v2418
  %v2552 = vpop.f32.mrb[0].mxu0
  %v2553 = vadd.f32 0.0, %v2552
  %v2554 = vpop.f32.mrb[0].mxu0
  %2555 = vmatprep.mubr.f32.mxu0 0.0
  %2556 = vmatmul.mubr.f32.gmra.mrb[0].mxu0 %v2419
  %v2557 = vpop.f32.mrb[0].mxu0
  %v2558 = vadd.f32 0.0, %v2557
  %v2559 = vpop.f32.mrb[0].mxu0
  %2560 = vmatprep.mubr.f32.mxu0 0.0
  %2561 = vmatmul.mubr.f32.gmra.mrb[0].mxu0 %v2420
  %v2562 = vpop.f32.mrb[0].mxu0
  %v2563 = vadd.f32 0.0, %v2562
  %v2564 = vpop.f32.mrb[0].mxu0
  %2565 = vmatprep.mubr.f32.mxu0 0.0
  %2566 = vmatmul.mubr.f32.gmra.mrb[0].mxu0 %v2421
  %v2567 = vpop.f32.mrb[0].mxu0
  %v2568 = vadd.f32 0.0, %v2567
  %v2569 = vpop.f32.mrb[0].mxu0
  %2570 = vmatprep.mubr.f32.mxu0 0.0
  %2571 = vmatmul.mubr.f32.gmra.mrb[0].mxu0 %v2422
  %v2572 = vpop.f32.mrb[0].mxu0
  %v2573 = vadd.f32 0.0, %v2572
  %v2574 = vpop.f32.mrb[0].mxu0
  %2575 = vmatprep.mubr.f32.mxu0 0.0
  %2576 = vmatmul.mubr.f32.gmra.mrb[0].mxu0 %v2423
  %v2577 = vpop.f32.mrb[0].mxu0
  %v2578 = vadd.f32 0.0, %v2577
  %v2579 = vpop.f32.mrb[0].mxu0
  %2580 = vmatprep.mubr.f32.mxu0 0.0
  %2581 = vmatmul.mubr.f32.gmra.mrb[0].mxu0 %v2424
  %v2582 = vpop.f32.mrb[0].mxu0
  %v2583 = vadd.f32 0.0, %v2582
  %v2584 = vpop.f32.mrb[0].mxu0
  %2585 = vdwg.mxu0
  %v2586 = vadd.f32 %v2331, %v2508
  %v2587 = vadd.f32 %v2336, %v2513
  %v2588 = vadd.f32 %v2341, %v2518
  %v2589 = vadd.f32 %v2346, %v2523
  %v2590 = vadd.f32 %v2351, %v2528
  %v2591 = vadd.f32 %v2356, %v2533
  %v2592 = vadd.f32 %v2361, %v2538
  %v2593 = vadd.f32 %v2366, %v2543
  %v2594 = vadd.f32 %v2371, %v2548
  %v2595 = vadd.f32 %v2376, %v2553
  %v2596 = vadd.f32 %v2381, %v2558
  %v2597 = vadd.f32 %v2386, %v2563
  %v2598 = vadd.f32 %v2391, %v2568
  %v2599 = vadd.f32 %v2396, %v2573
  %v2600 = vadd.f32 %v2401, %v2578
  %v2601 = vadd.f32 %v2406, %v2583
  %v2602 = vld [vmem:[%s2006] sm:$0xff]
  %v2603 = vld [vmem:[%s2006 + $0x10] sm:$0xff]
  %v2604 = vld [vmem:[%s2006 + $0x20] sm:$0xff]
  %v2605 = vld [vmem:[%s2006 + $0x30] sm:$0xff]
  %v2606 = vld [vmem:[%s2006 + $0x40] sm:$0xff]
  %v2607 = vld [vmem:[%s2006 + $0x50] sm:$0xff]
  %v2608 = vld [vmem:[%s2006 + $0x60] sm:$0xff]
  %v2609 = vld [vmem:[%s2006 + $0x70] sm:$0xff]
  %v2610 = vld [vmem:[%s2006 + $0xa0] sm:$0xff]
  %v2611 = vld [vmem:[%s2006 + $0xb0] sm:$0xff]
  %v2612 = vld [vmem:[%s2006 + $0xc0] sm:$0xff]
  %v2613 = vld [vmem:[%s2006 + $0xd0] sm:$0xff]
  %v2614 = vld [vmem:[%s2006 + $0xe0] sm:$0xff]
  %v2615 = vld [vmem:[%s2006 + $0xf0] sm:$0xff]
  %v2616 = vld [vmem:[%s2006 + $0x100] sm:$0xff]
  %v2617 = vld [vmem:[%s2006 + $0x110] sm:$0xff]
  %v2618 = vld [vmem:[%s4 + $0x180] sm:$0xff]
  %v2619 = vld [vmem:[%s4 + $0x188] sm:$0xff]
  %v2620 = vld [vmem:[%s4 + $0x190] sm:$0xff]
  %v2621 = vld [vmem:[%s4 + $0x198] sm:$0xff]
  %v2622 = vld [vmem:[%s4 + $0x1a0] sm:$0xff]
  %v2623 = vld [vmem:[%s4 + $0x1a8] sm:$0xff]
  %v2624 = vld [vmem:[%s4 + $0x1b0] sm:$0xff]
  %v2625 = vld [vmem:[%s4 + $0x1b8] sm:$0xff]
  %v2626 = vld [vmem:[%s4 + $0x1c0] sm:$0xff]
  %v2627 = vld [vmem:[%s4 + $0x1c8] sm:$0xff]
  %v2628 = vld [vmem:[%s4 + $0x1d0] sm:$0xff]
  %v2629 = vld [vmem:[%s4 + $0x1d8] sm:$0xff]
  %v2630 = vld [vmem:[%s4 + $0x1e0] sm:$0xff]
  %v2631 = vld [vmem:[%s4 + $0x1e8] sm:$0xff]
  %v2632 = vld [vmem:[%s4 + $0x1f0] sm:$0xff]
  %v2633 = vld [vmem:[%s4 + $0x1f8] sm:$0xff]
  %2634 = vmatprep.subr.mxu0 0.0
  %2635 = vmatpush1.msra.mxu0 %v2618
  %2636 = vmatprep.subr.mxu0 0.0
  %2637 = vmatpush1.msra.mxu0 %v2619
  %2638 = vmatprep.subr.mxu0 0.0
  %2639 = vmatpush1.msra.mxu0 %v2620
  %2640 = vmatprep.subr.mxu0 0.0
  %2641 = vmatpush1.msra.mxu0 %v2621
  %2642 = vmatprep.subr.mxu0 0.0
  %2643 = vmatpush1.msra.mxu0 %v2622
  %2644 = vmatprep.subr.mxu0 0.0
  %2645 = vmatpush1.msra.mxu0 %v2623
  %2646 = vmatprep.subr.mxu0 0.0
  %2647 = vmatpush1.msra.mxu0 %v2624
  %2648 = vmatprep.subr.mxu0 0.0
  %2649 = vmatpush1.msra.mxu0 %v2625
  %2650 = vmatprep.subr.mxu0 0.0
  %2651 = vmatpush1.msra.mxu0 %v2626
  %2652 = vmatprep.subr.mxu0 0.0
  %2653 = vmatpush1.msra.mxu0 %v2627
  %2654 = vmatprep.subr.mxu0 0.0
  %2655 = vmatpush1.msra.mxu0 %v2628
  %2656 = vmatprep.subr.mxu0 0.0
  %2657 = vmatpush1.msra.mxu0 %v2629
  %2658 = vmatprep.subr.mxu0 0.0
  %2659 = vmatpush1.msra.mxu0 %v2630
  %2660 = vmatprep.subr.mxu0 0.0
  %2661 = vmatpush1.msra.mxu0 %v2631
  %2662 = vmatprep.subr.mxu0 0.0
  %2663 = vmatpush1.msra.mxu0 %v2632
  %2664 = vmatprep.subr.mxu0 0.0
  %2665 = vmatpush1.msra.mxu0 %v2633
  %2666 = vmatprep.subr.mxu0 0.0
  %2667 = vmatpush1.msra.mxu0 0.0
  %2668 = vmatprep.subr.mxu0 0.0
  %2669 = vmatpush1.msra.mxu0 0.0
  %2670 = vmatprep.subr.mxu0 0.0
  %2671 = vmatpush1.msra.mxu0 0.0
  %2672 = vmatprep.subr.mxu0 0.0
  %2673 = vmatpush1.msra.mxu0 0.0
  %2674 = vmatprep.subr.mxu0 0.0
  %2675 = vmatpush1.msra.mxu0 0.0
  %2676 = vmatprep.subr.mxu0 0.0
  %2677 = vmatpush1.msra.mxu0 0.0
  %2678 = vmatprep.subr.mxu0 0.0
  %2679 = vmatpush1.msra.mxu0 0.0
  %2680 = vmatprep.subr.mxu0 0.0
  %2681 = vmatpush1.msra.mxu0 0.0
  %2682 = vmatprep.subr.mxu0 0.0
  %2683 = vmatpush1.msra.mxu0 0.0
  %2684 = vmatprep.subr.mxu0 0.0
  %2685 = vmatpush1.msra.mxu0 0.0
  %2686 = vmatprep.subr.mxu0 0.0
  %2687 = vmatpush1.msra.mxu0 0.0
  %2688 = vmatprep.subr.mxu0 0.0
  %2689 = vmatpush1.msra.mxu0 0.0
  %2690 = vmatprep.subr.mxu0 0.0
  %2691 = vmatpush1.msra.mxu0 0.0
  %2692 = vmatprep.subr.mxu0 0.0
  %2693 = vmatpush1.msra.mxu0 0.0
  %2694 = vmatprep.subr.mxu0 0.0
  %2695 = vmatpush1.msra.mxu0 0.0
  %2696 = vmatprep.subr.mxu0 0.0
  %2697 = vmatpush1.msra.mxu0 0.0
  %2698 = vmatprep.mubr.f32.mxu0 0.0
  %2699 = vmatmul.mubr.f32.gmra.mrb[0].mxu0 %v2602
  %v2700 = vpop.f32.mrb[0].mxu0
  %v2701 = vadd.f32 0.0, %v2700
  %v2702 = vpop.f32.mrb[0].mxu0
  %2703 = vmatprep.mubr.f32.mxu0 0.0
  %2704 = vmatmul.mubr.f32.gmra.mrb[0].mxu0 %v2603
  %v2705 = vpop.f32.mrb[0].mxu0
  %v2706 = vadd.f32 0.0, %v2705
  %v2707 = vpop.f32.mrb[0].mxu0
  %2708 = vmatprep.mubr.f32.mxu0 0.0
  %2709 = vmatmul.mubr.f32.gmra.mrb[0].mxu0 %v2604
  %v2710 = vpop.f32.mrb[0].mxu0
  %v2711 = vadd.f32 0.0, %v2710
  %v2712 = vpop.f32.mrb[0].mxu0
  %2713 = vmatprep.mubr.f32.mxu0 0.0
  %2714 = vmatmul.mubr.f32.gmra.mrb[0].mxu0 %v2605
  %v2715 = vpop.f32.mrb[0].mxu0
  %v2716 = vadd.f32 0.0, %v2715
  %v2717 = vpop.f32.mrb[0].mxu0
  %2718 = vmatprep.mubr.f32.mxu0 0.0
  %2719 = vmatmul.mubr.f32.gmra.mrb[0].mxu0 %v2606
  %v2720 = vpop.f32.mrb[0].mxu0
  %v2721 = vadd.f32 0.0, %v2720
  %v2722 = vpop.f32.mrb[0].mxu0
  %2723 = vmatprep.mubr.f32.mxu0 0.0
  %2724 = vmatmul.mubr.f32.gmra.mrb[0].mxu0 %v2607
  %v2725 = vpop.f32.mrb[0].mxu0
  %v2726 = vadd.f32 0.0, %v2725
  %v2727 = vpop.f32.mrb[0].mxu0
  %2728 = vmatprep.mubr.f32.mxu0 0.0
  %2729 = vmatmul.mubr.f32.gmra.mrb[0].mxu0 %v2608
  %v2730 = vpop.f32.mrb[0].mxu0
  %v2731 = vadd.f32 0.0, %v2730
  %v2732 = vpop.f32.mrb[0].mxu0
  %2733 = vmatprep.mubr.f32.mxu0 0.0
  %2734 = vmatmul.mubr.f32.gmra.mrb[0].mxu0 %v2609
  %v2735 = vpop.f32.mrb[0].mxu0
  %v2736 = vadd.f32 0.0, %v2735
  %v2737 = vpop.f32.mrb[0].mxu0
  %2738 = vmatprep.mubr.f32.mxu0 0.0
  %2739 = vmatmul.mubr.f32.gmra.mrb[0].mxu0 %v2610
  %v2740 = vpop.f32.mrb[0].mxu0
  %v2741 = vadd.f32 0.0, %v2740
  %v2742 = vpop.f32.mrb[0].mxu0
  %2743 = vmatprep.mubr.f32.mxu0 0.0
  %2744 = vmatmul.mubr.f32.gmra.mrb[0].mxu0 %v2611
  %v2745 = vpop.f32.mrb[0].mxu0
  %v2746 = vadd.f32 0.0, %v2745
  %v2747 = vpop.f32.mrb[0].mxu0
  %2748 = vmatprep.mubr.f32.mxu0 0.0
  %2749 = vmatmul.mubr.f32.gmra.mrb[0].mxu0 %v2612
  %v2750 = vpop.f32.mrb[0].mxu0
  %v2751 = vadd.f32 0.0, %v2750
  %v2752 = vpop.f32.mrb[0].mxu0
  %2753 = vmatprep.mubr.f32.mxu0 0.0
  %2754 = vmatmul.mubr.f32.gmra.mrb[0].mxu0 %v2613
  %v2755 = vpop.f32.mrb[0].mxu0
  %v2756 = vadd.f32 0.0, %v2755
  %v2757 = vpop.f32.mrb[0].mxu0
  %2758 = vmatprep.mubr.f32.mxu0 0.0
  %2759 = vmatmul.mubr.f32.gmra.mrb[0].mxu0 %v2614
  %v2760 = vpop.f32.mrb[0].mxu0
  %v2761 = vadd.f32 0.0, %v2760
  %v2762 = vpop.f32.mrb[0].mxu0
  %2763 = vmatprep.mubr.f32.mxu0 0.0
  %2764 = vmatmul.mubr.f32.gmra.mrb[0].mxu0 %v2615
  %v2765 = vpop.f32.mrb[0].mxu0
  %v2766 = vadd.f32 0.0, %v2765
  %v2767 = vpop.f32.mrb[0].mxu0
  %2768 = vmatprep.mubr.f32.mxu0 0.0
  %2769 = vmatmul.mubr.f32.gmra.mrb[0].mxu0 %v2616
  %v2770 = vpop.f32.mrb[0].mxu0
  %v2771 = vadd.f32 0.0, %v2770
  %v2772 = vpop.f32.mrb[0].mxu0
  %2773 = vmatprep.mubr.f32.mxu0 0.0
  %2774 = vmatmul.mubr.f32.gmra.mrb[0].mxu0 %v2617
  %v2775 = vpop.f32.mrb[0].mxu0
  %v2776 = vadd.f32 0.0, %v2775
  %v2777 = vpop.f32.mrb[0].mxu0
  %2778 = vdwg.mxu0
  %v2779 = vadd.f32 %v2586, %v2701
  %v2780 = vadd.f32 %v2587, %v2706
  %v2781 = vadd.f32 %v2588, %v2711
  %v2782 = vadd.f32 %v2589, %v2716
  %v2783 = vadd.f32 %v2590, %v2721
  %v2784 = vadd.f32 %v2591, %v2726
  %v2785 = vadd.f32 %v2592, %v2731
  %v2786 = vadd.f32 %v2593, %v2736
  %v2787 = vadd.f32 %v2594, %v2741
  %v2788 = vadd.f32 %v2595, %v2746
  %v2789 = vadd.f32 %v2596, %v2751
  %v2790 = vadd.f32 %v2597, %v2756
  %v2791 = vadd.f32 %v2598, %v2761
  %v2792 = vadd.f32 %v2599, %v2766
  %v2793 = vadd.f32 %v2600, %v2771
  %v2794 = vadd.f32 %v2601, %v2776
  %v2795 = vld [vmem:[%s2006 + $0x1] sm:$0xff]
  %v2796 = vld [vmem:[%s2006 + $0x11] sm:$0xff]
  %v2797 = vld [vmem:[%s2006 + $0x21] sm:$0xff]
  %v2798 = vld [vmem:[%s2006 + $0x31] sm:$0xff]
  %v2799 = vld [vmem:[%s2006 + $0x41] sm:$0xff]
  %v2800 = vld [vmem:[%s2006 + $0x51] sm:$0xff]
  %v2801 = vld [vmem:[%s2006 + $0x61] sm:$0xff]
  %v2802 = vld [vmem:[%s2006 + $0x71] sm:$0xff]
  %v2803 = vld [vmem:[%s2006 + $0xa1] sm:$0xff]
  %v2804 = vld [vmem:[%s2006 + $0xb1] sm:$0xff]
  %v2805 = vld [vmem:[%s2006 + $0xc1] sm:$0xff]
  %v2806 = vld [vmem:[%s2006 + $0xd1] sm:$0xff]
  %v2807 = vld [vmem:[%s2006 + $0xe1] sm:$0xff]
  %v2808 = vld [vmem:[%s2006 + $0xf1] sm:$0xff]
  %v2809 = vld [vmem:[%s2006 + $0x101] sm:$0xff]
  %v2810 = vld [vmem:[%s2006 + $0x111] sm:$0xff]
  %v2811 = vld [vmem:[%s4 + $0x200] sm:$0xff]
  %v2812 = vld [vmem:[%s4 + $0x208] sm:$0xff]
  %v2813 = vld [vmem:[%s4 + $0x210] sm:$0xff]
  %v2814 = vld [vmem:[%s4 + $0x218] sm:$0xff]
  %v2815 = vld [vmem:[%s4 + $0x220] sm:$0xff]
  %v2816 = vld [vmem:[%s4 + $0x228] sm:$0xff]
  %v2817 = vld [vmem:[%s4 + $0x230] sm:$0xff]
  %v2818 = vld [vmem:[%s4 + $0x238] sm:$0xff]
  %v2819 = vld [vmem:[%s4 + $0x240] sm:$0xff]
  %v2820 = vld [vmem:[%s4 + $0x248] sm:$0xff]
  %v2821 = vld [vmem:[%s4 + $0x250] sm:$0xff]
  %v2822 = vld [vmem:[%s4 + $0x258] sm:$0xff]
  %v2823 = vld [vmem:[%s4 + $0x260] sm:$0xff]
  %v2824 = vld [vmem:[%s4 + $0x268] sm:$0xff]
  %v2825 = vld [vmem:[%s4 + $0x270] sm:$0xff]
  %v2826 = vld [vmem:[%s4 + $0x278] sm:$0xff]
  %2827 = vmatprep.subr.mxu0 0.0
  %2828 = vmatpush1.msra.mxu0 %v2811
  %2829 = vmatprep.subr.mxu0 0.0
  %2830 = vmatpush1.msra.mxu0 %v2812
  %2831 = vmatprep.subr.mxu0 0.0
  %2832 = vmatpush1.msra.mxu0 %v2813
  %2833 = vmatprep.subr.mxu0 0.0
  %2834 = vmatpush1.msra.mxu0 %v2814
  %2835 = vmatprep.subr.mxu0 0.0
  %2836 = vmatpush1.msra.mxu0 %v2815
  %2837 = vmatprep.subr.mxu0 0.0
  %2838 = vmatpush1.msra.mxu0 %v2816
  %2839 = vmatprep.subr.mxu0 0.0
  %2840 = vmatpush1.msra.mxu0 %v2817
  %2841 = vmatprep.subr.mxu0 0.0
  %2842 = vmatpush1.msra.mxu0 %v2818
  %2843 = vmatprep.subr.mxu0 0.0
  %2844 = vmatpush1.msra.mxu0 %v2819
  %2845 = vmatprep.subr.mxu0 0.0
  %2846 = vmatpush1.msra.mxu0 %v2820
  %2847 = vmatprep.subr.mxu0 0.0
  %2848 = vmatpush1.msra.mxu0 %v2821
  %2849 = vmatprep.subr.mxu0 0.0
  %2850 = vmatpush1.msra.mxu0 %v2822
  %2851 = vmatprep.subr.mxu0 0.0
  %2852 = vmatpush1.msra.mxu0 %v2823
  %2853 = vmatprep.subr.mxu0 0.0
  %2854 = vmatpush1.msra.mxu0 %v2824
  %2855 = vmatprep.subr.mxu0 0.0
  %2856 = vmatpush1.msra.mxu0 %v2825
  %2857 = vmatprep.subr.mxu0 0.0
  %2858 = vmatpush1.msra.mxu0 %v2826
  %2859 = vmatprep.subr.mxu0 0.0
  %2860 = vmatpush1.msra.mxu0 0.0
  %2861 = vmatprep.subr.mxu0 0.0
  %2862 = vmatpush1.msra.mxu0 0.0
  %2863 = vmatprep.subr.mxu0 0.0
  %2864 = vmatpush1.msra.mxu0 0.0
  %2865 = vmatprep.subr.mxu0 0.0
  %2866 = vmatpush1.msra.mxu0 0.0
  %2867 = vmatprep.subr.mxu0 0.0
  %2868 = vmatpush1.msra.mxu0 0.0
  %2869 = vmatprep.subr.mxu0 0.0
  %2870 = vmatpush1.msra.mxu0 0.0
  %2871 = vmatprep.subr.mxu0 0.0
  %2872 = vmatpush1.msra.mxu0 0.0
  %2873 = vmatprep.subr.mxu0 0.0
  %2874 = vmatpush1.msra.mxu0 0.0
  %2875 = vmatprep.subr.mxu0 0.0
  %2876 = vmatpush1.msra.mxu0 0.0
  %2877 = vmatprep.subr.mxu0 0.0
  %2878 = vmatpush1.msra.mxu0 0.0
  %2879 = vmatprep.subr.mxu0 0.0
  %2880 = vmatpush1.msra.mxu0 0.0
  %2881 = vmatprep.subr.mxu0 0.0
  %2882 = vmatpush1.msra.mxu0 0.0
  %2883 = vmatprep.subr.mxu0 0.0
  %2884 = vmatpush1.msra.mxu0 0.0
  %2885 = vmatprep.subr.mxu0 0.0
  %2886 = vmatpush1.msra.mxu0 0.0
  %2887 = vmatprep.subr.mxu0 0.0
  %2888 = vmatpush1.msra.mxu0 0.0
  %2889 = vmatprep.subr.mxu0 0.0
  %2890 = vmatpush1.msra.mxu0 0.0
  %2891 = vmatprep.mubr.f32.mxu0 0.0
  %2892 = vmatmul.mubr.f32.gmra.mrb[0].mxu0 %v2795
  %v2893 = vpop.f32.mrb[0].mxu0
  %v2894 = vadd.f32 0.0, %v2893
  %v2895 = vpop.f32.mrb[0].mxu0
  %2896 = vmatprep.mubr.f32.mxu0 0.0
  %2897 = vmatmul.mubr.f32.gmra.mrb[0].mxu0 %v2796
  %v2898 = vpop.f32.mrb[0].mxu0
  %v2899 = vadd.f32 0.0, %v2898
  %v2900 = vpop.f32.mrb[0].mxu0
  %2901 = vmatprep.mubr.f32.mxu0 0.0
  %2902 = vmatmul.mubr.f32.gmra.mrb[0].mxu0 %v2797
  %v2903 = vpop.f32.mrb[0].mxu0
  %v2904 = vadd.f32 0.0, %v2903
  %v2905 = vpop.f32.mrb[0].mxu0
  %2906 = vmatprep.mubr.f32.mxu0 0.0
  %2907 = vmatmul.mubr.f32.gmra.mrb[0].mxu0 %v2798
  %v2908 = vpop.f32.mrb[0].mxu0
  %v2909 = vadd.f32 0.0, %v2908
  %v2910 = vpop.f32.mrb[0].mxu0
  %2911 = vmatprep.mubr.f32.mxu0 0.0
  %2912 = vmatmul.mubr.f32.gmra.mrb[0].mxu0 %v2799
  %v2913 = vpop.f32.mrb[0].mxu0
  %v2914 = vadd.f32 0.0, %v2913
  %v2915 = vpop.f32.mrb[0].mxu0
  %2916 = vmatprep.mubr.f32.mxu0 0.0
  %2917 = vmatmul.mubr.f32.gmra.mrb[0].mxu0 %v2800
  %v2918 = vpop.f32.mrb[0].mxu0
  %v2919 = vadd.f32 0.0, %v2918
  %v2920 = vpop.f32.mrb[0].mxu0
  %2921 = vmatprep.mubr.f32.mxu0 0.0
  %2922 = vmatmul.mubr.f32.gmra.mrb[0].mxu0 %v2801
  %v2923 = vpop.f32.mrb[0].mxu0
  %v2924 = vadd.f32 0.0, %v2923
  %v2925 = vpop.f32.mrb[0].mxu0
  %2926 = vmatprep.mubr.f32.mxu0 0.0
  %2927 = vmatmul.mubr.f32.gmra.mrb[0].mxu0 %v2802
  %v2928 = vpop.f32.mrb[0].mxu0
  %v2929 = vadd.f32 0.0, %v2928
  %v2930 = vpop.f32.mrb[0].mxu0
  %2931 = vmatprep.mubr.f32.mxu0 0.0
  %2932 = vmatmul.mubr.f32.gmra.mrb[0].mxu0 %v2803
  %v2933 = vpop.f32.mrb[0].mxu0
  %v2934 = vadd.f32 0.0, %v2933
  %v2935 = vpop.f32.mrb[0].mxu0
  %2936 = vmatprep.mubr.f32.mxu0 0.0
  %2937 = vmatmul.mubr.f32.gmra.mrb[0].mxu0 %v2804
  %v2938 = vpop.f32.mrb[0].mxu0
  %v2939 = vadd.f32 0.0, %v2938
  %v2940 = vpop.f32.mrb[0].mxu0
  %2941 = vmatprep.mubr.f32.mxu0 0.0
  %2942 = vmatmul.mubr.f32.gmra.mrb[0].mxu0 %v2805
  %v2943 = vpop.f32.mrb[0].mxu0
  %v2944 = vadd.f32 0.0, %v2943
  %v2945 = vpop.f32.mrb[0].mxu0
  %2946 = vmatprep.mubr.f32.mxu0 0.0
  %2947 = vmatmul.mubr.f32.gmra.mrb[0].mxu0 %v2806
  %v2948 = vpop.f32.mrb[0].mxu0
  %v2949 = vadd.f32 0.0, %v2948
  %v2950 = vpop.f32.mrb[0].mxu0
  %2951 = vmatprep.mubr.f32.mxu0 0.0
  %2952 = vmatmul.mubr.f32.gmra.mrb[0].mxu0 %v2807
  %v2953 = vpop.f32.mrb[0].mxu0
  %v2954 = vadd.f32 0.0, %v2953
  %v2955 = vpop.f32.mrb[0].mxu0
  %2956 = vmatprep.mubr.f32.mxu0 0.0
  %2957 = vmatmul.mubr.f32.gmra.mrb[0].mxu0 %v2808
  %v2958 = vpop.f32.mrb[0].mxu0
  %v2959 = vadd.f32 0.0, %v2958
  %v2960 = vpop.f32.mrb[0].mxu0
  %2961 = vmatprep.mubr.f32.mxu0 0.0
  %2962 = vmatmul.mubr.f32.gmra.mrb[0].mxu0 %v2809
  %v2963 = vpop.f32.mrb[0].mxu0
  %v2964 = vadd.f32 0.0, %v2963
  %v2965 = vpop.f32.mrb[0].mxu0
  %2966 = vmatprep.mubr.f32.mxu0 0.0
  %2967 = vmatmul.mubr.f32.gmra.mrb[0].mxu0 %v2810
  %v2968 = vpop.f32.mrb[0].mxu0
  %v2969 = vadd.f32 0.0, %v2968
  %v2970 = vpop.f32.mrb[0].mxu0
  %2971 = vdwg.mxu0
  %v2972 = vadd.f32 %v2779, %v2894
  %v2973 = vadd.f32 %v2780, %v2899
  %v2974 = vadd.f32 %v2781, %v2904
  %v2975 = vadd.f32 %v2782, %v2909
  %v2976 = vadd.f32 %v2783, %v2914
  %v2977 = vadd.f32 %v2784, %v2919
  %v2978 = vadd.f32 %v2785, %v2924
  %v2979 = vadd.f32 %v2786, %v2929
  %v2980 = vadd.f32 %v2787, %v2934
  %v2981 = vadd.f32 %v2788, %v2939
  %v2982 = vadd.f32 %v2789, %v2944
  %v2983 = vadd.f32 %v2790, %v2949
  %v2984 = vadd.f32 %v2791, %v2954
  %v2985 = vadd.f32 %v2792, %v2959
  %v2986 = vadd.f32 %v2793, %v2964
  %v2987 = vadd.f32 %v2794, %v2969
  %v2988 = vld [vmem:[%s2006 + $0x2] sm:$0xff]
  %v2989 = vld [vmem:[%s2006 + $0x12] sm:$0xff]
  %v2990 = vld [vmem:[%s2006 + $0x22] sm:$0xff]
  %v2991 = vld [vmem:[%s2006 + $0x32] sm:$0xff]
  %v2992 = vld [vmem:[%s2006 + $0x42] sm:$0xff]
  %v2993 = vld [vmem:[%s2006 + $0x52] sm:$0xff]
  %v2994 = vld [vmem:[%s2006 + $0x62] sm:$0xff]
  %v2995 = vld [vmem:[%s2006 + $0x72] sm:$0xff]
  %v2996 = vld [vmem:[%s2006 + $0xa2] sm:$0xff]
  %v2997 = vld [vmem:[%s2006 + $0xb2] sm:$0xff]
  %v2998 = vld [vmem:[%s2006 + $0xc2] sm:$0xff]
  %v2999 = vld [vmem:[%s2006 + $0xd2] sm:$0xff]
  %v3000 = vld [vmem:[%s2006 + $0xe2] sm:$0xff]
  %v3001 = vld [vmem:[%s2006 + $0xf2] sm:$0xff]
  %v3002 = vld [vmem:[%s2006 + $0x102] sm:$0xff]
  %v3003 = vld [vmem:[%s2006 + $0x112] sm:$0xff]
  %v3004 = vld [vmem:[%s4 + $0x280] sm:$0xff]
  %v3005 = vld [vmem:[%s4 + $0x288] sm:$0xff]
  %v3006 = vld [vmem:[%s4 + $0x290] sm:$0xff]
  %v3007 = vld [vmem:[%s4 + $0x298] sm:$0xff]
  %v3008 = vld [vmem:[%s4 + $0x2a0] sm:$0xff]
  %v3009 = vld [vmem:[%s4 + $0x2a8] sm:$0xff]
  %v3010 = vld [vmem:[%s4 + $0x2b0] sm:$0xff]
  %v3011 = vld [vmem:[%s4 + $0x2b8] sm:$0xff]
  %v3012 = vld [vmem:[%s4 + $0x2c0] sm:$0xff]
  %v3013 = vld [vmem:[%s4 + $0x2c8] sm:$0xff]
  %v3014 = vld [vmem:[%s4 + $0x2d0] sm:$0xff]
  %v3015 = vld [vmem:[%s4 + $0x2d8] sm:$0xff]
  %v3016 = vld [vmem:[%s4 + $0x2e0] sm:$0xff]
  %v3017 = vld [vmem:[%s4 + $0x2e8] sm:$0xff]
  %v3018 = vld [vmem:[%s4 + $0x2f0] sm:$0xff]
  %v3019 = vld [vmem:[%s4 + $0x2f8] sm:$0xff]
  %3020 = vmatprep.subr.mxu0 0.0
  %3021 = vmatpush1.msra.mxu0 %v3004
  %3022 = vmatprep.subr.mxu0 0.0
  %3023 = vmatpush1.msra.mxu0 %v3005
  %3024 = vmatprep.subr.mxu0 0.0
  %3025 = vmatpush1.msra.mxu0 %v3006
  %3026 = vmatprep.subr.mxu0 0.0
  %3027 = vmatpush1.msra.mxu0 %v3007
  %3028 = vmatprep.subr.mxu0 0.0
  %3029 = vmatpush1.msra.mxu0 %v3008
  %3030 = vmatprep.subr.mxu0 0.0
  %3031 = vmatpush1.msra.mxu0 %v3009
  %3032 = vmatprep.subr.mxu0 0.0
  %3033 = vmatpush1.msra.mxu0 %v3010
  %3034 = vmatprep.subr.mxu0 0.0
  %3035 = vmatpush1.msra.mxu0 %v3011
  %3036 = vmatprep.subr.mxu0 0.0
  %3037 = vmatpush1.msra.mxu0 %v3012
  %3038 = vmatprep.subr.mxu0 0.0
  %3039 = vmatpush1.msra.mxu0 %v3013
  %3040 = vmatprep.subr.mxu0 0.0
  %3041 = vmatpush1.msra.mxu0 %v3014
  %3042 = vmatprep.subr.mxu0 0.0
  %3043 = vmatpush1.msra.mxu0 %v3015
  %3044 = vmatprep.subr.mxu0 0.0
  %3045 = vmatpush1.msra.mxu0 %v3016
  %3046 = vmatprep.subr.mxu0 0.0
  %3047 = vmatpush1.msra.mxu0 %v3017
  %3048 = vmatprep.subr.mxu0 0.0
  %3049 = vmatpush1.msra.mxu0 %v3018
  %3050 = vmatprep.subr.mxu0 0.0
  %3051 = vmatpush1.msra.mxu0 %v3019
  %3052 = vmatprep.subr.mxu0 0.0
  %3053 = vmatpush1.msra.mxu0 0.0
  %3054 = vmatprep.subr.mxu0 0.0
  %3055 = vmatpush1.msra.mxu0 0.0
  %3056 = vmatprep.subr.mxu0 0.0
  %3057 = vmatpush1.msra.mxu0 0.0
  %3058 = vmatprep.subr.mxu0 0.0
  %3059 = vmatpush1.msra.mxu0 0.0
  %3060 = vmatprep.subr.mxu0 0.0
  %3061 = vmatpush1.msra.mxu0 0.0
  %3062 = vmatprep.subr.mxu0 0.0
  %3063 = vmatpush1.msra.mxu0 0.0
  %3064 = vmatprep.subr.mxu0 0.0
  %3065 = vmatpush1.msra.mxu0 0.0
  %3066 = vmatprep.subr.mxu0 0.0
  %3067 = vmatpush1.msra.mxu0 0.0
  %3068 = vmatprep.subr.mxu0 0.0
  %3069 = vmatpush1.msra.mxu0 0.0
  %3070 = vmatprep.subr.mxu0 0.0
  %3071 = vmatpush1.msra.mxu0 0.0
  %3072 = vmatprep.subr.mxu0 0.0
  %3073 = vmatpush1.msra.mxu0 0.0
  %3074 = vmatprep.subr.mxu0 0.0
  %3075 = vmatpush1.msra.mxu0 0.0
  %3076 = vmatprep.subr.mxu0 0.0
  %3077 = vmatpush1.msra.mxu0 0.0
  %3078 = vmatprep.subr.mxu0 0.0
  %3079 = vmatpush1.msra.mxu0 0.0
  %3080 = vmatprep.subr.mxu0 0.0
  %3081 = vmatpush1.msra.mxu0 0.0
  %3082 = vmatprep.subr.mxu0 0.0
  %3083 = vmatpush1.msra.mxu0 0.0
  %3084 = vmatprep.mubr.f32.mxu0 0.0
  %3085 = vmatmul.mubr.f32.gmra.mrb[0].mxu0 %v2988
  %v3086 = vpop.f32.mrb[0].mxu0
  %v3087 = vadd.f32 0.0, %v3086
  %v3088 = vpop.f32.mrb[0].mxu0
  %3089 = vmatprep.mubr.f32.mxu0 0.0
  %3090 = vmatmul.mubr.f32.gmra.mrb[0].mxu0 %v2989
  %v3091 = vpop.f32.mrb[0].mxu0
  %v3092 = vadd.f32 0.0, %v3091
  %v3093 = vpop.f32.mrb[0].mxu0
  %3094 = vmatprep.mubr.f32.mxu0 0.0
  %3095 = vmatmul.mubr.f32.gmra.mrb[0].mxu0 %v2990
  %v3096 = vpop.f32.mrb[0].mxu0
  %v3097 = vadd.f32 0.0, %v3096
  %v3098 = vpop.f32.mrb[0].mxu0
  %3099 = vmatprep.mubr.f32.mxu0 0.0
  %3100 = vmatmul.mubr.f32.gmra.mrb[0].mxu0 %v2991
  %v3101 = vpop.f32.mrb[0].mxu0
  %v3102 = vadd.f32 0.0, %v3101
  %v3103 = vpop.f32.mrb[0].mxu0
  %3104 = vmatprep.mubr.f32.mxu0 0.0
  %3105 = vmatmul.mubr.f32.gmra.mrb[0].mxu0 %v2992
  %v3106 = vpop.f32.mrb[0].mxu0
  %v3107 = vadd.f32 0.0, %v3106
  %v3108 = vpop.f32.mrb[0].mxu0
  %3109 = vmatprep.mubr.f32.mxu0 0.0
  %3110 = vmatmul.mubr.f32.gmra.mrb[0].mxu0 %v2993
  %v3111 = vpop.f32.mrb[0].mxu0
  %v3112 = vadd.f32 0.0, %v3111
  %v3113 = vpop.f32.mrb[0].mxu0
  %3114 = vmatprep.mubr.f32.mxu0 0.0
  %3115 = vmatmul.mubr.f32.gmra.mrb[0].mxu0 %v2994
  %v3116 = vpop.f32.mrb[0].mxu0
  %v3117 = vadd.f32 0.0, %v3116
  %v3118 = vpop.f32.mrb[0].mxu0
  %3119 = vmatprep.mubr.f32.mxu0 0.0
  %3120 = vmatmul.mubr.f32.gmra.mrb[0].mxu0 %v2995
  %v3121 = vpop.f32.mrb[0].mxu0
  %v3122 = vadd.f32 0.0, %v3121
  %v3123 = vpop.f32.mrb[0].mxu0
  %3124 = vmatprep.mubr.f32.mxu0 0.0
  %3125 = vmatmul.mubr.f32.gmra.mrb[0].mxu0 %v2996
  %v3126 = vpop.f32.mrb[0].mxu0
  %v3127 = vadd.f32 0.0, %v3126
  %v3128 = vpop.f32.mrb[0].mxu0
  %3129 = vmatprep.mubr.f32.mxu0 0.0
  %3130 = vmatmul.mubr.f32.gmra.mrb[0].mxu0 %v2997
  %v3131 = vpop.f32.mrb[0].mxu0
  %v3132 = vadd.f32 0.0, %v3131
  %v3133 = vpop.f32.mrb[0].mxu0
  %3134 = vmatprep.mubr.f32.mxu0 0.0
  %3135 = vmatmul.mubr.f32.gmra.mrb[0].mxu0 %v2998
  %v3136 = vpop.f32.mrb[0].mxu0
  %v3137 = vadd.f32 0.0, %v3136
  %v3138 = vpop.f32.mrb[0].mxu0
  %3139 = vmatprep.mubr.f32.mxu0 0.0
  %3140 = vmatmul.mubr.f32.gmra.mrb[0].mxu0 %v2999
  %v3141 = vpop.f32.mrb[0].mxu0
  %v3142 = vadd.f32 0.0, %v3141
  %v3143 = vpop.f32.mrb[0].mxu0
  %3144 = vmatprep.mubr.f32.mxu0 0.0
  %3145 = vmatmul.mubr.f32.gmra.mrb[0].mxu0 %v3000
  %v3146 = vpop.f32.mrb[0].mxu0
  %v3147 = vadd.f32 0.0, %v3146
  %v3148 = vpop.f32.mrb[0].mxu0
  %3149 = vmatprep.mubr.f32.mxu0 0.0
  %3150 = vmatmul.mubr.f32.gmra.mrb[0].mxu0 %v3001
  %v3151 = vpop.f32.mrb[0].mxu0
  %v3152 = vadd.f32 0.0, %v3151
  %v3153 = vpop.f32.mrb[0].mxu0
  %3154 = vmatprep.mubr.f32.mxu0 0.0
  %3155 = vmatmul.mubr.f32.gmra.mrb[0].mxu0 %v3002
  %v3156 = vpop.f32.mrb[0].mxu0
  %v3157 = vadd.f32 0.0, %v3156
  %v3158 = vpop.f32.mrb[0].mxu0
  %3159 = vmatprep.mubr.f32.mxu0 0.0
  %3160 = vmatmul.mubr.f32.gmra.mrb[0].mxu0 %v3003
  %v3161 = vpop.f32.mrb[0].mxu0
  %v3162 = vadd.f32 0.0, %v3161
  %v3163 = vpop.f32.mrb[0].mxu0
  %3164 = vdwg.mxu0
  %v3165 = vadd.f32 %v2972, %v3087
  %v3166 = vadd.f32 %v2973, %v3092
  %v3167 = vadd.f32 %v2974, %v3097
  %v3168 = vadd.f32 %v2975, %v3102
  %v3169 = vadd.f32 %v2976, %v3107
  %v3170 = vadd.f32 %v2977, %v3112
  %v3171 = vadd.f32 %v2978, %v3117
  %v3172 = vadd.f32 %v2979, %v3122
  %v3173 = vadd.f32 %v2980, %v3127
  %v3174 = vadd.f32 %v2981, %v3132
  %v3175 = vadd.f32 %v2982, %v3137
  %v3176 = vadd.f32 %v2983, %v3142
  %v3177 = vadd.f32 %v2984, %v3147
  %v3178 = vadd.f32 %v2985, %v3152
  %v3179 = vadd.f32 %v2986, %v3157
  %v3180 = vadd.f32 %v2987, %v3162
  %s3181 = scalar_lea.vmem [#allocation3], 32
  %v3182 = vld [vmem:[%s3181] sm:$0xff]
  %v3183 = vld [vmem:[%s3181 + $0x10] sm:$0xff]
  %v3184 = vld [vmem:[%s3181 + $0x20] sm:$0xff]
  %v3185 = vld [vmem:[%s3181 + $0x30] sm:$0xff]
  %v3186 = vld [vmem:[%s3181 + $0x40] sm:$0xff]
  %v3187 = vld [vmem:[%s3181 + $0x50] sm:$0xff]
  %v3188 = vld [vmem:[%s3181 + $0x60] sm:$0xff]
  %v3189 = vld [vmem:[%s3181 + $0x70] sm:$0xff]
  %v3190 = vld [vmem:[%s3181 + $0xa0] sm:$0xff]
  %v3191 = vld [vmem:[%s3181 + $0xb0] sm:$0xff]
  %v3192 = vld [vmem:[%s3181 + $0xc0] sm:$0xff]
  %v3193 = vld [vmem:[%s3181 + $0xd0] sm:$0xff]
  %v3194 = vld [vmem:[%s3181 + $0xe0] sm:$0xff]
  %v3195 = vld [vmem:[%s3181 + $0xf0] sm:$0xff]
  %v3196 = vld [vmem:[%s3181 + $0x100] sm:$0xff]
  %v3197 = vld [vmem:[%s3181 + $0x110] sm:$0xff]
  %v3198 = vld [vmem:[%s4 + $0x300] sm:$0xff]
  %v3199 = vld [vmem:[%s4 + $0x308] sm:$0xff]
  %v3200 = vld [vmem:[%s4 + $0x310] sm:$0xff]
  %v3201 = vld [vmem:[%s4 + $0x318] sm:$0xff]
  %v3202 = vld [vmem:[%s4 + $0x320] sm:$0xff]
  %v3203 = vld [vmem:[%s4 + $0x328] sm:$0xff]
  %v3204 = vld [vmem:[%s4 + $0x330] sm:$0xff]
  %v3205 = vld [vmem:[%s4 + $0x338] sm:$0xff]
  %v3206 = vld [vmem:[%s4 + $0x340] sm:$0xff]
  %v3207 = vld [vmem:[%s4 + $0x348] sm:$0xff]
  %v3208 = vld [vmem:[%s4 + $0x350] sm:$0xff]
  %v3209 = vld [vmem:[%s4 + $0x358] sm:$0xff]
  %v3210 = vld [vmem:[%s4 + $0x360] sm:$0xff]
  %v3211 = vld [vmem:[%s4 + $0x368] sm:$0xff]
  %v3212 = vld [vmem:[%s4 + $0x370] sm:$0xff]
  %v3213 = vld [vmem:[%s4 + $0x378] sm:$0xff]
  %3214 = vmatprep.subr.mxu0 0.0
  %3215 = vmatpush1.msra.mxu0 %v3198
  %3216 = vmatprep.subr.mxu0 0.0
  %3217 = vmatpush1.msra.mxu0 %v3199
  %3218 = vmatprep.subr.mxu0 0.0
  %3219 = vmatpush1.msra.mxu0 %v3200
  %3220 = vmatprep.subr.mxu0 0.0
  %3221 = vmatpush1.msra.mxu0 %v3201
  %3222 = vmatprep.subr.mxu0 0.0
  %3223 = vmatpush1.msra.mxu0 %v3202
  %3224 = vmatprep.subr.mxu0 0.0
  %3225 = vmatpush1.msra.mxu0 %v3203
  %3226 = vmatprep.subr.mxu0 0.0
  %3227 = vmatpush1.msra.mxu0 %v3204
  %3228 = vmatprep.subr.mxu0 0.0
  %3229 = vmatpush1.msra.mxu0 %v3205
  %3230 = vmatprep.subr.mxu0 0.0
  %3231 = vmatpush1.msra.mxu0 %v3206
  %3232 = vmatprep.subr.mxu0 0.0
  %3233 = vmatpush1.msra.mxu0 %v3207
  %3234 = vmatprep.subr.mxu0 0.0
  %3235 = vmatpush1.msra.mxu0 %v3208
  %3236 = vmatprep.subr.mxu0 0.0
  %3237 = vmatpush1.msra.mxu0 %v3209
  %3238 = vmatprep.subr.mxu0 0.0
  %3239 = vmatpush1.msra.mxu0 %v3210
  %3240 = vmatprep.subr.mxu0 0.0
  %3241 = vmatpush1.msra.mxu0 %v3211
  %3242 = vmatprep.subr.mxu0 0.0
  %3243 = vmatpush1.msra.mxu0 %v3212
  %3244 = vmatprep.subr.mxu0 0.0
  %3245 = vmatpush1.msra.mxu0 %v3213
  %3246 = vmatprep.subr.mxu0 0.0
  %3247 = vmatpush1.msra.mxu0 0.0
  %3248 = vmatprep.subr.mxu0 0.0
  %3249 = vmatpush1.msra.mxu0 0.0
  %3250 = vmatprep.subr.mxu0 0.0
  %3251 = vmatpush1.msra.mxu0 0.0
  %3252 = vmatprep.subr.mxu0 0.0
  %3253 = vmatpush1.msra.mxu0 0.0
  %3254 = vmatprep.subr.mxu0 0.0
  %3255 = vmatpush1.msra.mxu0 0.0
  %3256 = vmatprep.subr.mxu0 0.0
  %3257 = vmatpush1.msra.mxu0 0.0
  %3258 = vmatprep.subr.mxu0 0.0
  %3259 = vmatpush1.msra.mxu0 0.0
  %3260 = vmatprep.subr.mxu0 0.0
  %3261 = vmatpush1.msra.mxu0 0.0
  %3262 = vmatprep.subr.mxu0 0.0
  %3263 = vmatpush1.msra.mxu0 0.0
  %3264 = vmatprep.subr.mxu0 0.0
  %3265 = vmatpush1.msra.mxu0 0.0
  %3266 = vmatprep.subr.mxu0 0.0
  %3267 = vmatpush1.msra.mxu0 0.0
  %3268 = vmatprep.subr.mxu0 0.0
  %3269 = vmatpush1.msra.mxu0 0.0
  %3270 = vmatprep.subr.mxu0 0.0
  %3271 = vmatpush1.msra.mxu0 0.0
  %3272 = vmatprep.subr.mxu0 0.0
  %3273 = vmatpush1.msra.mxu0 0.0
  %3274 = vmatprep.subr.mxu0 0.0
  %3275 = vmatpush1.msra.mxu0 0.0
  %3276 = vmatprep.subr.mxu0 0.0
  %3277 = vmatpush1.msra.mxu0 0.0
  %3278 = vmatprep.mubr.f32.mxu0 0.0
  %3279 = vmatmul.mubr.f32.gmra.mrb[0].mxu0 %v3182
  %v3280 = vpop.f32.mrb[0].mxu0
  %v3281 = vadd.f32 0.0, %v3280
  %v3282 = vpop.f32.mrb[0].mxu0
  %3283 = vmatprep.mubr.f32.mxu0 0.0
  %3284 = vmatmul.mubr.f32.gmra.mrb[0].mxu0 %v3183
  %v3285 = vpop.f32.mrb[0].mxu0
  %v3286 = vadd.f32 0.0, %v3285
  %v3287 = vpop.f32.mrb[0].mxu0
  %3288 = vmatprep.mubr.f32.mxu0 0.0
  %3289 = vmatmul.mubr.f32.gmra.mrb[0].mxu0 %v3184
  %v3290 = vpop.f32.mrb[0].mxu0
  %v3291 = vadd.f32 0.0, %v3290
  %v3292 = vpop.f32.mrb[0].mxu0
  %3293 = vmatprep.mubr.f32.mxu0 0.0
  %3294 = vmatmul.mubr.f32.gmra.mrb[0].mxu0 %v3185
  %v3295 = vpop.f32.mrb[0].mxu0
  %v3296 = vadd.f32 0.0, %v3295
  %v3297 = vpop.f32.mrb[0].mxu0
  %3298 = vmatprep.mubr.f32.mxu0 0.0
  %3299 = vmatmul.mubr.f32.gmra.mrb[0].mxu0 %v3186
  %v3300 = vpop.f32.mrb[0].mxu0
  %v3301 = vadd.f32 0.0, %v3300
  %v3302 = vpop.f32.mrb[0].mxu0
  %3303 = vmatprep.mubr.f32.mxu0 0.0
  %3304 = vmatmul.mubr.f32.gmra.mrb[0].mxu0 %v3187
  %v3305 = vpop.f32.mrb[0].mxu0
  %v3306 = vadd.f32 0.0, %v3305
  %v3307 = vpop.f32.mrb[0].mxu0
  %3308 = vmatprep.mubr.f32.mxu0 0.0
  %3309 = vmatmul.mubr.f32.gmra.mrb[0].mxu0 %v3188
  %v3310 = vpop.f32.mrb[0].mxu0
  %v3311 = vadd.f32 0.0, %v3310
  %v3312 = vpop.f32.mrb[0].mxu0
  %3313 = vmatprep.mubr.f32.mxu0 0.0
  %3314 = vmatmul.mubr.f32.gmra.mrb[0].mxu0 %v3189
  %v3315 = vpop.f32.mrb[0].mxu0
  %v3316 = vadd.f32 0.0, %v3315
  %v3317 = vpop.f32.mrb[0].mxu0
  %3318 = vmatprep.mubr.f32.mxu0 0.0
  %3319 = vmatmul.mubr.f32.gmra.mrb[0].mxu0 %v3190
  %v3320 = vpop.f32.mrb[0].mxu0
  %v3321 = vadd.f32 0.0, %v3320
  %v3322 = vpop.f32.mrb[0].mxu0
  %3323 = vmatprep.mubr.f32.mxu0 0.0
  %3324 = vmatmul.mubr.f32.gmra.mrb[0].mxu0 %v3191
  %v3325 = vpop.f32.mrb[0].mxu0
  %v3326 = vadd.f32 0.0, %v3325
  %v3327 = vpop.f32.mrb[0].mxu0
  %3328 = vmatprep.mubr.f32.mxu0 0.0
  %3329 = vmatmul.mubr.f32.gmra.mrb[0].mxu0 %v3192
  %v3330 = vpop.f32.mrb[0].mxu0
  %v3331 = vadd.f32 0.0, %v3330
  %v3332 = vpop.f32.mrb[0].mxu0
  %3333 = vmatprep.mubr.f32.mxu0 0.0
  %3334 = vmatmul.mubr.f32.gmra.mrb[0].mxu0 %v3193
  %v3335 = vpop.f32.mrb[0].mxu0
  %v3336 = vadd.f32 0.0, %v3335
  %v3337 = vpop.f32.mrb[0].mxu0
  %3338 = vmatprep.mubr.f32.mxu0 0.0
  %3339 = vmatmul.mubr.f32.gmra.mrb[0].mxu0 %v3194
  %v3340 = vpop.f32.mrb[0].mxu0
  %v3341 = vadd.f32 0.0, %v3340
  %v3342 = vpop.f32.mrb[0].mxu0
  %3343 = vmatprep.mubr.f32.mxu0 0.0
  %3344 = vmatmul.mubr.f32.gmra.mrb[0].mxu0 %v3195
  %v3345 = vpop.f32.mrb[0].mxu0
  %v3346 = vadd.f32 0.0, %v3345
  %v3347 = vpop.f32.mrb[0].mxu0
  %3348 = vmatprep.mubr.f32.mxu0 0.0
  %3349 = vmatmul.mubr.f32.gmra.mrb[0].mxu0 %v3196
  %v3350 = vpop.f32.mrb[0].mxu0
  %v3351 = vadd.f32 0.0, %v3350
  %v3352 = vpop.f32.mrb[0].mxu0
  %3353 = vmatprep.mubr.f32.mxu0 0.0
  %3354 = vmatmul.mubr.f32.gmra.mrb[0].mxu0 %v3197
  %v3355 = vpop.f32.mrb[0].mxu0
  %v3356 = vadd.f32 0.0, %v3355
  %v3357 = vpop.f32.mrb[0].mxu0
  %3358 = vdwg.mxu0
  %v3359 = vadd.f32 %v3165, %v3281
  %v3360 = vadd.f32 %v3166, %v3286
  %v3361 = vadd.f32 %v3167, %v3291
  %v3362 = vadd.f32 %v3168, %v3296
  %v3363 = vadd.f32 %v3169, %v3301
  %v3364 = vadd.f32 %v3170, %v3306
  %v3365 = vadd.f32 %v3171, %v3311
  %v3366 = vadd.f32 %v3172, %v3316
  %v3367 = vadd.f32 %v3173, %v3321
  %v3368 = vadd.f32 %v3174, %v3326
  %v3369 = vadd.f32 %v3175, %v3331
  %v3370 = vadd.f32 %v3176, %v3336
  %v3371 = vadd.f32 %v3177, %v3341
  %v3372 = vadd.f32 %v3178, %v3346
  %v3373 = vadd.f32 %v3179, %v3351
  %v3374 = vadd.f32 %v3180, %v3356
  %v3375 = vld [vmem:[%s3181 + $0x1] sm:$0xff]
  %v3376 = vld [vmem:[%s3181 + $0x11] sm:$0xff]
  %v3377 = vld [vmem:[%s3181 + $0x21] sm:$0xff]
  %v3378 = vld [vmem:[%s3181 + $0x31] sm:$0xff]
  %v3379 = vld [vmem:[%s3181 + $0x41] sm:$0xff]
  %v3380 = vld [vmem:[%s3181 + $0x51] sm:$0xff]
  %v3381 = vld [vmem:[%s3181 + $0x61] sm:$0xff]
  %v3382 = vld [vmem:[%s3181 + $0x71] sm:$0xff]
  %v3383 = vld [vmem:[%s3181 + $0xa1] sm:$0xff]
  %v3384 = vld [vmem:[%s3181 + $0xb1] sm:$0xff]
  %v3385 = vld [vmem:[%s3181 + $0xc1] sm:$0xff]
  %v3386 = vld [vmem:[%s3181 + $0xd1] sm:$0xff]
  %v3387 = vld [vmem:[%s3181 + $0xe1] sm:$0xff]
  %v3388 = vld [vmem:[%s3181 + $0xf1] sm:$0xff]
  %v3389 = vld [vmem:[%s3181 + $0x101] sm:$0xff]
  %v3390 = vld [vmem:[%s3181 + $0x111] sm:$0xff]
  %v3391 = vld [vmem:[%s4 + $0x380] sm:$0xff]
  %v3392 = vld [vmem:[%s4 + $0x388] sm:$0xff]
  %v3393 = vld [vmem:[%s4 + $0x390] sm:$0xff]
  %v3394 = vld [vmem:[%s4 + $0x398] sm:$0xff]
  %v3395 = vld [vmem:[%s4 + $0x3a0] sm:$0xff]
  %v3396 = vld [vmem:[%s4 + $0x3a8] sm:$0xff]
  %v3397 = vld [vmem:[%s4 + $0x3b0] sm:$0xff]
  %v3398 = vld [vmem:[%s4 + $0x3b8] sm:$0xff]
  %v3399 = vld [vmem:[%s4 + $0x3c0] sm:$0xff]
  %v3400 = vld [vmem:[%s4 + $0x3c8] sm:$0xff]
  %v3401 = vld [vmem:[%s4 + $0x3d0] sm:$0xff]
  %v3402 = vld [vmem:[%s4 + $0x3d8] sm:$0xff]
  %v3403 = vld [vmem:[%s4 + $0x3e0] sm:$0xff]
  %v3404 = vld [vmem:[%s4 + $0x3e8] sm:$0xff]
  %v3405 = vld [vmem:[%s4 + $0x3f0] sm:$0xff]
  %v3406 = vld [vmem:[%s4 + $0x3f8] sm:$0xff]
  %3407 = vmatprep.subr.mxu0 0.0
  %3408 = vmatpush1.msra.mxu0 %v3391
  %3409 = vmatprep.subr.mxu0 0.0
  %3410 = vmatpush1.msra.mxu0 %v3392
  %3411 = vmatprep.subr.mxu0 0.0
  %3412 = vmatpush1.msra.mxu0 %v3393
  %3413 = vmatprep.subr.mxu0 0.0
  %3414 = vmatpush1.msra.mxu0 %v3394
  %3415 = vmatprep.subr.mxu0 0.0
  %3416 = vmatpush1.msra.mxu0 %v3395
  %3417 = vmatprep.subr.mxu0 0.0
  %3418 = vmatpush1.msra.mxu0 %v3396
  %3419 = vmatprep.subr.mxu0 0.0
  %3420 = vmatpush1.msra.mxu0 %v3397
  %3421 = vmatprep.subr.mxu0 0.0
  %3422 = vmatpush1.msra.mxu0 %v3398
  %3423 = vmatprep.subr.mxu0 0.0
  %3424 = vmatpush1.msra.mxu0 %v3399
  %3425 = vmatprep.subr.mxu0 0.0
  %3426 = vmatpush1.msra.mxu0 %v3400
  %3427 = vmatprep.subr.mxu0 0.0
  %3428 = vmatpush1.msra.mxu0 %v3401
  %3429 = vmatprep.subr.mxu0 0.0
  %3430 = vmatpush1.msra.mxu0 %v3402
  %3431 = vmatprep.subr.mxu0 0.0
  %3432 = vmatpush1.msra.mxu0 %v3403
  %3433 = vmatprep.subr.mxu0 0.0
  %3434 = vmatpush1.msra.mxu0 %v3404
  %3435 = vmatprep.subr.mxu0 0.0
  %3436 = vmatpush1.msra.mxu0 %v3405
  %3437 = vmatprep.subr.mxu0 0.0
  %3438 = vmatpush1.msra.mxu0 %v3406
  %3439 = vmatprep.subr.mxu0 0.0
  %3440 = vmatpush1.msra.mxu0 0.0
  %3441 = vmatprep.subr.mxu0 0.0
  %3442 = vmatpush1.msra.mxu0 0.0
  %3443 = vmatprep.subr.mxu0 0.0
  %3444 = vmatpush1.msra.mxu0 0.0
  %3445 = vmatprep.subr.mxu0 0.0
  %3446 = vmatpush1.msra.mxu0 0.0
  %3447 = vmatprep.subr.mxu0 0.0
  %3448 = vmatpush1.msra.mxu0 0.0
  %3449 = vmatprep.subr.mxu0 0.0
  %3450 = vmatpush1.msra.mxu0 0.0
  %3451 = vmatprep.subr.mxu0 0.0
  %3452 = vmatpush1.msra.mxu0 0.0
  %3453 = vmatprep.subr.mxu0 0.0
  %3454 = vmatpush1.msra.mxu0 0.0
  %3455 = vmatprep.subr.mxu0 0.0
  %3456 = vmatpush1.msra.mxu0 0.0
  %3457 = vmatprep.subr.mxu0 0.0
  %3458 = vmatpush1.msra.mxu0 0.0
  %3459 = vmatprep.subr.mxu0 0.0
  %3460 = vmatpush1.msra.mxu0 0.0
  %3461 = vmatprep.subr.mxu0 0.0
  %3462 = vmatpush1.msra.mxu0 0.0
  %3463 = vmatprep.subr.mxu0 0.0
  %3464 = vmatpush1.msra.mxu0 0.0
  %3465 = vmatprep.subr.mxu0 0.0
  %3466 = vmatpush1.msra.mxu0 0.0
  %3467 = vmatprep.subr.mxu0 0.0
  %3468 = vmatpush1.msra.mxu0 0.0
  %3469 = vmatprep.subr.mxu0 0.0
  %3470 = vmatpush1.msra.mxu0 0.0
  %3471 = vmatprep.mubr.f32.mxu0 0.0
  %3472 = vmatmul.mubr.f32.gmra.mrb[0].mxu0 %v3375
  %v3473 = vpop.f32.mrb[0].mxu0
  %v3474 = vadd.f32 0.0, %v3473
  %v3475 = vpop.f32.mrb[0].mxu0
  %3476 = vmatprep.mubr.f32.mxu0 0.0
  %3477 = vmatmul.mubr.f32.gmra.mrb[0].mxu0 %v3376
  %v3478 = vpop.f32.mrb[0].mxu0
  %v3479 = vadd.f32 0.0, %v3478
  %v3480 = vpop.f32.mrb[0].mxu0
  %3481 = vmatprep.mubr.f32.mxu0 0.0
  %3482 = vmatmul.mubr.f32.gmra.mrb[0].mxu0 %v3377
  %v3483 = vpop.f32.mrb[0].mxu0
  %v3484 = vadd.f32 0.0, %v3483
  %v3485 = vpop.f32.mrb[0].mxu0
  %3486 = vmatprep.mubr.f32.mxu0 0.0
  %3487 = vmatmul.mubr.f32.gmra.mrb[0].mxu0 %v3378
  %v3488 = vpop.f32.mrb[0].mxu0
  %v3489 = vadd.f32 0.0, %v3488
  %v3490 = vpop.f32.mrb[0].mxu0
  %3491 = vmatprep.mubr.f32.mxu0 0.0
  %3492 = vmatmul.mubr.f32.gmra.mrb[0].mxu0 %v3379
  %v3493 = vpop.f32.mrb[0].mxu0
  %v3494 = vadd.f32 0.0, %v3493
  %v3495 = vpop.f32.mrb[0].mxu0
  %3496 = vmatprep.mubr.f32.mxu0 0.0
  %3497 = vmatmul.mubr.f32.gmra.mrb[0].mxu0 %v3380
  %v3498 = vpop.f32.mrb[0].mxu0
  %v3499 = vadd.f32 0.0, %v3498
  %v3500 = vpop.f32.mrb[0].mxu0
  %3501 = vmatprep.mubr.f32.mxu0 0.0
  %3502 = vmatmul.mubr.f32.gmra.mrb[0].mxu0 %v3381
  %v3503 = vpop.f32.mrb[0].mxu0
  %v3504 = vadd.f32 0.0, %v3503
  %v3505 = vpop.f32.mrb[0].mxu0
  %3506 = vmatprep.mubr.f32.mxu0 0.0
  %3507 = vmatmul.mubr.f32.gmra.mrb[0].mxu0 %v3382
  %v3508 = vpop.f32.mrb[0].mxu0
  %v3509 = vadd.f32 0.0, %v3508
  %v3510 = vpop.f32.mrb[0].mxu0
  %3511 = vmatprep.mubr.f32.mxu0 0.0
  %3512 = vmatmul.mubr.f32.gmra.mrb[0].mxu0 %v3383
  %v3513 = vpop.f32.mrb[0].mxu0
  %v3514 = vadd.f32 0.0, %v3513
  %v3515 = vpop.f32.mrb[0].mxu0
  %3516 = vmatprep.mubr.f32.mxu0 0.0
  %3517 = vmatmul.mubr.f32.gmra.mrb[0].mxu0 %v3384
  %v3518 = vpop.f32.mrb[0].mxu0
  %v3519 = vadd.f32 0.0, %v3518
  %v3520 = vpop.f32.mrb[0].mxu0
  %3521 = vmatprep.mubr.f32.mxu0 0.0
  %3522 = vmatmul.mubr.f32.gmra.mrb[0].mxu0 %v3385
  %v3523 = vpop.f32.mrb[0].mxu0
  %v3524 = vadd.f32 0.0, %v3523
  %v3525 = vpop.f32.mrb[0].mxu0
  %3526 = vmatprep.mubr.f32.mxu0 0.0
  %3527 = vmatmul.mubr.f32.gmra.mrb[0].mxu0 %v3386
  %v3528 = vpop.f32.mrb[0].mxu0
  %v3529 = vadd.f32 0.0, %v3528
  %v3530 = vpop.f32.mrb[0].mxu0
  %3531 = vmatprep.mubr.f32.mxu0 0.0
  %3532 = vmatmul.mubr.f32.gmra.mrb[0].mxu0 %v3387
  %v3533 = vpop.f32.mrb[0].mxu0
  %v3534 = vadd.f32 0.0, %v3533
  %v3535 = vpop.f32.mrb[0].mxu0
  %3536 = vmatprep.mubr.f32.mxu0 0.0
  %3537 = vmatmul.mubr.f32.gmra.mrb[0].mxu0 %v3388
  %v3538 = vpop.f32.mrb[0].mxu0
  %v3539 = vadd.f32 0.0, %v3538
  %v3540 = vpop.f32.mrb[0].mxu0
  %3541 = vmatprep.mubr.f32.mxu0 0.0
  %3542 = vmatmul.mubr.f32.gmra.mrb[0].mxu0 %v3389
  %v3543 = vpop.f32.mrb[0].mxu0
  %v3544 = vadd.f32 0.0, %v3543
  %v3545 = vpop.f32.mrb[0].mxu0
  %3546 = vmatprep.mubr.f32.mxu0 0.0
  %3547 = vmatmul.mubr.f32.gmra.mrb[0].mxu0 %v3390
  %v3548 = vpop.f32.mrb[0].mxu0
  %v3549 = vadd.f32 0.0, %v3548
  %v3550 = vpop.f32.mrb[0].mxu0
  %3551 = vdwg.mxu0
  %v3552 = vadd.f32 %v3359, %v3474
  %v3553 = vadd.f32 %v3360, %v3479
  %v3554 = vadd.f32 %v3361, %v3484
  %v3555 = vadd.f32 %v3362, %v3489
  %v3556 = vadd.f32 %v3363, %v3494
  %v3557 = vadd.f32 %v3364, %v3499
  %v3558 = vadd.f32 %v3365, %v3504
  %v3559 = vadd.f32 %v3366, %v3509
  %v3560 = vadd.f32 %v3367, %v3514
  %v3561 = vadd.f32 %v3368, %v3519
  %v3562 = vadd.f32 %v3369, %v3524
  %v3563 = vadd.f32 %v3370, %v3529
  %v3564 = vadd.f32 %v3371, %v3534
  %v3565 = vadd.f32 %v3372, %v3539
  %v3566 = vadd.f32 %v3373, %v3544
  %v3567 = vadd.f32 %v3374, %v3549
  %v3568 = vld [vmem:[%s3181 + $0x2] sm:$0xff]
  %v3569 = vld [vmem:[%s3181 + $0x12] sm:$0xff]
  %v3570 = vld [vmem:[%s3181 + $0x22] sm:$0xff]
  %v3571 = vld [vmem:[%s3181 + $0x32] sm:$0xff]
  %v3572 = vld [vmem:[%s3181 + $0x42] sm:$0xff]
  %v3573 = vld [vmem:[%s3181 + $0x52] sm:$0xff]
  %v3574 = vld [vmem:[%s3181 + $0x62] sm:$0xff]
  %v3575 = vld [vmem:[%s3181 + $0x72] sm:$0xff]
  %v3576 = vld [vmem:[%s3181 + $0xa2] sm:$0xff]
  %v3577 = vld [vmem:[%s3181 + $0xb2] sm:$0xff]
  %v3578 = vld [vmem:[%s3181 + $0xc2] sm:$0xff]
  %v3579 = vld [vmem:[%s3181 + $0xd2] sm:$0xff]
  %v3580 = vld [vmem:[%s3181 + $0xe2] sm:$0xff]
  %v3581 = vld [vmem:[%s3181 + $0xf2] sm:$0xff]
  %v3582 = vld [vmem:[%s3181 + $0x102] sm:$0xff]
  %v3583 = vld [vmem:[%s3181 + $0x112] sm:$0xff]
  %v3584 = vld [vmem:[%s4 + $0x400] sm:$0xff]
  %v3585 = vld [vmem:[%s4 + $0x408] sm:$0xff]
  %v3586 = vld [vmem:[%s4 + $0x410] sm:$0xff]
  %v3587 = vld [vmem:[%s4 + $0x418] sm:$0xff]
  %v3588 = vld [vmem:[%s4 + $0x420] sm:$0xff]
  %v3589 = vld [vmem:[%s4 + $0x428] sm:$0xff]
  %v3590 = vld [vmem:[%s4 + $0x430] sm:$0xff]
  %v3591 = vld [vmem:[%s4 + $0x438] sm:$0xff]
  %v3592 = vld [vmem:[%s4 + $0x440] sm:$0xff]
  %v3593 = vld [vmem:[%s4 + $0x448] sm:$0xff]
  %v3594 = vld [vmem:[%s4 + $0x450] sm:$0xff]
  %v3595 = vld [vmem:[%s4 + $0x458] sm:$0xff]
  %v3596 = vld [vmem:[%s4 + $0x460] sm:$0xff]
  %v3597 = vld [vmem:[%s4 + $0x468] sm:$0xff]
  %v3598 = vld [vmem:[%s4 + $0x470] sm:$0xff]
  %v3599 = vld [vmem:[%s4 + $0x478] sm:$0xff]
  %3600 = vmatprep.subr.mxu0 0.0
  %3601 = vmatpush1.msra.mxu0 %v3584
  %3602 = vmatprep.subr.mxu0 0.0
  %3603 = vmatpush1.msra.mxu0 %v3585
  %3604 = vmatprep.subr.mxu0 0.0
  %3605 = vmatpush1.msra.mxu0 %v3586
  %3606 = vmatprep.subr.mxu0 0.0
  %3607 = vmatpush1.msra.mxu0 %v3587
  %3608 = vmatprep.subr.mxu0 0.0
  %3609 = vmatpush1.msra.mxu0 %v3588
  %3610 = vmatprep.subr.mxu0 0.0
  %3611 = vmatpush1.msra.mxu0 %v3589
  %3612 = vmatprep.subr.mxu0 0.0
  %3613 = vmatpush1.msra.mxu0 %v3590
  %3614 = vmatprep.subr.mxu0 0.0
  %3615 = vmatpush1.msra.mxu0 %v3591
  %3616 = vmatprep.subr.mxu0 0.0
  %3617 = vmatpush1.msra.mxu0 %v3592
  %3618 = vmatprep.subr.mxu0 0.0
  %3619 = vmatpush1.msra.mxu0 %v3593
  %3620 = vmatprep.subr.mxu0 0.0
  %3621 = vmatpush1.msra.mxu0 %v3594
  %3622 = vmatprep.subr.mxu0 0.0
  %3623 = vmatpush1.msra.mxu0 %v3595
  %3624 = vmatprep.subr.mxu0 0.0
  %3625 = vmatpush1.msra.mxu0 %v3596
  %3626 = vmatprep.subr.mxu0 0.0
  %3627 = vmatpush1.msra.mxu0 %v3597
  %3628 = vmatprep.subr.mxu0 0.0
  %3629 = vmatpush1.msra.mxu0 %v3598
  %3630 = vmatprep.subr.mxu0 0.0
  %3631 = vmatpush1.msra.mxu0 %v3599
  %3632 = vmatprep.subr.mxu0 0.0
  %3633 = vmatpush1.msra.mxu0 0.0
  %3634 = vmatprep.subr.mxu0 0.0
  %3635 = vmatpush1.msra.mxu0 0.0
  %3636 = vmatprep.subr.mxu0 0.0
  %3637 = vmatpush1.msra.mxu0 0.0
  %3638 = vmatprep.subr.mxu0 0.0
  %3639 = vmatpush1.msra.mxu0 0.0
  %3640 = vmatprep.subr.mxu0 0.0
  %3641 = vmatpush1.msra.mxu0 0.0
  %3642 = vmatprep.subr.mxu0 0.0
  %3643 = vmatpush1.msra.mxu0 0.0
  %3644 = vmatprep.subr.mxu0 0.0
  %3645 = vmatpush1.msra.mxu0 0.0
  %3646 = vmatprep.subr.mxu0 0.0
  %3647 = vmatpush1.msra.mxu0 0.0
  %3648 = vmatprep.subr.mxu0 0.0
  %3649 = vmatpush1.msra.mxu0 0.0
  %3650 = vmatprep.subr.mxu0 0.0
  %3651 = vmatpush1.msra.mxu0 0.0
  %3652 = vmatprep.subr.mxu0 0.0
  %3653 = vmatpush1.msra.mxu0 0.0
  %3654 = vmatprep.subr.mxu0 0.0
  %3655 = vmatpush1.msra.mxu0 0.0
  %3656 = vmatprep.subr.mxu0 0.0
  %3657 = vmatpush1.msra.mxu0 0.0
  %3658 = vmatprep.subr.mxu0 0.0
  %3659 = vmatpush1.msra.mxu0 0.0
  %3660 = vmatprep.subr.mxu0 0.0
  %3661 = vmatpush1.msra.mxu0 0.0
  %3662 = vmatprep.subr.mxu0 0.0
  %3663 = vmatpush1.msra.mxu0 0.0
  %3664 = vmatprep.mubr.f32.mxu0 0.0
  %3665 = vmatmul.mubr.f32.gmra.mrb[0].mxu0 %v3568
  %v3666 = vpop.f32.mrb[0].mxu0
  %v3667 = vadd.f32 0.0, %v3666
  %v3668 = vpop.f32.mrb[0].mxu0
  %3669 = vmatprep.mubr.f32.mxu0 0.0
  %3670 = vmatmul.mubr.f32.gmra.mrb[0].mxu0 %v3569
  %v3671 = vpop.f32.mrb[0].mxu0
  %v3672 = vadd.f32 0.0, %v3671
  %v3673 = vpop.f32.mrb[0].mxu0
  %3674 = vmatprep.mubr.f32.mxu0 0.0
  %3675 = vmatmul.mubr.f32.gmra.mrb[0].mxu0 %v3570
  %v3676 = vpop.f32.mrb[0].mxu0
  %v3677 = vadd.f32 0.0, %v3676
  %v3678 = vpop.f32.mrb[0].mxu0
  %3679 = vmatprep.mubr.f32.mxu0 0.0
  %3680 = vmatmul.mubr.f32.gmra.mrb[0].mxu0 %v3571
  %v3681 = vpop.f32.mrb[0].mxu0
  %v3682 = vadd.f32 0.0, %v3681
  %v3683 = vpop.f32.mrb[0].mxu0
  %3684 = vmatprep.mubr.f32.mxu0 0.0
  %3685 = vmatmul.mubr.f32.gmra.mrb[0].mxu0 %v3572
  %v3686 = vpop.f32.mrb[0].mxu0
  %v3687 = vadd.f32 0.0, %v3686
  %v3688 = vpop.f32.mrb[0].mxu0
  %3689 = vmatprep.mubr.f32.mxu0 0.0
  %3690 = vmatmul.mubr.f32.gmra.mrb[0].mxu0 %v3573
  %v3691 = vpop.f32.mrb[0].mxu0
  %v3692 = vadd.f32 0.0, %v3691
  %v3693 = vpop.f32.mrb[0].mxu0
  %3694 = vmatprep.mubr.f32.mxu0 0.0
  %3695 = vmatmul.mubr.f32.gmra.mrb[0].mxu0 %v3574
  %v3696 = vpop.f32.mrb[0].mxu0
  %v3697 = vadd.f32 0.0, %v3696
  %v3698 = vpop.f32.mrb[0].mxu0
  %3699 = vmatprep.mubr.f32.mxu0 0.0
  %3700 = vmatmul.mubr.f32.gmra.mrb[0].mxu0 %v3575
  %v3701 = vpop.f32.mrb[0].mxu0
  %v3702 = vadd.f32 0.0, %v3701
  %v3703 = vpop.f32.mrb[0].mxu0
  %3704 = vmatprep.mubr.f32.mxu0 0.0
  %3705 = vmatmul.mubr.f32.gmra.mrb[0].mxu0 %v3576
  %v3706 = vpop.f32.mrb[0].mxu0
  %v3707 = vadd.f32 0.0, %v3706
  %v3708 = vpop.f32.mrb[0].mxu0
  %3709 = vmatprep.mubr.f32.mxu0 0.0
  %3710 = vmatmul.mubr.f32.gmra.mrb[0].mxu0 %v3577
  %v3711 = vpop.f32.mrb[0].mxu0
  %v3712 = vadd.f32 0.0, %v3711
  %v3713 = vpop.f32.mrb[0].mxu0
  %3714 = vmatprep.mubr.f32.mxu0 0.0
  %3715 = vmatmul.mubr.f32.gmra.mrb[0].mxu0 %v3578
  %v3716 = vpop.f32.mrb[0].mxu0
  %v3717 = vadd.f32 0.0, %v3716
  %v3718 = vpop.f32.mrb[0].mxu0
  %3719 = vmatprep.mubr.f32.mxu0 0.0
  %3720 = vmatmul.mubr.f32.gmra.mrb[0].mxu0 %v3579
  %v3721 = vpop.f32.mrb[0].mxu0
  %v3722 = vadd.f32 0.0, %v3721
  %v3723 = vpop.f32.mrb[0].mxu0
  %3724 = vmatprep.mubr.f32.mxu0 0.0
  %3725 = vmatmul.mubr.f32.gmra.mrb[0].mxu0 %v3580
  %v3726 = vpop.f32.mrb[0].mxu0
  %v3727 = vadd.f32 0.0, %v3726
  %v3728 = vpop.f32.mrb[0].mxu0
  %3729 = vmatprep.mubr.f32.mxu0 0.0
  %3730 = vmatmul.mubr.f32.gmra.mrb[0].mxu0 %v3581
  %v3731 = vpop.f32.mrb[0].mxu0
  %v3732 = vadd.f32 0.0, %v3731
  %v3733 = vpop.f32.mrb[0].mxu0
  %3734 = vmatprep.mubr.f32.mxu0 0.0
  %3735 = vmatmul.mubr.f32.gmra.mrb[0].mxu0 %v3582
  %v3736 = vpop.f32.mrb[0].mxu0
  %v3737 = vadd.f32 0.0, %v3736
  %v3738 = vpop.f32.mrb[0].mxu0
  %3739 = vmatprep.mubr.f32.mxu0 0.0
  %3740 = vmatmul.mubr.f32.gmra.mrb[0].mxu0 %v3583
  %v3741 = vpop.f32.mrb[0].mxu0
  %v3742 = vadd.f32 0.0, %v3741
  %v3743 = vpop.f32.mrb[0].mxu0
  %3744 = vdwg.mxu0
  %v3745 = vadd.f32 %v3552, %v3667
  %v3746 = vadd.f32 %v3553, %v3672
  %v3747 = vadd.f32 %v3554, %v3677
  %v3748 = vadd.f32 %v3555, %v3682
  %v3749 = vadd.f32 %v3556, %v3687
  %v3750 = vadd.f32 %v3557, %v3692
  %v3751 = vadd.f32 %v3558, %v3697
  %v3752 = vadd.f32 %v3559, %v3702
  %v3753 = vadd.f32 %v3560, %v3707
  %v3754 = vadd.f32 %v3561, %v3712
  %v3755 = vadd.f32 %v3562, %v3717
  %v3756 = vadd.f32 %v3563, %v3722
  %v3757 = vadd.f32 %v3564, %v3727
  %v3758 = vadd.f32 %v3565, %v3732
  %v3759 = vadd.f32 %v3566, %v3737
  %v3760 = vadd.f32 %v3567, %v3742
  %v3761 = vld [vmem:[%s5] sm:$0x1]
  %v3763 = vlaneseq
  %v3764 = vshrl.u32 %v3763, 7
  %v3765 = vsub.s32 0, %v3764
  %v3766 = vrot.slane %v3761, %v3765
  %v3768 = vmul.f32 %v3745, %v3766
  %v3769 = vmul.f32 %v3746, %v3766
  %v3770 = vmul.f32 %v3747, %v3766
  %v3771 = vmul.f32 %v3748, %v3766
  %v3772 = vmul.f32 %v3749, %v3766
  %v3773 = vmul.f32 %v3750, %v3766
  %v3774 = vmul.f32 %v3751, %v3766
  %v3775 = vmul.f32 %v3752, %v3766
  %v3776 = vmul.f32 %v3753, %v3766
  %v3777 = vmul.f32 %v3754, %v3766
  %v3778 = vmul.f32 %v3755, %v3766
  %v3779 = vmul.f32 %v3756, %v3766
  %v3780 = vmul.f32 %v3757, %v3766
  %v3781 = vmul.f32 %v3758, %v3766
  %v3782 = vmul.f32 %v3759, %v3766
  %v3783 = vmul.f32 %v3760, %v3766
  %v3784 = vld [vmem:[%s6] sm:$0x1]
  %v3786 = vlaneseq
  %v3787 = vshrl.u32 %v3786, 7
  %v3788 = vsub.s32 0, %v3787
  %v3789 = vrot.slane %v3784, %v3788
  %v3791 = vadd.f32 %v3768, %v3789
  %v3792 = vadd.f32 %v3769, %v3789
  %v3793 = vadd.f32 %v3770, %v3789
  %v3794 = vadd.f32 %v3771, %v3789
  %v3795 = vadd.f32 %v3772, %v3789
  %v3796 = vadd.f32 %v3773, %v3789
  %v3797 = vadd.f32 %v3774, %v3789
  %v3798 = vadd.f32 %v3775, %v3789
  %v3799 = vadd.f32 %v3776, %v3789
  %v3800 = vadd.f32 %v3777, %v3789
  %v3801 = vadd.f32 %v3778, %v3789
  %v3802 = vadd.f32 %v3779, %v3789
  %v3803 = vadd.f32 %v3780, %v3789
  %v3804 = vadd.f32 %v3781, %v3789
  %v3805 = vadd.f32 %v3782, %v3789
  %v3806 = vadd.f32 %v3783, %v3789
  %v3807 = vmax.f32 %v3791, 0.0
  %v3808 = vmax.f32 %v3792, 0.0
  %v3809 = vmax.f32 %v3793, 0.0
  %v3810 = vmax.f32 %v3794, 0.0
  %v3811 = vmax.f32 %v3795, 0.0
  %v3812 = vmax.f32 %v3796, 0.0
  %v3813 = vmax.f32 %v3797, 0.0
  %v3814 = vmax.f32 %v3798, 0.0
  %v3815 = vmax.f32 %v3799, 0.0
  %v3816 = vmax.f32 %v3800, 0.0
  %v3817 = vmax.f32 %v3801, 0.0
  %v3818 = vmax.f32 %v3802, 0.0
  %v3819 = vmax.f32 %v3803, 0.0
  %v3820 = vmax.f32 %v3804, 0.0
  %v3821 = vmax.f32 %v3805, 0.0
  %v3822 = vmax.f32 %v3806, 0.0
  %3823 = vst [vmem:[%s7] sm:$0xff] %v3807
  %3824 = vst [vmem:[%s7 + $0x8] sm:$0xff] %v3808
  %3825 = vst [vmem:[%s7 + $0x10] sm:$0xff] %v3809
  %3826 = vst [vmem:[%s7 + $0x18] sm:$0xff] %v3810
  %3827 = vst [vmem:[%s7 + $0x20] sm:$0xff] %v3811
  %3828 = vst [vmem:[%s7 + $0x28] sm:$0xff] %v3812
  %3829 = vst [vmem:[%s7 + $0x30] sm:$0xff] %v3813
  %3830 = vst [vmem:[%s7 + $0x38] sm:$0xff] %v3814
  %3831 = vst [vmem:[%s7 + $0x40] sm:$0xff] %v3815
  %3832 = vst [vmem:[%s7 + $0x48] sm:$0xff] %v3816
  %3833 = vst [vmem:[%s7 + $0x50] sm:$0xff] %v3817
  %3834 = vst [vmem:[%s7 + $0x58] sm:$0xff] %v3818
  %3835 = vst [vmem:[%s7 + $0x60] sm:$0xff] %v3819
  %3836 = vst [vmem:[%s7 + $0x68] sm:$0xff] %v3820
  %3837 = vst [vmem:[%s7 + $0x70] sm:$0xff] %v3821
  %3838 = vst [vmem:[%s7 + $0x78] sm:$0xff] %v3822
  // Predicated region
  $region30: #{down_forward_nhwc.1} parent=0 // pred_check
    _
  $region31: #{down_forward_nhwc.1} parent=0 // pred_check_branch
    %3840 = sbr.rel (0) target = $region33
  $region32: #{down_forward_nhwc.1} parent=0 // pred_region
    _
  $region33: #{down_forward_nhwc.1} parent=0 // pred_fallthru
    _
  // Predicated region
  $region34: #{down_forward_nhwc.1} parent=0 // pred_check
    _
  $region35: #{down_forward_nhwc.1} parent=0 // pred_check_branch
    %3842 = sbr.rel (0) target = $region37
  $region36: #{down_forward_nhwc.1} parent=0 // pred_region
    _
  $region37: #{down_forward_nhwc.1} parent=0 // pred_fallthru
    _

</llo_original>
